<compile_context>
chip_gen: v5e
topology: v5e:2x2
jax: 0.10.0
libtpu: 0.0.40
codegen_flags: <defaults>
</compile_context>

<pallas_src>
import jax
import jax.numpy as jnp
from jax.experimental import pallas as pl
from jax.experimental.pallas import tpu as pltpu


def _round_up(x, m):
    return ((x + m - 1) // m) * m


# ----------------------------- fused kernel ----------------------------------
def _make_fused_kernel(out_valid):
    """out_valid: number of real (unpadded) output classes."""

    def kernel(x_ref, wih1_ref, whh1_ref, bgi1_ref, bhn1_ref,
               wih2_ref, whh2_ref, bgi2_ref, bhn2_ref,
               wl_ref, bl_ref, out_ref, h2_scr):
        f32 = jnp.float32
        bf16 = jnp.bfloat16

        S, B, H2P = h2_scr.shape
        H1P = whh1_ref.shape[0]
        OUTP = out_ref.shape[1]

        # Hoisted layer-1 input projection: one (S*B, I) @ (I, 3*H1P) matmul
        # (bias already folded in the wrapper).
        gi1_all = jnp.dot(x_ref[...], wih1_ref[...],
                          preferred_element_type=f32) + bgi1_ref[...]

        bgi2 = bgi2_ref[...]
        bhn1 = bhn1_ref[...]
        bhn2 = bhn2_ref[...]

        def cell(gi, h_prev, whh_ref, b_hn, H):
            # PyTorch GRU cell, gate order [r, z, n]; H is a multiple of 128 so
            # every slice below is lane-aligned (pure VPU after the matmul).
            gh = jnp.dot(h_prev.astype(bf16), whh_ref[...],
                         preferred_element_type=f32)
            r = jax.nn.sigmoid(gi[:, 0:H] + gh[:, 0:H])
            z = jax.nn.sigmoid(gi[:, H:2 * H] + gh[:, H:2 * H])
            n = jnp.tanh(gi[:, 2 * H:3 * H] + r * (gh[:, 2 * H:3 * H] + b_hn))
            return (1.0 - z) * n + z * h_prev

        h1 = jnp.zeros((B, H1P), f32)
        h2 = jnp.zeros((B, H2P), f32)
        for t in range(S):                 # S small & static: fully unrolled
            h1 = cell(gi1_all[t * B:(t + 1) * B, :], h1, whh1_ref, bhn1, H1P)
            gi2 = jnp.dot(h1.astype(bf16), wih2_ref[...],
                          preferred_element_type=f32) + bgi2
            h2 = cell(gi2, h2, whh2_ref, bhn2, H2P)
            h2_scr[t] = h2

        # Fused linear + softmax head.  The torch model flattens (S, B, H2) ->
        # (S, B*H2) (batch mixed into the feature axis, as in the original);
        # w_l was pre-reshaped to (B, H2P, OUTP) so the head is a sum of
        # per-batch lane-aligned matmuls (no in-kernel reshape/relayout).
        h2_all = h2_scr[...]                                    # (S, B, H2P)
        logits = jnp.broadcast_to(bl_ref[...], (S, OUTP))
        for b in range(B):
            logits = logits + jnp.dot(h2_all[:, b, :].astype(bf16), wl_ref[b],
                                      preferred_element_type=f32)

        # mask padded output lanes so they do not enter the softmax
        lane = jax.lax.broadcasted_iota(jnp.int32, (S, OUTP), 1)
        valid = lane < out_valid
        logits = jnp.where(valid, logits, -1e30)
        m = jnp.max(logits, axis=1, keepdims=True)
        e = jnp.where(valid, jnp.exp(logits - m), 0.0)
        out_ref[...] = e / jnp.sum(e, axis=1, keepdims=True)

    return kernel


def _fused_forward_call(args, S, B, H2P, OUTP, OUT):
    kernel = _make_fused_kernel(OUT)

    def vspec(shape):
        return pl.BlockSpec(shape, lambda *_: (0,) * len(shape))

    return pl.pallas_call(
        kernel,
        out_shape=jax.ShapeDtypeStruct((S, OUTP), jnp.float32),
        grid=(1,),                         # single step: everything VMEM-resident
        in_specs=[vspec(a.shape) for a in args],
        out_specs=vspec((S, OUTP)),
        scratch_shapes=[pltpu.VMEM((S, B, H2P), jnp.float32)],
        compiler_params=pltpu.CompilerParams(
            dimension_semantics=("arbitrary",)),
    )(*args)


# --------------------------- parameter preparation ---------------------------
def _pad_gates(w, H, HP):
    """(..., 3*H) -> (..., 3*HP), zero-padding each of the [r, z, n] gates."""
    lead = w.shape[:-1]
    w3 = jnp.reshape(w, lead + (3, H))
    w3 = jnp.pad(w3, [(0, 0)] * len(lead) + [(0, 0), (0, HP - H)])
    return jnp.reshape(w3, lead + (3 * HP,))


def _prep_layer(w_ih, w_hh, b_ih, b_hh, HP, in_pad_to=None):
    """Transposed torch GRU params -> padded / bf16 / bias-folded kernel args."""
    H = w_hh.shape[0]
    # Fold b_hh's r/z parts into the input-side bias; b_hh_n stays separate
    # because of the r * (W_hn h + b_hn) term.
    b_gi = jnp.concatenate(
        [b_ih[:, :2 * H] + b_hh[:, :2 * H], b_ih[:, 2 * H:]], axis=1)
    b_hn = b_hh[:, 2 * H:]

    w_ih = _pad_gates(w_ih, H, HP)
    w_hh = jnp.pad(_pad_gates(w_hh, H, HP), [(0, HP - H), (0, 0)])
    b_gi = _pad_gates(b_gi, H, HP)
    b_hn = jnp.pad(b_hn, [(0, 0), (0, HP - H)])
    if in_pad_to is not None:
        w_ih = jnp.pad(w_ih, [(0, in_pad_to - w_ih.shape[0]), (0, 0)])
    return w_ih.astype(jnp.bfloat16), w_hh.astype(jnp.bfloat16), b_gi, b_hn


@jax.jit
def gru_forward(x, params):
    S, B, I = x.shape
    H1 = params["w_hh1"].shape[0]
    H2 = params["w_hh2"].shape[0]
    OUT = params["w_l"].shape[1]
    H1P = _round_up(H1, 128)
    H2P = _round_up(H2, 128)
    OUTP = _round_up(OUT, 128)

    w_ih1, w_hh1, b_gi1, b_hn1 = _prep_layer(
        params["w_ih1"], params["w_hh1"], params["b_ih1"], params["b_hh1"], H1P)
    w_ih2, w_hh2, b_gi2, b_hn2 = _prep_layer(
        params["w_ih2"], params["w_hh2"], params["b_ih2"], params["b_hh2"],
        H2P, in_pad_to=H1P)

    # Head weights: torch's x.view(-1, b*h) gives flat feature index b*H2 + h,
    # so reshape w_l to (B, H2, OUT), then pad to lane-aligned (B, H2P, OUTP).
    w_l = params["w_l"].reshape(B, H2, OUT)
    w_l = jnp.pad(w_l, [(0, 0), (0, H2P - H2), (0, OUTP - OUT)]).astype(jnp.bfloat16)
    b_l = jnp.pad(params["b_l"], [(0, 0), (0, OUTP - OUT)])

    x2d = x.reshape(S * B, I).astype(jnp.bfloat16)

    args = (x2d, w_ih1, w_hh1, b_gi1, b_hn1,
            w_ih2, w_hh2, b_gi2, b_hn2, w_l, b_l)
    out = _fused_forward_call(args, S, B, H2P, OUTP, OUT)
    return out[:, :OUT]


# ------------------------------- init ----------------------------------------
def init_params(key, input_size, h1, h2, output_size, batch):
    ks = jax.random.split(key, 10)

    def u(k, shape, scale):
        return jax.random.uniform(k, shape, jnp.float32, -scale, scale)

    s1 = 1.0 / float(jnp.sqrt(h1))
    s2 = 1.0 / float(jnp.sqrt(h2))
    sl = 1.0 / float(jnp.sqrt(h2 * batch))
    return dict(
        w_ih1=u(ks[0], (input_size, 3 * h1), s1),
        w_hh1=u(ks[1], (h1, 3 * h1), s1),
        b_ih1=u(ks[2], (1, 3 * h1), s1),
        b_hh1=u(ks[3], (1, 3 * h1), s1),
        w_ih2=u(ks[4], (h1, 3 * h2), s2),
        w_hh2=u(ks[5], (h2, 3 * h2), s2),
        b_ih2=u(ks[6], (1, 3 * h2), s2),
        b_hh2=u(ks[7], (1, 3 * h2), s2),
        w_l=u(ks[8], (h2 * batch, output_size), sl),
        b_l=u(ks[9], (1, output_size), sl),
    )


# ------------------------------ pure-JAX reference ----------------------------
def _gru_layer_ref(x, w_ih, w_hh, b_ih, b_hh):
    H = w_hh.shape[0]
    hp = jax.lax.Precision.HIGHEST

    def step(h, x_t):
        gi = jnp.dot(x_t, w_ih, precision=hp) + b_ih[0]
        gh = jnp.dot(h, w_hh, precision=hp) + b_hh[0]
        r = jax.nn.sigmoid(gi[:, :H] + gh[:, :H])
        z = jax.nn.sigmoid(gi[:, H:2 * H] + gh[:, H:2 * H])
        n = jnp.tanh(gi[:, 2 * H:] + r * gh[:, 2 * H:])
        h_new = (1.0 - z) * n + z * h
        return h_new, h_new

    h0 = jnp.zeros((x.shape[1], H), jnp.float32)
    _, hs = jax.lax.scan(step, h0, x)
    return hs


def gru_forward_ref(x, params):
    hp = jax.lax.Precision.HIGHEST
    h1 = _gru_layer_ref(x, params["w_ih1"], params["w_hh1"],
                        params["b_ih1"], params["b_hh1"])
    h2 = _gru_layer_ref(h1, params["w_ih2"], params["w_hh2"],
                        params["b_ih2"], params["b_hh2"])
    S, B, H = h2.shape
    flat = h2.reshape(S, B * H)       # matches torch x.view(-1, b*h)
    logits = jnp.dot(flat, params["w_l"], precision=hp) + params["b_l"]
    return jax.nn.softmax(logits, axis=1)


if __name__ == "__main__":
    SEQ, BATCH = 8, 2
    INPUT, H1, H2, OUT = 16, 128, 64, 6

    key = jax.random.PRNGKey(0)
    kx, kp = jax.random.split(key)
    x = jax.random.normal(kx, (SEQ, BATCH, INPUT), jnp.float32)
    params = init_params(kp, INPUT, H1, H2, OUT, BATCH)

    out = gru_forward(x, params)
    out = jax.block_until_ready(out)

    assert out.shape == (SEQ, OUT)
    ref = gru_forward_ref(x, params)
    err = float(jnp.max(jnp.abs(out - ref)))
    # Tolerance accounts for bf16 MXU operands (f32 accumulation) vs. the
    # f32 HIGHEST-precision reference over an 8-step recurrence.
    assert err < 2e-2, f"max abs err {err}"
    print("KERNEL_OK")
</pallas_src>

<mosaic_0001>
module attributes {stable_mosaic.version = 11 : i64} {
  func.func @kernel(%arg0: i32, %arg1: memref<16x16xbf16, #tpu.memory_space<vmem>>, %arg2: memref<16x384xbf16, #tpu.memory_space<vmem>>, %arg3: memref<128x384xbf16, #tpu.memory_space<vmem>>, %arg4: memref<1x384xf32, #tpu.memory_space<vmem>>, %arg5: memref<1x128xf32, #tpu.memory_space<vmem>>, %arg6: memref<128x384xbf16, #tpu.memory_space<vmem>>, %arg7: memref<128x384xbf16, #tpu.memory_space<vmem>>, %arg8: memref<1x384xf32, #tpu.memory_space<vmem>>, %arg9: memref<1x128xf32, #tpu.memory_space<vmem>>, %arg10: memref<2x128x128xbf16, #tpu.memory_space<vmem>>, %arg11: memref<1x128xf32, #tpu.memory_space<vmem>>, %arg12: memref<8x128xf32, #tpu.memory_space<vmem>>, %arg13: memref<8x2x128xf32, #tpu.memory_space<vmem>>) attributes {dimension_semantics = [#tpu.dimension_semantics<arbitrary>], iteration_bounds = array<i64: 1>, scalar_prefetch = 0 : i64, scratch_operands = 1 : i64, tpu.core_type = #tpu.core_type<tc>, window_params = [{pipeline_mode = #tpu.pipeline_mode<synchronous>, transform_indices = @transform_0, window_bounds = array<i64: 16, 16>}, {pipeline_mode = #tpu.pipeline_mode<synchronous>, transform_indices = @transform_1, window_bounds = array<i64: 16, 384>}, {pipeline_mode = #tpu.pipeline_mode<synchronous>, transform_indices = @transform_2, window_bounds = array<i64: 128, 384>}, {pipeline_mode = #tpu.pipeline_mode<synchronous>, transform_indices = @transform_3, window_bounds = array<i64: 1, 384>}, {pipeline_mode = #tpu.pipeline_mode<synchronous>, transform_indices = @transform_4, window_bounds = array<i64: 1, 128>}, {pipeline_mode = #tpu.pipeline_mode<synchronous>, transform_indices = @transform_5, window_bounds = array<i64: 128, 384>}, {pipeline_mode = #tpu.pipeline_mode<synchronous>, transform_indices = @transform_6, window_bounds = array<i64: 128, 384>}, {pipeline_mode = #tpu.pipeline_mode<synchronous>, transform_indices = @transform_7, window_bounds = array<i64: 1, 384>}, {pipeline_mode = #tpu.pipeline_mode<synchronous>, transform_indices = @transform_8, window_bounds = array<i64: 1, 128>}, {pipeline_mode = #tpu.pipeline_mode<synchronous>, transform_indices = @transform_9, window_bounds = array<i64: 2, 128, 128>}, {pipeline_mode = #tpu.pipeline_mode<synchronous>, transform_indices = @transform_10, window_bounds = array<i64: 1, 128>}, {pipeline_mode = #tpu.pipeline_mode<synchronous>, transform_indices = @transform_11, window_bounds = array<i64: 8, 128>}]} {
    %c0 = arith.constant 0 : index
    %c0_0 = arith.constant 0 : index
    %0 = vector.load %arg1[%c0, %c0_0] : memref<16x16xbf16, #tpu.memory_space<vmem>>, vector<16x16xbf16>
    %c0_1 = arith.constant 0 : index
    %c0_2 = arith.constant 0 : index
    %1 = vector.load %arg2[%c0_1, %c0_2] : memref<16x384xbf16, #tpu.memory_space<vmem>>, vector<16x384xbf16>
    %cst = arith.constant dense<0.000000e+00> : vector<16x384xf32>
    %2 = tpu.matmul %0, %1, %cst {dimension_numbers = #tpu.dot_dimension_numbers<[1], [0], [0], [1], [0, 0, 1, 1], [], []>} : vector<16x16xbf16>, vector<16x384xbf16>, vector<16x384xf32> -> vector<16x384xf32>
    %c0_3 = arith.constant 0 : index
    %c0_4 = arith.constant 0 : index
    %3 = vector.load %arg4[%c0_3, %c0_4] : memref<1x384xf32, #tpu.memory_space<vmem>>, vector<1x384xf32>
    %4 = vector.broadcast %3 : vector<1x384xf32> to vector<16x384xf32>
    %5 = arith.addf %2, %4 : vector<16x384xf32>
    %c0_5 = arith.constant 0 : index
    %c0_6 = arith.constant 0 : index
    %6 = vector.load %arg8[%c0_5, %c0_6] : memref<1x384xf32, #tpu.memory_space<vmem>>, vector<1x384xf32>
    %c0_7 = arith.constant 0 : index
    %c0_8 = arith.constant 0 : index
    %7 = vector.load %arg5[%c0_7, %c0_8] : memref<1x128xf32, #tpu.memory_space<vmem>>, vector<1x128xf32>
    %c0_9 = arith.constant 0 : index
    %c0_10 = arith.constant 0 : index
    %8 = vector.load %arg9[%c0_9, %c0_10] : memref<1x128xf32, #tpu.memory_space<vmem>>, vector<1x128xf32>
    %cst_11 = arith.constant 0.000000e+00 : f32
    %9 = vector.broadcast %cst_11 : f32 to vector<2x128xf32>
    %cst_12 = arith.constant 0.000000e+00 : f32
    %10 = vector.broadcast %cst_12 : f32 to vector<2x128xf32>
    %11 = vector.extract_strided_slice %5 {offsets = [0, 0], sizes = [2, 384], strides = [1, 1]} : vector<16x384xf32> to vector<2x384xf32>
    %12 = arith.truncf %9 : vector<2x128xf32> to vector<2x128xbf16>
    %c0_13 = arith.constant 0 : index
    %c0_14 = arith.constant 0 : index
    %13 = vector.load %arg3[%c0_13, %c0_14] : memref<128x384xbf16, #tpu.memory_space<vmem>>, vector<128x384xbf16>
    %cst_15 = arith.constant dense<0.000000e+00> : vector<2x384xf32>
    %14 = tpu.matmul %12, %13, %cst_15 {dimension_numbers = #tpu.dot_dimension_numbers<[1], [0], [0], [1], [0, 0, 1, 1], [], []>} : vector<2x128xbf16>, vector<128x384xbf16>, vector<2x384xf32> -> vector<2x384xf32>
    %15 = vector.extract_strided_slice %11 {offsets = [0, 0], sizes = [2, 128], strides = [1, 1]} : vector<2x384xf32> to vector<2x128xf32>
    %16 = vector.extract_strided_slice %14 {offsets = [0, 0], sizes = [2, 128], strides = [1, 1]} : vector<2x384xf32> to vector<2x128xf32>
    %17 = arith.addf %15, %16 : vector<2x128xf32>
    %18 = arith.negf %17 : vector<2x128xf32>
    %19 = math.exp %18 : vector<2x128xf32>
    %cst_16 = arith.constant 1.000000e+00 : f32
    %20 = vector.broadcast %cst_16 : f32 to vector<2x128xf32>
    %21 = arith.addf %20, %19 : vector<2x128xf32>
    %22 = arith.divf %20, %21 : vector<2x128xf32>
    %23 = vector.extract_strided_slice %11 {offsets = [0, 128], sizes = [2, 128], strides = [1, 1]} : vector<2x384xf32> to vector<2x128xf32>
    %24 = vector.extract_strided_slice %14 {offsets = [0, 128], sizes = [2, 128], strides = [1, 1]} : vector<2x384xf32> to vector<2x128xf32>
    %25 = arith.addf %23, %24 : vector<2x128xf32>
    %26 = arith.negf %25 : vector<2x128xf32>
    %27 = math.exp %26 : vector<2x128xf32>
    %cst_17 = arith.constant 1.000000e+00 : f32
    %28 = vector.broadcast %cst_17 : f32 to vector<2x128xf32>
    %29 = arith.addf %28, %27 : vector<2x128xf32>
    %30 = arith.divf %28, %29 : vector<2x128xf32>
    %31 = vector.extract_strided_slice %11 {offsets = [0, 256], sizes = [2, 128], strides = [1, 1]} : vector<2x384xf32> to vector<2x128xf32>
    %32 = vector.extract_strided_slice %14 {offsets = [0, 256], sizes = [2, 128], strides = [1, 1]} : vector<2x384xf32> to vector<2x128xf32>
    %33 = vector.broadcast %7 : vector<1x128xf32> to vector<2x128xf32>
    %34 = arith.addf %32, %33 : vector<2x128xf32>
    %35 = arith.mulf %22, %34 : vector<2x128xf32>
    %36 = arith.addf %31, %35 : vector<2x128xf32>
    %37 = math.tanh %36 : vector<2x128xf32>
    %cst_18 = arith.constant 1.000000e+00 : f32
    %38 = vector.broadcast %cst_18 : f32 to vector<2x128xf32>
    %39 = arith.subf %38, %30 : vector<2x128xf32>
    %40 = arith.mulf %39, %37 : vector<2x128xf32>
    %41 = arith.mulf %30, %9 : vector<2x128xf32>
    %42 = arith.addf %40, %41 : vector<2x128xf32>
    %43 = arith.truncf %42 : vector<2x128xf32> to vector<2x128xbf16>
    %c0_19 = arith.constant 0 : index
    %c0_20 = arith.constant 0 : index
    %44 = vector.load %arg6[%c0_19, %c0_20] : memref<128x384xbf16, #tpu.memory_space<vmem>>, vector<128x384xbf16>
    %cst_21 = arith.constant dense<0.000000e+00> : vector<2x384xf32>
    %45 = tpu.matmul %43, %44, %cst_21 {dimension_numbers = #tpu.dot_dimension_numbers<[1], [0], [0], [1], [0, 0, 1, 1], [], []>} : vector<2x128xbf16>, vector<128x384xbf16>, vector<2x384xf32> -> vector<2x384xf32>
    %46 = vector.broadcast %6 : vector<1x384xf32> to vector<2x384xf32>
    %47 = arith.addf %45, %46 : vector<2x384xf32>
    %48 = arith.truncf %10 : vector<2x128xf32> to vector<2x128xbf16>
    %c0_22 = arith.constant 0 : index
    %c0_23 = arith.constant 0 : index
    %49 = vector.load %arg7[%c0_22, %c0_23] : memref<128x384xbf16, #tpu.memory_space<vmem>>, vector<128x384xbf16>
    %cst_24 = arith.constant dense<0.000000e+00> : vector<2x384xf32>
    %50 = tpu.matmul %48, %49, %cst_24 {dimension_numbers = #tpu.dot_dimension_numbers<[1], [0], [0], [1], [0, 0, 1, 1], [], []>} : vector<2x128xbf16>, vector<128x384xbf16>, vector<2x384xf32> -> vector<2x384xf32>
    %51 = vector.extract_strided_slice %47 {offsets = [0, 0], sizes = [2, 128], strides = [1, 1]} : vector<2x384xf32> to vector<2x128xf32>
    %52 = vector.extract_strided_slice %50 {offsets = [0, 0], sizes = [2, 128], strides = [1, 1]} : vector<2x384xf32> to vector<2x128xf32>
    %53 = arith.addf %51, %52 : vector<2x128xf32>
    %54 = arith.negf %53 : vector<2x128xf32>
    %55 = math.exp %54 : vector<2x128xf32>
    %cst_25 = arith.constant 1.000000e+00 : f32
    %56 = vector.broadcast %cst_25 : f32 to vector<2x128xf32>
    %57 = arith.addf %56, %55 : vector<2x128xf32>
    %58 = arith.divf %56, %57 : vector<2x128xf32>
    %59 = vector.extract_strided_slice %47 {offsets = [0, 128], sizes = [2, 128], strides = [1, 1]} : vector<2x384xf32> to vector<2x128xf32>
    %60 = vector.extract_strided_slice %50 {offsets = [0, 128], sizes = [2, 128], strides = [1, 1]} : vector<2x384xf32> to vector<2x128xf32>
    %61 = arith.addf %59, %60 : vector<2x128xf32>
    %62 = arith.negf %61 : vector<2x128xf32>
    %63 = math.exp %62 : vector<2x128xf32>
    %cst_26 = arith.constant 1.000000e+00 : f32
    %64 = vector.broadcast %cst_26 : f32 to vector<2x128xf32>
    %65 = arith.addf %64, %63 : vector<2x128xf32>
    %66 = arith.divf %64, %65 : vector<2x128xf32>
    %67 = vector.extract_strided_slice %47 {offsets = [0, 256], sizes = [2, 128], strides = [1, 1]} : vector<2x384xf32> to vector<2x128xf32>
    %68 = vector.extract_strided_slice %50 {offsets = [0, 256], sizes = [2, 128], strides = [1, 1]} : vector<2x384xf32> to vector<2x128xf32>
    %69 = vector.broadcast %8 : vector<1x128xf32> to vector<2x128xf32>
    %70 = arith.addf %68, %69 : vector<2x128xf32>
    %71 = arith.mulf %58, %70 : vector<2x128xf32>
    %72 = arith.addf %67, %71 : vector<2x128xf32>
    %73 = math.tanh %72 : vector<2x128xf32>
    %cst_27 = arith.constant 1.000000e+00 : f32
    %74 = vector.broadcast %cst_27 : f32 to vector<2x128xf32>
    %75 = arith.subf %74, %66 : vector<2x128xf32>
    %76 = arith.mulf %75, %73 : vector<2x128xf32>
    %77 = arith.mulf %66, %10 : vector<2x128xf32>
    %78 = arith.addf %76, %77 : vector<2x128xf32>
    %c0_28 = arith.constant 0 : index
    %c0_29 = arith.constant 0 : index
    %c0_30 = arith.constant 0 : index
    %79 = vector.load %arg13[%c0_28, %c0_29, %c0_30] : memref<8x2x128xf32, #tpu.memory_space<vmem>>, vector<1x2x128xf32>
    %80 = vector.shape_cast %79 : vector<1x2x128xf32> to vector<2x128xf32>
    %81 = vector.shape_cast %78 : vector<2x128xf32> to vector<1x2x128xf32>
    tpu.vector_store %arg13[%c0_28, %c0_29, %c0_30], %81 {strides = array<i32>} : memref<8x2x128xf32, #tpu.memory_space<vmem>>, vector<1x2x128xf32>,
    %82 = vector.extract_strided_slice %5 {offsets = [2, 0], sizes = [2, 384], strides = [1, 1]} : vector<16x384xf32> to vector<2x384xf32>
    %83 = arith.truncf %42 : vector<2x128xf32> to vector<2x128xbf16>
    %c0_31 = arith.constant 0 : index
    %c0_32 = arith.constant 0 : index
    %84 = vector.load %arg3[%c0_31, %c0_32] : memref<128x384xbf16, #tpu.memory_space<vmem>>, vector<128x384xbf16>
    %cst_33 = arith.constant dense<0.000000e+00> : vector<2x384xf32>
    %85 = tpu.matmul %83, %84, %cst_33 {dimension_numbers = #tpu.dot_dimension_numbers<[1], [0], [0], [1], [0, 0, 1, 1], [], []>} : vector<2x128xbf16>, vector<128x384xbf16>, vector<2x384xf32> -> vector<2x384xf32>
    %86 = vector.extract_strided_slice %82 {offsets = [0, 0], sizes = [2, 128], strides = [1, 1]} : vector<2x384xf32> to vector<2x128xf32>
    %87 = vector.extract_strided_slice %85 {offsets = [0, 0], sizes = [2, 128], strides = [1, 1]} : vector<2x384xf32> to vector<2x128xf32>
    %88 = arith.addf %86, %87 : vector<2x128xf32>
    %89 = arith.negf %88 : vector<2x128xf32>
    %90 = math.exp %89 : vector<2x128xf32>
    %cst_34 = arith.constant 1.000000e+00 : f32
    %91 = vector.broadcast %cst_34 : f32 to vector<2x128xf32>
    %92 = arith.addf %91, %90 : vector<2x128xf32>
    %93 = arith.divf %91, %92 : vector<2x128xf32>
    %94 = vector.extract_strided_slice %82 {offsets = [0, 128], sizes = [2, 128], strides = [1, 1]} : vector<2x384xf32> to vector<2x128xf32>
    %95 = vector.extract_strided_slice %85 {offsets = [0, 128], sizes = [2, 128], strides = [1, 1]} : vector<2x384xf32> to vector<2x128xf32>
    %96 = arith.addf %94, %95 : vector<2x128xf32>
    %97 = arith.negf %96 : vector<2x128xf32>
    %98 = math.exp %97 : vector<2x128xf32>
    %cst_35 = arith.constant 1.000000e+00 : f32
    %99 = vector.broadcast %cst_35 : f32 to vector<2x128xf32>
    %100 = arith.addf %99, %98 : vector<2x128xf32>
    %101 = arith.divf %99, %100 : vector<2x128xf32>
    %102 = vector.extract_strided_slice %82 {offsets = [0, 256], sizes = [2, 128], strides = [1, 1]} : vector<2x384xf32> to vector<2x128xf32>
    %103 = vector.extract_strided_slice %85 {offsets = [0, 256], sizes = [2, 128], strides = [1, 1]} : vector<2x384xf32> to vector<2x128xf32>
    %104 = vector.broadcast %7 : vector<1x128xf32> to vector<2x128xf32>
    %105 = arith.addf %103, %104 : vector<2x128xf32>
    %106 = arith.mulf %93, %105 : vector<2x128xf32>
    %107 = arith.addf %102, %106 : vector<2x128xf32>
    %108 = math.tanh %107 : vector<2x128xf32>
    %cst_36 = arith.constant 1.000000e+00 : f32
    %109 = vector.broadcast %cst_36 : f32 to vector<2x128xf32>
    %110 = arith.subf %109, %101 : vector<2x128xf32>
    %111 = arith.mulf %110, %108 : vector<2x128xf32>
    %112 = arith.mulf %101, %42 : vector<2x128xf32>
    %113 = arith.addf %111, %112 : vector<2x128xf32>
    %114 = arith.truncf %113 : vector<2x128xf32> to vector<2x128xbf16>
    %c0_37 = arith.constant 0 : index
    %c0_38 = arith.constant 0 : index
    %115 = vector.load %arg6[%c0_37, %c0_38] : memref<128x384xbf16, #tpu.memory_space<vmem>>, vector<128x384xbf16>
    %cst_39 = arith.constant dense<0.000000e+00> : vector<2x384xf32>
    %116 = tpu.matmul %114, %115, %cst_39 {dimension_numbers = #tpu.dot_dimension_numbers<[1], [0], [0], [1], [0, 0, 1, 1], [], []>} : vector<2x128xbf16>, vector<128x384xbf16>, vector<2x384xf32> -> vector<2x384xf32>
    %117 = vector.broadcast %6 : vector<1x384xf32> to vector<2x384xf32>
    %118 = arith.addf %116, %117 : vector<2x384xf32>
    %119 = arith.truncf %78 : vector<2x128xf32> to vector<2x128xbf16>
    %c0_40 = arith.constant 0 : index
    %c0_41 = arith.constant 0 : index
    %120 = vector.load %arg7[%c0_40, %c0_41] : memref<128x384xbf16, #tpu.memory_space<vmem>>, vector<128x384xbf16>
    %cst_42 = arith.constant dense<0.000000e+00> : vector<2x384xf32>
    %121 = tpu.matmul %119, %120, %cst_42 {dimension_numbers = #tpu.dot_dimension_numbers<[1], [0], [0], [1], [0, 0, 1, 1], [], []>} : vector<2x128xbf16>, vector<128x384xbf16>, vector<2x384xf32> -> vector<2x384xf32>
    %122 = vector.extract_strided_slice %118 {offsets = [0, 0], sizes = [2, 128], strides = [1, 1]} : vector<2x384xf32> to vector<2x128xf32>
    %123 = vector.extract_strided_slice %121 {offsets = [0, 0], sizes = [2, 128], strides = [1, 1]} : vector<2x384xf32> to vector<2x128xf32>
    %124 = arith.addf %122, %123 : vector<2x128xf32>
    %125 = arith.negf %124 : vector<2x128xf32>
    %126 = math.exp %125 : vector<2x128xf32>
    %cst_43 = arith.constant 1.000000e+00 : f32
    %127 = vector.broadcast %cst_43 : f32 to vector<2x128xf32>
    %128 = arith.addf %127, %126 : vector<2x128xf32>
    %129 = arith.divf %127, %128 : vector<2x128xf32>
    %130 = vector.extract_strided_slice %118 {offsets = [0, 128], sizes = [2, 128], strides = [1, 1]} : vector<2x384xf32> to vector<2x128xf32>
    %131 = vector.extract_strided_slice %121 {offsets = [0, 128], sizes = [2, 128], strides = [1, 1]} : vector<2x384xf32> to vector<2x128xf32>
    %132 = arith.addf %130, %131 : vector<2x128xf32>
    %133 = arith.negf %132 : vector<2x128xf32>
    %134 = math.exp %133 : vector<2x128xf32>
    %cst_44 = arith.constant 1.000000e+00 : f32
    %135 = vector.broadcast %cst_44 : f32 to vector<2x128xf32>
    %136 = arith.addf %135, %134 : vector<2x128xf32>
    %137 = arith.divf %135, %136 : vector<2x128xf32>
    %138 = vector.extract_strided_slice %118 {offsets = [0, 256], sizes = [2, 128], strides = [1, 1]} : vector<2x384xf32> to vector<2x128xf32>
    %139 = vector.extract_strided_slice %121 {offsets = [0, 256], sizes = [2, 128], strides = [1, 1]} : vector<2x384xf32> to vector<2x128xf32>
    %140 = vector.broadcast %8 : vector<1x128xf32> to vector<2x128xf32>
    %141 = arith.addf %139, %140 : vector<2x128xf32>
    %142 = arith.mulf %129, %141 : vector<2x128xf32>
    %143 = arith.addf %138, %142 : vector<2x128xf32>
    %144 = math.tanh %143 : vector<2x128xf32>
    %cst_45 = arith.constant 1.000000e+00 : f32
    %145 = vector.broadcast %cst_45 : f32 to vector<2x128xf32>
    %146 = arith.subf %145, %137 : vector<2x128xf32>
    %147 = arith.mulf %146, %144 : vector<2x128xf32>
    %148 = arith.mulf %137, %78 : vector<2x128xf32>
    %149 = arith.addf %147, %148 : vector<2x128xf32>
    %c1 = arith.constant 1 : index
    %c0_46 = arith.constant 0 : index
    %c0_47 = arith.constant 0 : index
    %150 = vector.load %arg13[%c1, %c0_46, %c0_47] : memref<8x2x128xf32, #tpu.memory_space<vmem>>, vector<1x2x128xf32>
    %151 = vector.shape_cast %150 : vector<1x2x128xf32> to vector<2x128xf32>
    %152 = vector.shape_cast %149 : vector<2x128xf32> to vector<1x2x128xf32>
    tpu.vector_store %arg13[%c1, %c0_46, %c0_47], %152 {strides = array<i32>} : memref<8x2x128xf32, #tpu.memory_space<vmem>>, vector<1x2x128xf32>,
    %153 = vector.extract_strided_slice %5 {offsets = [4, 0], sizes = [2, 384], strides = [1, 1]} : vector<16x384xf32> to vector<2x384xf32>
    %154 = arith.truncf %113 : vector<2x128xf32> to vector<2x128xbf16>
    %c0_48 = arith.constant 0 : index
    %c0_49 = arith.constant 0 : index
    %155 = vector.load %arg3[%c0_48, %c0_49] : memref<128x384xbf16, #tpu.memory_space<vmem>>, vector<128x384xbf16>
    %cst_50 = arith.constant dense<0.000000e+00> : vector<2x384xf32>
    %156 = tpu.matmul %154, %155, %cst_50 {dimension_numbers = #tpu.dot_dimension_numbers<[1], [0], [0], [1], [0, 0, 1, 1], [], []>} : vector<2x128xbf16>, vector<128x384xbf16>, vector<2x384xf32> -> vector<2x384xf32>
    %157 = vector.extract_strided_slice %153 {offsets = [0, 0], sizes = [2, 128], strides = [1, 1]} : vector<2x384xf32> to vector<2x128xf32>
    %158 = vector.extract_strided_slice %156 {offsets = [0, 0], sizes = [2, 128], strides = [1, 1]} : vector<2x384xf32> to vector<2x128xf32>
    %159 = arith.addf %157, %158 : vector<2x128xf32>
    %160 = arith.negf %159 : vector<2x128xf32>
    %161 = math.exp %160 : vector<2x128xf32>
    %cst_51 = arith.constant 1.000000e+00 : f32
    %162 = vector.broadcast %cst_51 : f32 to vector<2x128xf32>
    %163 = arith.addf %162, %161 : vector<2x128xf32>
    %164 = arith.divf %162, %163 : vector<2x128xf32>
    %165 = vector.extract_strided_slice %153 {offsets = [0, 128], sizes = [2, 128], strides = [1, 1]} : vector<2x384xf32> to vector<2x128xf32>
    %166 = vector.extract_strided_slice %156 {offsets = [0, 128], sizes = [2, 128], strides = [1, 1]} : vector<2x384xf32> to vector<2x128xf32>
    %167 = arith.addf %165, %166 : vector<2x128xf32>
    %168 = arith.negf %167 : vector<2x128xf32>
    %169 = math.exp %168 : vector<2x128xf32>
    %cst_52 = arith.constant 1.000000e+00 : f32
    %170 = vector.broadcast %cst_52 : f32 to vector<2x128xf32>
    %171 = arith.addf %170, %169 : vector<2x128xf32>
    %172 = arith.divf %170, %171 : vector<2x128xf32>
    %173 = vector.extract_strided_slice %153 {offsets = [0, 256], sizes = [2, 128], strides = [1, 1]} : vector<2x384xf32> to vector<2x128xf32>
    %174 = vector.extract_strided_slice %156 {offsets = [0, 256], sizes = [2, 128], strides = [1, 1]} : vector<2x384xf32> to vector<2x128xf32>
    %175 = vector.broadcast %7 : vector<1x128xf32> to vector<2x128xf32>
    %176 = arith.addf %174, %175 : vector<2x128xf32>
    %177 = arith.mulf %164, %176 : vector<2x128xf32>
    %178 = arith.addf %173, %177 : vector<2x128xf32>
    %179 = math.tanh %178 : vector<2x128xf32>
    %cst_53 = arith.constant 1.000000e+00 : f32
    %180 = vector.broadcast %cst_53 : f32 to vector<2x128xf32>
    %181 = arith.subf %180, %172 : vector<2x128xf32>
    %182 = arith.mulf %181, %179 : vector<2x128xf32>
    %183 = arith.mulf %172, %113 : vector<2x128xf32>
    %184 = arith.addf %182, %183 : vector<2x128xf32>
    %185 = arith.truncf %184 : vector<2x128xf32> to vector<2x128xbf16>
    %c0_54 = arith.constant 0 : index
    %c0_55 = arith.constant 0 : index
    %186 = vector.load %arg6[%c0_54, %c0_55] : memref<128x384xbf16, #tpu.memory_space<vmem>>, vector<128x384xbf16>
    %cst_56 = arith.constant dense<0.000000e+00> : vector<2x384xf32>
    %187 = tpu.matmul %185, %186, %cst_56 {dimension_numbers = #tpu.dot_dimension_numbers<[1], [0], [0], [1], [0, 0, 1, 1], [], []>} : vector<2x128xbf16>, vector<128x384xbf16>, vector<2x384xf32> -> vector<2x384xf32>
    %188 = vector.broadcast %6 : vector<1x384xf32> to vector<2x384xf32>
    %189 = arith.addf %187, %188 : vector<2x384xf32>
    %190 = arith.truncf %149 : vector<2x128xf32> to vector<2x128xbf16>
    %c0_57 = arith.constant 0 : index
    %c0_58 = arith.constant 0 : index
    %191 = vector.load %arg7[%c0_57, %c0_58] : memref<128x384xbf16, #tpu.memory_space<vmem>>, vector<128x384xbf16>
    %cst_59 = arith.constant dense<0.000000e+00> : vector<2x384xf32>
    %192 = tpu.matmul %190, %191, %cst_59 {dimension_numbers = #tpu.dot_dimension_numbers<[1], [0], [0], [1], [0, 0, 1, 1], [], []>} : vector<2x128xbf16>, vector<128x384xbf16>, vector<2x384xf32> -> vector<2x384xf32>
    %193 = vector.extract_strided_slice %189 {offsets = [0, 0], sizes = [2, 128], strides = [1, 1]} : vector<2x384xf32> to vector<2x128xf32>
    %194 = vector.extract_strided_slice %192 {offsets = [0, 0], sizes = [2, 128], strides = [1, 1]} : vector<2x384xf32> to vector<2x128xf32>
    %195 = arith.addf %193, %194 : vector<2x128xf32>
    %196 = arith.negf %195 : vector<2x128xf32>
    %197 = math.exp %196 : vector<2x128xf32>
    %cst_60 = arith.constant 1.000000e+00 : f32
    %198 = vector.broadcast %cst_60 : f32 to vector<2x128xf32>
    %199 = arith.addf %198, %197 : vector<2x128xf32>
    %200 = arith.divf %198, %199 : vector<2x128xf32>
    %201 = vector.extract_strided_slice %189 {offsets = [0, 128], sizes = [2, 128], strides = [1, 1]} : vector<2x384xf32> to vector<2x128xf32>
    %202 = vector.extract_strided_slice %192 {offsets = [0, 128], sizes = [2, 128], strides = [1, 1]} : vector<2x384xf32> to vector<2x128xf32>
    %203 = arith.addf %201, %202 : vector<2x128xf32>
    %204 = arith.negf %203 : vector<2x128xf32>
    %205 = math.exp %204 : vector<2x128xf32>
    %cst_61 = arith.constant 1.000000e+00 : f32
    %206 = vector.broadcast %cst_61 : f32 to vector<2x128xf32>
    %207 = arith.addf %206, %205 : vector<2x128xf32>
    %208 = arith.divf %206, %207 : vector<2x128xf32>
    %209 = vector.extract_strided_slice %189 {offsets = [0, 256], sizes = [2, 128], strides = [1, 1]} : vector<2x384xf32> to vector<2x128xf32>
    %210 = vector.extract_strided_slice %192 {offsets = [0, 256], sizes = [2, 128], strides = [1, 1]} : vector<2x384xf32> to vector<2x128xf32>
    %211 = vector.broadcast %8 : vector<1x128xf32> to vector<2x128xf32>
    %212 = arith.addf %210, %211 : vector<2x128xf32>
    %213 = arith.mulf %200, %212 : vector<2x128xf32>
    %214 = arith.addf %209, %213 : vector<2x128xf32>
    %215 = math.tanh %214 : vector<2x128xf32>
    %cst_62 = arith.constant 1.000000e+00 : f32
    %216 = vector.broadcast %cst_62 : f32 to vector<2x128xf32>
    %217 = arith.subf %216, %208 : vector<2x128xf32>
    %218 = arith.mulf %217, %215 : vector<2x128xf32>
    %219 = arith.mulf %208, %149 : vector<2x128xf32>
    %220 = arith.addf %218, %219 : vector<2x128xf32>
    %c2 = arith.constant 2 : index
    %c0_63 = arith.constant 0 : index
    %c0_64 = arith.constant 0 : index
    %221 = vector.load %arg13[%c2, %c0_63, %c0_64] : memref<8x2x128xf32, #tpu.memory_space<vmem>>, vector<1x2x128xf32>
    %222 = vector.shape_cast %221 : vector<1x2x128xf32> to vector<2x128xf32>
    %223 = vector.shape_cast %220 : vector<2x128xf32> to vector<1x2x128xf32>
    tpu.vector_store %arg13[%c2, %c0_63, %c0_64], %223 {strides = array<i32>} : memref<8x2x128xf32, #tpu.memory_space<vmem>>, vector<1x2x128xf32>,
    %224 = vector.extract_strided_slice %5 {offsets = [6, 0], sizes = [2, 384], strides = [1, 1]} : vector<16x384xf32> to vector<2x384xf32>
    %225 = arith.truncf %184 : vector<2x128xf32> to vector<2x128xbf16>
    %c0_65 = arith.constant 0 : index
    %c0_66 = arith.constant 0 : index
    %226 = vector.load %arg3[%c0_65, %c0_66] : memref<128x384xbf16, #tpu.memory_space<vmem>>, vector<128x384xbf16>
    %cst_67 = arith.constant dense<0.000000e+00> : vector<2x384xf32>
    %227 = tpu.matmul %225, %226, %cst_67 {dimension_numbers = #tpu.dot_dimension_numbers<[1], [0], [0], [1], [0, 0, 1, 1], [], []>} : vector<2x128xbf16>, vector<128x384xbf16>, vector<2x384xf32> -> vector<2x384xf32>
    %228 = vector.extract_strided_slice %224 {offsets = [0, 0], sizes = [2, 128], strides = [1, 1]} : vector<2x384xf32> to vector<2x128xf32>
    %229 = vector.extract_strided_slice %227 {offsets = [0, 0], sizes = [2, 128], strides = [1, 1]} : vector<2x384xf32> to vector<2x128xf32>
    %230 = arith.addf %228, %229 : vector<2x128xf32>
    %231 = arith.negf %230 : vector<2x128xf32>
    %232 = math.exp %231 : vector<2x128xf32>
    %cst_68 = arith.constant 1.000000e+00 : f32
    %233 = vector.broadcast %cst_68 : f32 to vector<2x128xf32>
    %234 = arith.addf %233, %232 : vector<2x128xf32>
    %235 = arith.divf %233, %234 : vector<2x128xf32>
    %236 = vector.extract_strided_slice %224 {offsets = [0, 128], sizes = [2, 128], strides = [1, 1]} : vector<2x384xf32> to vector<2x128xf32>
    %237 = vector.extract_strided_slice %227 {offsets = [0, 128], sizes = [2, 128], strides = [1, 1]} : vector<2x384xf32> to vector<2x128xf32>
    %238 = arith.addf %236, %237 : vector<2x128xf32>
    %239 = arith.negf %238 : vector<2x128xf32>
    %240 = math.exp %239 : vector<2x128xf32>
    %cst_69 = arith.constant 1.000000e+00 : f32
    %241 = vector.broadcast %cst_69 : f32 to vector<2x128xf32>
    %242 = arith.addf %241, %240 : vector<2x128xf32>
    %243 = arith.divf %241, %242 : vector<2x128xf32>
    %244 = vector.extract_strided_slice %224 {offsets = [0, 256], sizes = [2, 128], strides = [1, 1]} : vector<2x384xf32> to vector<2x128xf32>
    %245 = vector.extract_strided_slice %227 {offsets = [0, 256], sizes = [2, 128], strides = [1, 1]} : vector<2x384xf32> to vector<2x128xf32>
    %246 = vector.broadcast %7 : vector<1x128xf32> to vector<2x128xf32>
    %247 = arith.addf %245, %246 : vector<2x128xf32>
    %248 = arith.mulf %235, %247 : vector<2x128xf32>
    %249 = arith.addf %244, %248 : vector<2x128xf32>
    %250 = math.tanh %249 : vector<2x128xf32>
    %cst_70 = arith.constant 1.000000e+00 : f32
    %251 = vector.broadcast %cst_70 : f32 to vector<2x128xf32>
    %252 = arith.subf %251, %243 : vector<2x128xf32>
    %253 = arith.mulf %252, %250 : vector<2x128xf32>
    %254 = arith.mulf %243, %184 : vector<2x128xf32>
    %255 = arith.addf %253, %254 : vector<2x128xf32>
    %256 = arith.truncf %255 : vector<2x128xf32> to vector<2x128xbf16>
    %c0_71 = arith.constant 0 : index
    %c0_72 = arith.constant 0 : index
    %257 = vector.load %arg6[%c0_71, %c0_72] : memref<128x384xbf16, #tpu.memory_space<vmem>>, vector<128x384xbf16>
    %cst_73 = arith.constant dense<0.000000e+00> : vector<2x384xf32>
    %258 = tpu.matmul %256, %257, %cst_73 {dimension_numbers = #tpu.dot_dimension_numbers<[1], [0], [0], [1], [0, 0, 1, 1], [], []>} : vector<2x128xbf16>, vector<128x384xbf16>, vector<2x384xf32> -> vector<2x384xf32>
    %259 = vector.broadcast %6 : vector<1x384xf32> to vector<2x384xf32>
    %260 = arith.addf %258, %259 : vector<2x384xf32>
    %261 = arith.truncf %220 : vector<2x128xf32> to vector<2x128xbf16>
    %c0_74 = arith.constant 0 : index
    %c0_75 = arith.constant 0 : index
    %262 = vector.load %arg7[%c0_74, %c0_75] : memref<128x384xbf16, #tpu.memory_space<vmem>>, vector<128x384xbf16>
    %cst_76 = arith.constant dense<0.000000e+00> : vector<2x384xf32>
    %263 = tpu.matmul %261, %262, %cst_76 {dimension_numbers = #tpu.dot_dimension_numbers<[1], [0], [0], [1], [0, 0, 1, 1], [], []>} : vector<2x128xbf16>, vector<128x384xbf16>, vector<2x384xf32> -> vector<2x384xf32>
    %264 = vector.extract_strided_slice %260 {offsets = [0, 0], sizes = [2, 128], strides = [1, 1]} : vector<2x384xf32> to vector<2x128xf32>
    %265 = vector.extract_strided_slice %263 {offsets = [0, 0], sizes = [2, 128], strides = [1, 1]} : vector<2x384xf32> to vector<2x128xf32>
    %266 = arith.addf %264, %265 : vector<2x128xf32>
    %267 = arith.negf %266 : vector<2x128xf32>
    %268 = math.exp %267 : vector<2x128xf32>
    %cst_77 = arith.constant 1.000000e+00 : f32
    %269 = vector.broadcast %cst_77 : f32 to vector<2x128xf32>
    %270 = arith.addf %269, %268 : vector<2x128xf32>
    %271 = arith.divf %269, %270 : vector<2x128xf32>
    %272 = vector.extract_strided_slice %260 {offsets = [0, 128], sizes = [2, 128], strides = [1, 1]} : vector<2x384xf32> to vector<2x128xf32>
    %273 = vector.extract_strided_slice %263 {offsets = [0, 128], sizes = [2, 128], strides = [1, 1]} : vector<2x384xf32> to vector<2x128xf32>
    %274 = arith.addf %272, %273 : vector<2x128xf32>
    %275 = arith.negf %274 : vector<2x128xf32>
    %276 = math.exp %275 : vector<2x128xf32>
    %cst_78 = arith.constant 1.000000e+00 : f32
    %277 = vector.broadcast %cst_78 : f32 to vector<2x128xf32>
    %278 = arith.addf %277, %276 : vector<2x128xf32>
    %279 = arith.divf %277, %278 : vector<2x128xf32>
    %280 = vector.extract_strided_slice %260 {offsets = [0, 256], sizes = [2, 128], strides = [1, 1]} : vector<2x384xf32> to vector<2x128xf32>
    %281 = vector.extract_strided_slice %263 {offsets = [0, 256], sizes = [2, 128], strides = [1, 1]} : vector<2x384xf32> to vector<2x128xf32>
    %282 = vector.broadcast %8 : vector<1x128xf32> to vector<2x128xf32>
    %283 = arith.addf %281, %282 : vector<2x128xf32>
    %284 = arith.mulf %271, %283 : vector<2x128xf32>
    %285 = arith.addf %280, %284 : vector<2x128xf32>
    %286 = math.tanh %285 : vector<2x128xf32>
    %cst_79 = arith.constant 1.000000e+00 : f32
    %287 = vector.broadcast %cst_79 : f32 to vector<2x128xf32>
    %288 = arith.subf %287, %279 : vector<2x128xf32>
    %289 = arith.mulf %288, %286 : vector<2x128xf32>
    %290 = arith.mulf %279, %220 : vector<2x128xf32>
    %291 = arith.addf %289, %290 : vector<2x128xf32>
    %c3 = arith.constant 3 : index
    %c0_80 = arith.constant 0 : index
    %c0_81 = arith.constant 0 : index
    %292 = vector.load %arg13[%c3, %c0_80, %c0_81] : memref<8x2x128xf32, #tpu.memory_space<vmem>>, vector<1x2x128xf32>
    %293 = vector.shape_cast %292 : vector<1x2x128xf32> to vector<2x128xf32>
    %294 = vector.shape_cast %291 : vector<2x128xf32> to vector<1x2x128xf32>
    tpu.vector_store %arg13[%c3, %c0_80, %c0_81], %294 {strides = array<i32>} : memref<8x2x128xf32, #tpu.memory_space<vmem>>, vector<1x2x128xf32>,
    %295 = vector.extract_strided_slice %5 {offsets = [8, 0], sizes = [2, 384], strides = [1, 1]} : vector<16x384xf32> to vector<2x384xf32>
    %296 = arith.truncf %255 : vector<2x128xf32> to vector<2x128xbf16>
    %c0_82 = arith.constant 0 : index
    %c0_83 = arith.constant 0 : index
    %297 = vector.load %arg3[%c0_82, %c0_83] : memref<128x384xbf16, #tpu.memory_space<vmem>>, vector<128x384xbf16>
    %cst_84 = arith.constant dense<0.000000e+00> : vector<2x384xf32>
    %298 = tpu.matmul %296, %297, %cst_84 {dimension_numbers = #tpu.dot_dimension_numbers<[1], [0], [0], [1], [0, 0, 1, 1], [], []>} : vector<2x128xbf16>, vector<128x384xbf16>, vector<2x384xf32> -> vector<2x384xf32>
    %299 = vector.extract_strided_slice %295 {offsets = [0, 0], sizes = [2, 128], strides = [1, 1]} : vector<2x384xf32> to vector<2x128xf32>
    %300 = vector.extract_strided_slice %298 {offsets = [0, 0], sizes = [2, 128], strides = [1, 1]} : vector<2x384xf32> to vector<2x128xf32>
    %301 = arith.addf %299, %300 : vector<2x128xf32>
    %302 = arith.negf %301 : vector<2x128xf32>
    %303 = math.exp %302 : vector<2x128xf32>
    %cst_85 = arith.constant 1.000000e+00 : f32
    %304 = vector.broadcast %cst_85 : f32 to vector<2x128xf32>
    %305 = arith.addf %304, %303 : vector<2x128xf32>
    %306 = arith.divf %304, %305 : vector<2x128xf32>
    %307 = vector.extract_strided_slice %295 {offsets = [0, 128], sizes = [2, 128], strides = [1, 1]} : vector<2x384xf32> to vector<2x128xf32>
    %308 = vector.extract_strided_slice %298 {offsets = [0, 128], sizes = [2, 128], strides = [1, 1]} : vector<2x384xf32> to vector<2x128xf32>
    %309 = arith.addf %307, %308 : vector<2x128xf32>
    %310 = arith.negf %309 : vector<2x128xf32>
    %311 = math.exp %310 : vector<2x128xf32>
    %cst_86 = arith.constant 1.000000e+00 : f32
    %312 = vector.broadcast %cst_86 : f32 to vector<2x128xf32>
    %313 = arith.addf %312, %311 : vector<2x128xf32>
    %314 = arith.divf %312, %313 : vector<2x128xf32>
    %315 = vector.extract_strided_slice %295 {offsets = [0, 256], sizes = [2, 128], strides = [1, 1]} : vector<2x384xf32> to vector<2x128xf32>
    %316 = vector.extract_strided_slice %298 {offsets = [0, 256], sizes = [2, 128], strides = [1, 1]} : vector<2x384xf32> to vector<2x128xf32>
    %317 = vector.broadcast %7 : vector<1x128xf32> to vector<2x128xf32>
    %318 = arith.addf %316, %317 : vector<2x128xf32>
    %319 = arith.mulf %306, %318 : vector<2x128xf32>
    %320 = arith.addf %315, %319 : vector<2x128xf32>
    %321 = math.tanh %320 : vector<2x128xf32>
    %cst_87 = arith.constant 1.000000e+00 : f32
    %322 = vector.broadcast %cst_87 : f32 to vector<2x128xf32>
    %323 = arith.subf %322, %314 : vector<2x128xf32>
    %324 = arith.mulf %323, %321 : vector<2x128xf32>
    %325 = arith.mulf %314, %255 : vector<2x128xf32>
    %326 = arith.addf %324, %325 : vector<2x128xf32>
    %327 = arith.truncf %326 : vector<2x128xf32> to vector<2x128xbf16>
    %c0_88 = arith.constant 0 : index
    %c0_89 = arith.constant 0 : index
    %328 = vector.load %arg6[%c0_88, %c0_89] : memref<128x384xbf16, #tpu.memory_space<vmem>>, vector<128x384xbf16>
    %cst_90 = arith.constant dense<0.000000e+00> : vector<2x384xf32>
    %329 = tpu.matmul %327, %328, %cst_90 {dimension_numbers = #tpu.dot_dimension_numbers<[1], [0], [0], [1], [0, 0, 1, 1], [], []>} : vector<2x128xbf16>, vector<128x384xbf16>, vector<2x384xf32> -> vector<2x384xf32>
    %330 = vector.broadcast %6 : vector<1x384xf32> to vector<2x384xf32>
    %331 = arith.addf %329, %330 : vector<2x384xf32>
    %332 = arith.truncf %291 : vector<2x128xf32> to vector<2x128xbf16>
    %c0_91 = arith.constant 0 : index
    %c0_92 = arith.constant 0 : index
    %333 = vector.load %arg7[%c0_91, %c0_92] : memref<128x384xbf16, #tpu.memory_space<vmem>>, vector<128x384xbf16>
    %cst_93 = arith.constant dense<0.000000e+00> : vector<2x384xf32>
    %334 = tpu.matmul %332, %333, %cst_93 {dimension_numbers = #tpu.dot_dimension_numbers<[1], [0], [0], [1], [0, 0, 1, 1], [], []>} : vector<2x128xbf16>, vector<128x384xbf16>, vector<2x384xf32> -> vector<2x384xf32>
    %335 = vector.extract_strided_slice %331 {offsets = [0, 0], sizes = [2, 128], strides = [1, 1]} : vector<2x384xf32> to vector<2x128xf32>
    %336 = vector.extract_strided_slice %334 {offsets = [0, 0], sizes = [2, 128], strides = [1, 1]} : vector<2x384xf32> to vector<2x128xf32>
    %337 = arith.addf %335, %336 : vector<2x128xf32>
    %338 = arith.negf %337 : vector<2x128xf32>
    %339 = math.exp %338 : vector<2x128xf32>
    %cst_94 = arith.constant 1.000000e+00 : f32
    %340 = vector.broadcast %cst_94 : f32 to vector<2x128xf32>
    %341 = arith.addf %340, %339 : vector<2x128xf32>
    %342 = arith.divf %340, %341 : vector<2x128xf32>
    %343 = vector.extract_strided_slice %331 {offsets = [0, 128], sizes = [2, 128], strides = [1, 1]} : vector<2x384xf32> to vector<2x128xf32>
    %344 = vector.extract_strided_slice %334 {offsets = [0, 128], sizes = [2, 128], strides = [1, 1]} : vector<2x384xf32> to vector<2x128xf32>
    %345 = arith.addf %343, %344 : vector<2x128xf32>
    %346 = arith.negf %345 : vector<2x128xf32>
    %347 = math.exp %346 : vector<2x128xf32>
    %cst_95 = arith.constant 1.000000e+00 : f32
    %348 = vector.broadcast %cst_95 : f32 to vector<2x128xf32>
    %349 = arith.addf %348, %347 : vector<2x128xf32>
    %350 = arith.divf %348, %349 : vector<2x128xf32>
    %351 = vector.extract_strided_slice %331 {offsets = [0, 256], sizes = [2, 128], strides = [1, 1]} : vector<2x384xf32> to vector<2x128xf32>
    %352 = vector.extract_strided_slice %334 {offsets = [0, 256], sizes = [2, 128], strides = [1, 1]} : vector<2x384xf32> to vector<2x128xf32>
    %353 = vector.broadcast %8 : vector<1x128xf32> to vector<2x128xf32>
    %354 = arith.addf %352, %353 : vector<2x128xf32>
    %355 = arith.mulf %342, %354 : vector<2x128xf32>
    %356 = arith.addf %351, %355 : vector<2x128xf32>
    %357 = math.tanh %356 : vector<2x128xf32>
    %cst_96 = arith.constant 1.000000e+00 : f32
    %358 = vector.broadcast %cst_96 : f32 to vector<2x128xf32>
    %359 = arith.subf %358, %350 : vector<2x128xf32>
    %360 = arith.mulf %359, %357 : vector<2x128xf32>
    %361 = arith.mulf %350, %291 : vector<2x128xf32>
    %362 = arith.addf %360, %361 : vector<2x128xf32>
    %c4 = arith.constant 4 : index
    %c0_97 = arith.constant 0 : index
    %c0_98 = arith.constant 0 : index
    %363 = vector.load %arg13[%c4, %c0_97, %c0_98] : memref<8x2x128xf32, #tpu.memory_space<vmem>>, vector<1x2x128xf32>
    %364 = vector.shape_cast %363 : vector<1x2x128xf32> to vector<2x128xf32>
    %365 = vector.shape_cast %362 : vector<2x128xf32> to vector<1x2x128xf32>
    tpu.vector_store %arg13[%c4, %c0_97, %c0_98], %365 {strides = array<i32>} : memref<8x2x128xf32, #tpu.memory_space<vmem>>, vector<1x2x128xf32>,
    %366 = vector.extract_strided_slice %5 {offsets = [10, 0], sizes = [2, 384], strides = [1, 1]} : vector<16x384xf32> to vector<2x384xf32>
    %367 = arith.truncf %326 : vector<2x128xf32> to vector<2x128xbf16>
    %c0_99 = arith.constant 0 : index
    %c0_100 = arith.constant 0 : index
    %368 = vector.load %arg3[%c0_99, %c0_100] : memref<128x384xbf16, #tpu.memory_space<vmem>>, vector<128x384xbf16>
    %cst_101 = arith.constant dense<0.000000e+00> : vector<2x384xf32>
    %369 = tpu.matmul %367, %368, %cst_101 {dimension_numbers = #tpu.dot_dimension_numbers<[1], [0], [0], [1], [0, 0, 1, 1], [], []>} : vector<2x128xbf16>, vector<128x384xbf16>, vector<2x384xf32> -> vector<2x384xf32>
    %370 = vector.extract_strided_slice %366 {offsets = [0, 0], sizes = [2, 128], strides = [1, 1]} : vector<2x384xf32> to vector<2x128xf32>
    %371 = vector.extract_strided_slice %369 {offsets = [0, 0], sizes = [2, 128], strides = [1, 1]} : vector<2x384xf32> to vector<2x128xf32>
    %372 = arith.addf %370, %371 : vector<2x128xf32>
    %373 = arith.negf %372 : vector<2x128xf32>
    %374 = math.exp %373 : vector<2x128xf32>
    %cst_102 = arith.constant 1.000000e+00 : f32
    %375 = vector.broadcast %cst_102 : f32 to vector<2x128xf32>
    %376 = arith.addf %375, %374 : vector<2x128xf32>
    %377 = arith.divf %375, %376 : vector<2x128xf32>
    %378 = vector.extract_strided_slice %366 {offsets = [0, 128], sizes = [2, 128], strides = [1, 1]} : vector<2x384xf32> to vector<2x128xf32>
    %379 = vector.extract_strided_slice %369 {offsets = [0, 128], sizes = [2, 128], strides = [1, 1]} : vector<2x384xf32> to vector<2x128xf32>
    %380 = arith.addf %378, %379 : vector<2x128xf32>
    %381 = arith.negf %380 : vector<2x128xf32>
    %382 = math.exp %381 : vector<2x128xf32>
    %cst_103 = arith.constant 1.000000e+00 : f32
    %383 = vector.broadcast %cst_103 : f32 to vector<2x128xf32>
    %384 = arith.addf %383, %382 : vector<2x128xf32>
    %385 = arith.divf %383, %384 : vector<2x128xf32>
    %386 = vector.extract_strided_slice %366 {offsets = [0, 256], sizes = [2, 128], strides = [1, 1]} : vector<2x384xf32> to vector<2x128xf32>
    %387 = vector.extract_strided_slice %369 {offsets = [0, 256], sizes = [2, 128], strides = [1, 1]} : vector<2x384xf32> to vector<2x128xf32>
    %388 = vector.broadcast %7 : vector<1x128xf32> to vector<2x128xf32>
    %389 = arith.addf %387, %388 : vector<2x128xf32>
    %390 = arith.mulf %377, %389 : vector<2x128xf32>
    %391 = arith.addf %386, %390 : vector<2x128xf32>
    %392 = math.tanh %391 : vector<2x128xf32>
    %cst_104 = arith.constant 1.000000e+00 : f32
    %393 = vector.broadcast %cst_104 : f32 to vector<2x128xf32>
    %394 = arith.subf %393, %385 : vector<2x128xf32>
    %395 = arith.mulf %394, %392 : vector<2x128xf32>
    %396 = arith.mulf %385, %326 : vector<2x128xf32>
    %397 = arith.addf %395, %396 : vector<2x128xf32>
    %398 = arith.truncf %397 : vector<2x128xf32> to vector<2x128xbf16>
    %c0_105 = arith.constant 0 : index
    %c0_106 = arith.constant 0 : index
    %399 = vector.load %arg6[%c0_105, %c0_106] : memref<128x384xbf16, #tpu.memory_space<vmem>>, vector<128x384xbf16>
    %cst_107 = arith.constant dense<0.000000e+00> : vector<2x384xf32>
    %400 = tpu.matmul %398, %399, %cst_107 {dimension_numbers = #tpu.dot_dimension_numbers<[1], [0], [0], [1], [0, 0, 1, 1], [], []>} : vector<2x128xbf16>, vector<128x384xbf16>, vector<2x384xf32> -> vector<2x384xf32>
    %401 = vector.broadcast %6 : vector<1x384xf32> to vector<2x384xf32>
    %402 = arith.addf %400, %401 : vector<2x384xf32>
    %403 = arith.truncf %362 : vector<2x128xf32> to vector<2x128xbf16>
    %c0_108 = arith.constant 0 : index
    %c0_109 = arith.constant 0 : index
    %404 = vector.load %arg7[%c0_108, %c0_109] : memref<128x384xbf16, #tpu.memory_space<vmem>>, vector<128x384xbf16>
    %cst_110 = arith.constant dense<0.000000e+00> : vector<2x384xf32>
    %405 = tpu.matmul %403, %404, %cst_110 {dimension_numbers = #tpu.dot_dimension_numbers<[1], [0], [0], [1], [0, 0, 1, 1], [], []>} : vector<2x128xbf16>, vector<128x384xbf16>, vector<2x384xf32> -> vector<2x384xf32>
    %406 = vector.extract_strided_slice %402 {offsets = [0, 0], sizes = [2, 128], strides = [1, 1]} : vector<2x384xf32> to vector<2x128xf32>
    %407 = vector.extract_strided_slice %405 {offsets = [0, 0], sizes = [2, 128], strides = [1, 1]} : vector<2x384xf32> to vector<2x128xf32>
    %408 = arith.addf %406, %407 : vector<2x128xf32>
    %409 = arith.negf %408 : vector<2x128xf32>
    %410 = math.exp %409 : vector<2x128xf32>
    %cst_111 = arith.constant 1.000000e+00 : f32
    %411 = vector.broadcast %cst_111 : f32 to vector<2x128xf32>
    %412 = arith.addf %411, %410 : vector<2x128xf32>
    %413 = arith.divf %411, %412 : vector<2x128xf32>
    %414 = vector.extract_strided_slice %402 {offsets = [0, 128], sizes = [2, 128], strides = [1, 1]} : vector<2x384xf32> to vector<2x128xf32>
    %415 = vector.extract_strided_slice %405 {offsets = [0, 128], sizes = [2, 128], strides = [1, 1]} : vector<2x384xf32> to vector<2x128xf32>
    %416 = arith.addf %414, %415 : vector<2x128xf32>
    %417 = arith.negf %416 : vector<2x128xf32>
    %418 = math.exp %417 : vector<2x128xf32>
    %cst_112 = arith.constant 1.000000e+00 : f32
    %419 = vector.broadcast %cst_112 : f32 to vector<2x128xf32>
    %420 = arith.addf %419, %418 : vector<2x128xf32>
    %421 = arith.divf %419, %420 : vector<2x128xf32>
    %422 = vector.extract_strided_slice %402 {offsets = [0, 256], sizes = [2, 128], strides = [1, 1]} : vector<2x384xf32> to vector<2x128xf32>
    %423 = vector.extract_strided_slice %405 {offsets = [0, 256], sizes = [2, 128], strides = [1, 1]} : vector<2x384xf32> to vector<2x128xf32>
    %424 = vector.broadcast %8 : vector<1x128xf32> to vector<2x128xf32>
    %425 = arith.addf %423, %424 : vector<2x128xf32>
    %426 = arith.mulf %413, %425 : vector<2x128xf32>
    %427 = arith.addf %422, %426 : vector<2x128xf32>
    %428 = math.tanh %427 : vector<2x128xf32>
    %cst_113 = arith.constant 1.000000e+00 : f32
    %429 = vector.broadcast %cst_113 : f32 to vector<2x128xf32>
    %430 = arith.subf %429, %421 : vector<2x128xf32>
    %431 = arith.mulf %430, %428 : vector<2x128xf32>
    %432 = arith.mulf %421, %362 : vector<2x128xf32>
    %433 = arith.addf %431, %432 : vector<2x128xf32>
    %c5 = arith.constant 5 : index
    %c0_114 = arith.constant 0 : index
    %c0_115 = arith.constant 0 : index
    %434 = vector.load %arg13[%c5, %c0_114, %c0_115] : memref<8x2x128xf32, #tpu.memory_space<vmem>>, vector<1x2x128xf32>
    %435 = vector.shape_cast %434 : vector<1x2x128xf32> to vector<2x128xf32>
    %436 = vector.shape_cast %433 : vector<2x128xf32> to vector<1x2x128xf32>
    tpu.vector_store %arg13[%c5, %c0_114, %c0_115], %436 {strides = array<i32>} : memref<8x2x128xf32, #tpu.memory_space<vmem>>, vector<1x2x128xf32>,
    %437 = vector.extract_strided_slice %5 {offsets = [12, 0], sizes = [2, 384], strides = [1, 1]} : vector<16x384xf32> to vector<2x384xf32>
    %438 = arith.truncf %397 : vector<2x128xf32> to vector<2x128xbf16>
    %c0_116 = arith.constant 0 : index
    %c0_117 = arith.constant 0 : index
    %439 = vector.load %arg3[%c0_116, %c0_117] : memref<128x384xbf16, #tpu.memory_space<vmem>>, vector<128x384xbf16>
    %cst_118 = arith.constant dense<0.000000e+00> : vector<2x384xf32>
    %440 = tpu.matmul %438, %439, %cst_118 {dimension_numbers = #tpu.dot_dimension_numbers<[1], [0], [0], [1], [0, 0, 1, 1], [], []>} : vector<2x128xbf16>, vector<128x384xbf16>, vector<2x384xf32> -> vector<2x384xf32>
    %441 = vector.extract_strided_slice %437 {offsets = [0, 0], sizes = [2, 128], strides = [1, 1]} : vector<2x384xf32> to vector<2x128xf32>
    %442 = vector.extract_strided_slice %440 {offsets = [0, 0], sizes = [2, 128], strides = [1, 1]} : vector<2x384xf32> to vector<2x128xf32>
    %443 = arith.addf %441, %442 : vector<2x128xf32>
    %444 = arith.negf %443 : vector<2x128xf32>
    %445 = math.exp %444 : vector<2x128xf32>
    %cst_119 = arith.constant 1.000000e+00 : f32
    %446 = vector.broadcast %cst_119 : f32 to vector<2x128xf32>
    %447 = arith.addf %446, %445 : vector<2x128xf32>
    %448 = arith.divf %446, %447 : vector<2x128xf32>
    %449 = vector.extract_strided_slice %437 {offsets = [0, 128], sizes = [2, 128], strides = [1, 1]} : vector<2x384xf32> to vector<2x128xf32>
    %450 = vector.extract_strided_slice %440 {offsets = [0, 128], sizes = [2, 128], strides = [1, 1]} : vector<2x384xf32> to vector<2x128xf32>
    %451 = arith.addf %449, %450 : vector<2x128xf32>
    %452 = arith.negf %451 : vector<2x128xf32>
    %453 = math.exp %452 : vector<2x128xf32>
    %cst_120 = arith.constant 1.000000e+00 : f32
    %454 = vector.broadcast %cst_120 : f32 to vector<2x128xf32>
    %455 = arith.addf %454, %453 : vector<2x128xf32>
    %456 = arith.divf %454, %455 : vector<2x128xf32>
    %457 = vector.extract_strided_slice %437 {offsets = [0, 256], sizes = [2, 128], strides = [1, 1]} : vector<2x384xf32> to vector<2x128xf32>
    %458 = vector.extract_strided_slice %440 {offsets = [0, 256], sizes = [2, 128], strides = [1, 1]} : vector<2x384xf32> to vector<2x128xf32>
    %459 = vector.broadcast %7 : vector<1x128xf32> to vector<2x128xf32>
    %460 = arith.addf %458, %459 : vector<2x128xf32>
    %461 = arith.mulf %448, %460 : vector<2x128xf32>
    %462 = arith.addf %457, %461 : vector<2x128xf32>
    %463 = math.tanh %462 : vector<2x128xf32>
    %cst_121 = arith.constant 1.000000e+00 : f32
    %464 = vector.broadcast %cst_121 : f32 to vector<2x128xf32>
    %465 = arith.subf %464, %456 : vector<2x128xf32>
    %466 = arith.mulf %465, %463 : vector<2x128xf32>
    %467 = arith.mulf %456, %397 : vector<2x128xf32>
    %468 = arith.addf %466, %467 : vector<2x128xf32>
    %469 = arith.truncf %468 : vector<2x128xf32> to vector<2x128xbf16>
    %c0_122 = arith.constant 0 : index
    %c0_123 = arith.constant 0 : index
    %470 = vector.load %arg6[%c0_122, %c0_123] : memref<128x384xbf16, #tpu.memory_space<vmem>>, vector<128x384xbf16>
    %cst_124 = arith.constant dense<0.000000e+00> : vector<2x384xf32>
    %471 = tpu.matmul %469, %470, %cst_124 {dimension_numbers = #tpu.dot_dimension_numbers<[1], [0], [0], [1], [0, 0, 1, 1], [], []>} : vector<2x128xbf16>, vector<128x384xbf16>, vector<2x384xf32> -> vector<2x384xf32>
    %472 = vector.broadcast %6 : vector<1x384xf32> to vector<2x384xf32>
    %473 = arith.addf %471, %472 : vector<2x384xf32>
    %474 = arith.truncf %433 : vector<2x128xf32> to vector<2x128xbf16>
    %c0_125 = arith.constant 0 : index
    %c0_126 = arith.constant 0 : index
    %475 = vector.load %arg7[%c0_125, %c0_126] : memref<128x384xbf16, #tpu.memory_space<vmem>>, vector<128x384xbf16>
    %cst_127 = arith.constant dense<0.000000e+00> : vector<2x384xf32>
    %476 = tpu.matmul %474, %475, %cst_127 {dimension_numbers = #tpu.dot_dimension_numbers<[1], [0], [0], [1], [0, 0, 1, 1], [], []>} : vector<2x128xbf16>, vector<128x384xbf16>, vector<2x384xf32> -> vector<2x384xf32>
    %477 = vector.extract_strided_slice %473 {offsets = [0, 0], sizes = [2, 128], strides = [1, 1]} : vector<2x384xf32> to vector<2x128xf32>
    %478 = vector.extract_strided_slice %476 {offsets = [0, 0], sizes = [2, 128], strides = [1, 1]} : vector<2x384xf32> to vector<2x128xf32>
    %479 = arith.addf %477, %478 : vector<2x128xf32>
    %480 = arith.negf %479 : vector<2x128xf32>
    %481 = math.exp %480 : vector<2x128xf32>
    %cst_128 = arith.constant 1.000000e+00 : f32
    %482 = vector.broadcast %cst_128 : f32 to vector<2x128xf32>
    %483 = arith.addf %482, %481 : vector<2x128xf32>
    %484 = arith.divf %482, %483 : vector<2x128xf32>
    %485 = vector.extract_strided_slice %473 {offsets = [0, 128], sizes = [2, 128], strides = [1, 1]} : vector<2x384xf32> to vector<2x128xf32>
    %486 = vector.extract_strided_slice %476 {offsets = [0, 128], sizes = [2, 128], strides = [1, 1]} : vector<2x384xf32> to vector<2x128xf32>
    %487 = arith.addf %485, %486 : vector<2x128xf32>
    %488 = arith.negf %487 : vector<2x128xf32>
    %489 = math.exp %488 : vector<2x128xf32>
    %cst_129 = arith.constant 1.000000e+00 : f32
    %490 = vector.broadcast %cst_129 : f32 to vector<2x128xf32>
    %491 = arith.addf %490, %489 : vector<2x128xf32>
    %492 = arith.divf %490, %491 : vector<2x128xf32>
    %493 = vector.extract_strided_slice %473 {offsets = [0, 256], sizes = [2, 128], strides = [1, 1]} : vector<2x384xf32> to vector<2x128xf32>
    %494 = vector.extract_strided_slice %476 {offsets = [0, 256], sizes = [2, 128], strides = [1, 1]} : vector<2x384xf32> to vector<2x128xf32>
    %495 = vector.broadcast %8 : vector<1x128xf32> to vector<2x128xf32>
    %496 = arith.addf %494, %495 : vector<2x128xf32>
    %497 = arith.mulf %484, %496 : vector<2x128xf32>
    %498 = arith.addf %493, %497 : vector<2x128xf32>
    %499 = math.tanh %498 : vector<2x128xf32>
    %cst_130 = arith.constant 1.000000e+00 : f32
    %500 = vector.broadcast %cst_130 : f32 to vector<2x128xf32>
    %501 = arith.subf %500, %492 : vector<2x128xf32>
    %502 = arith.mulf %501, %499 : vector<2x128xf32>
    %503 = arith.mulf %492, %433 : vector<2x128xf32>
    %504 = arith.addf %502, %503 : vector<2x128xf32>
    %c6 = arith.constant 6 : index
    %c0_131 = arith.constant 0 : index
    %c0_132 = arith.constant 0 : index
    %505 = vector.load %arg13[%c6, %c0_131, %c0_132] : memref<8x2x128xf32, #tpu.memory_space<vmem>>, vector<1x2x128xf32>
    %506 = vector.shape_cast %505 : vector<1x2x128xf32> to vector<2x128xf32>
    %507 = vector.shape_cast %504 : vector<2x128xf32> to vector<1x2x128xf32>
    tpu.vector_store %arg13[%c6, %c0_131, %c0_132], %507 {strides = array<i32>} : memref<8x2x128xf32, #tpu.memory_space<vmem>>, vector<1x2x128xf32>,
    %508 = vector.extract_strided_slice %5 {offsets = [14, 0], sizes = [2, 384], strides = [1, 1]} : vector<16x384xf32> to vector<2x384xf32>
    %509 = arith.truncf %468 : vector<2x128xf32> to vector<2x128xbf16>
    %c0_133 = arith.constant 0 : index
    %c0_134 = arith.constant 0 : index
    %510 = vector.load %arg3[%c0_133, %c0_134] : memref<128x384xbf16, #tpu.memory_space<vmem>>, vector<128x384xbf16>
    %cst_135 = arith.constant dense<0.000000e+00> : vector<2x384xf32>
    %511 = tpu.matmul %509, %510, %cst_135 {dimension_numbers = #tpu.dot_dimension_numbers<[1], [0], [0], [1], [0, 0, 1, 1], [], []>} : vector<2x128xbf16>, vector<128x384xbf16>, vector<2x384xf32> -> vector<2x384xf32>
    %512 = vector.extract_strided_slice %508 {offsets = [0, 0], sizes = [2, 128], strides = [1, 1]} : vector<2x384xf32> to vector<2x128xf32>
    %513 = vector.extract_strided_slice %511 {offsets = [0, 0], sizes = [2, 128], strides = [1, 1]} : vector<2x384xf32> to vector<2x128xf32>
    %514 = arith.addf %512, %513 : vector<2x128xf32>
    %515 = arith.negf %514 : vector<2x128xf32>
    %516 = math.exp %515 : vector<2x128xf32>
    %cst_136 = arith.constant 1.000000e+00 : f32
    %517 = vector.broadcast %cst_136 : f32 to vector<2x128xf32>
    %518 = arith.addf %517, %516 : vector<2x128xf32>
    %519 = arith.divf %517, %518 : vector<2x128xf32>
    %520 = vector.extract_strided_slice %508 {offsets = [0, 128], sizes = [2, 128], strides = [1, 1]} : vector<2x384xf32> to vector<2x128xf32>
    %521 = vector.extract_strided_slice %511 {offsets = [0, 128], sizes = [2, 128], strides = [1, 1]} : vector<2x384xf32> to vector<2x128xf32>
    %522 = arith.addf %520, %521 : vector<2x128xf32>
    %523 = arith.negf %522 : vector<2x128xf32>
    %524 = math.exp %523 : vector<2x128xf32>
    %cst_137 = arith.constant 1.000000e+00 : f32
    %525 = vector.broadcast %cst_137 : f32 to vector<2x128xf32>
    %526 = arith.addf %525, %524 : vector<2x128xf32>
    %527 = arith.divf %525, %526 : vector<2x128xf32>
    %528 = vector.extract_strided_slice %508 {offsets = [0, 256], sizes = [2, 128], strides = [1, 1]} : vector<2x384xf32> to vector<2x128xf32>
    %529 = vector.extract_strided_slice %511 {offsets = [0, 256], sizes = [2, 128], strides = [1, 1]} : vector<2x384xf32> to vector<2x128xf32>
    %530 = vector.broadcast %7 : vector<1x128xf32> to vector<2x128xf32>
    %531 = arith.addf %529, %530 : vector<2x128xf32>
    %532 = arith.mulf %519, %531 : vector<2x128xf32>
    %533 = arith.addf %528, %532 : vector<2x128xf32>
    %534 = math.tanh %533 : vector<2x128xf32>
    %cst_138 = arith.constant 1.000000e+00 : f32
    %535 = vector.broadcast %cst_138 : f32 to vector<2x128xf32>
    %536 = arith.subf %535, %527 : vector<2x128xf32>
    %537 = arith.mulf %536, %534 : vector<2x128xf32>
    %538 = arith.mulf %527, %468 : vector<2x128xf32>
    %539 = arith.addf %537, %538 : vector<2x128xf32>
    %540 = arith.truncf %539 : vector<2x128xf32> to vector<2x128xbf16>
    %c0_139 = arith.constant 0 : index
    %c0_140 = arith.constant 0 : index
    %541 = vector.load %arg6[%c0_139, %c0_140] : memref<128x384xbf16, #tpu.memory_space<vmem>>, vector<128x384xbf16>
    %cst_141 = arith.constant dense<0.000000e+00> : vector<2x384xf32>
    %542 = tpu.matmul %540, %541, %cst_141 {dimension_numbers = #tpu.dot_dimension_numbers<[1], [0], [0], [1], [0, 0, 1, 1], [], []>} : vector<2x128xbf16>, vector<128x384xbf16>, vector<2x384xf32> -> vector<2x384xf32>
    %543 = vector.broadcast %6 : vector<1x384xf32> to vector<2x384xf32>
    %544 = arith.addf %542, %543 : vector<2x384xf32>
    %545 = arith.truncf %504 : vector<2x128xf32> to vector<2x128xbf16>
    %c0_142 = arith.constant 0 : index
    %c0_143 = arith.constant 0 : index
    %546 = vector.load %arg7[%c0_142, %c0_143] : memref<128x384xbf16, #tpu.memory_space<vmem>>, vector<128x384xbf16>
    %cst_144 = arith.constant dense<0.000000e+00> : vector<2x384xf32>
    %547 = tpu.matmul %545, %546, %cst_144 {dimension_numbers = #tpu.dot_dimension_numbers<[1], [0], [0], [1], [0, 0, 1, 1], [], []>} : vector<2x128xbf16>, vector<128x384xbf16>, vector<2x384xf32> -> vector<2x384xf32>
    %548 = vector.extract_strided_slice %544 {offsets = [0, 0], sizes = [2, 128], strides = [1, 1]} : vector<2x384xf32> to vector<2x128xf32>
    %549 = vector.extract_strided_slice %547 {offsets = [0, 0], sizes = [2, 128], strides = [1, 1]} : vector<2x384xf32> to vector<2x128xf32>
    %550 = arith.addf %548, %549 : vector<2x128xf32>
    %551 = arith.negf %550 : vector<2x128xf32>
    %552 = math.exp %551 : vector<2x128xf32>
    %cst_145 = arith.constant 1.000000e+00 : f32
    %553 = vector.broadcast %cst_145 : f32 to vector<2x128xf32>
    %554 = arith.addf %553, %552 : vector<2x128xf32>
    %555 = arith.divf %553, %554 : vector<2x128xf32>
    %556 = vector.extract_strided_slice %544 {offsets = [0, 128], sizes = [2, 128], strides = [1, 1]} : vector<2x384xf32> to vector<2x128xf32>
    %557 = vector.extract_strided_slice %547 {offsets = [0, 128], sizes = [2, 128], strides = [1, 1]} : vector<2x384xf32> to vector<2x128xf32>
    %558 = arith.addf %556, %557 : vector<2x128xf32>
    %559 = arith.negf %558 : vector<2x128xf32>
    %560 = math.exp %559 : vector<2x128xf32>
    %cst_146 = arith.constant 1.000000e+00 : f32
    %561 = vector.broadcast %cst_146 : f32 to vector<2x128xf32>
    %562 = arith.addf %561, %560 : vector<2x128xf32>
    %563 = arith.divf %561, %562 : vector<2x128xf32>
    %564 = vector.extract_strided_slice %544 {offsets = [0, 256], sizes = [2, 128], strides = [1, 1]} : vector<2x384xf32> to vector<2x128xf32>
    %565 = vector.extract_strided_slice %547 {offsets = [0, 256], sizes = [2, 128], strides = [1, 1]} : vector<2x384xf32> to vector<2x128xf32>
    %566 = vector.broadcast %8 : vector<1x128xf32> to vector<2x128xf32>
    %567 = arith.addf %565, %566 : vector<2x128xf32>
    %568 = arith.mulf %555, %567 : vector<2x128xf32>
    %569 = arith.addf %564, %568 : vector<2x128xf32>
    %570 = math.tanh %569 : vector<2x128xf32>
    %cst_147 = arith.constant 1.000000e+00 : f32
    %571 = vector.broadcast %cst_147 : f32 to vector<2x128xf32>
    %572 = arith.subf %571, %563 : vector<2x128xf32>
    %573 = arith.mulf %572, %570 : vector<2x128xf32>
    %574 = arith.mulf %563, %504 : vector<2x128xf32>
    %575 = arith.addf %573, %574 : vector<2x128xf32>
    %c7 = arith.constant 7 : index
    %c0_148 = arith.constant 0 : index
    %c0_149 = arith.constant 0 : index
    %576 = vector.load %arg13[%c7, %c0_148, %c0_149] : memref<8x2x128xf32, #tpu.memory_space<vmem>>, vector<1x2x128xf32>
    %577 = vector.shape_cast %576 : vector<1x2x128xf32> to vector<2x128xf32>
    %578 = vector.shape_cast %575 : vector<2x128xf32> to vector<1x2x128xf32>
    tpu.vector_store %arg13[%c7, %c0_148, %c0_149], %578 {strides = array<i32>} : memref<8x2x128xf32, #tpu.memory_space<vmem>>, vector<1x2x128xf32>,
    %c0_150 = arith.constant 0 : index
    %c0_151 = arith.constant 0 : index
    %c0_152 = arith.constant 0 : index
    %579 = vector.load %arg13[%c0_150, %c0_151, %c0_152] : memref<8x2x128xf32, #tpu.memory_space<vmem>>, vector<8x2x128xf32>
    %c0_153 = arith.constant 0 : index
    %c0_154 = arith.constant 0 : index
    %580 = vector.load %arg11[%c0_153, %c0_154] : memref<1x128xf32, #tpu.memory_space<vmem>>, vector<1x128xf32>
    %581 = vector.shape_cast %580 : vector<1x128xf32> to vector<1x128xf32>
    %582 = vector.broadcast %581 : vector<1x128xf32> to vector<8x128xf32>
    %583 = vector.extract_strided_slice %579 {offsets = [0, 0, 0], sizes = [8, 1, 128], strides = [1, 1, 1]} : vector<8x2x128xf32> to vector<8x1x128xf32>
    %584 = vector.shape_cast %583 : vector<8x1x128xf32> to vector<8x128xf32>
    %585 = arith.truncf %584 : vector<8x128xf32> to vector<8x128xbf16>
    %c0_155 = arith.constant 0 : index
    %c0_156 = arith.constant 0 : index
    %c0_157 = arith.constant 0 : index
    %586 = vector.load %arg10[%c0_155, %c0_156, %c0_157] : memref<2x128x128xbf16, #tpu.memory_space<vmem>>, vector<1x128x128xbf16>
    %587 = vector.shape_cast %586 : vector<1x128x128xbf16> to vector<128x128xbf16>
    %cst_158 = arith.constant dense<0.000000e+00> : vector<8x128xf32>
    %588 = tpu.matmul %585, %587, %cst_158 {dimension_numbers = #tpu.dot_dimension_numbers<[1], [0], [0], [1], [0, 0, 1, 1], [], []>} : vector<8x128xbf16>, vector<128x128xbf16>, vector<8x128xf32> -> vector<8x128xf32>
    %589 = arith.addf %582, %588 : vector<8x128xf32>
    %590 = vector.extract_strided_slice %579 {offsets = [0, 1, 0], sizes = [8, 1, 128], strides = [1, 1, 1]} : vector<8x2x128xf32> to vector<8x1x128xf32>
    %591 = vector.shape_cast %590 : vector<8x1x128xf32> to vector<8x128xf32>
    %592 = arith.truncf %591 : vector<8x128xf32> to vector<8x128xbf16>
    %c1_159 = arith.constant 1 : index
    %c0_160 = arith.constant 0 : index
    %c0_161 = arith.constant 0 : index
    %593 = vector.load %arg10[%c1_159, %c0_160, %c0_161] : memref<2x128x128xbf16, #tpu.memory_space<vmem>>, vector<1x128x128xbf16>
    %594 = vector.shape_cast %593 : vector<1x128x128xbf16> to vector<128x128xbf16>
    %cst_162 = arith.constant dense<0.000000e+00> : vector<8x128xf32>
    %595 = tpu.matmul %592, %594, %cst_162 {dimension_numbers = #tpu.dot_dimension_numbers<[1], [0], [0], [1], [0, 0, 1, 1], [], []>} : vector<8x128xbf16>, vector<128x128xbf16>, vector<8x128xf32> -> vector<8x128xf32>
    %596 = arith.addf %589, %595 : vector<8x128xf32>
    %597 = tpu.iota {dimensions = array<i32: 1>} : vector<8x128xi32>
    %c6_i32 = arith.constant 6 : i32
    %598 = vector.broadcast %c6_i32 : i32 to vector<8x128xi32>
    %599 = arith.cmpi slt, %597, %598 : vector<8x128xi32>
    %cst_163 = arith.constant -1.000000e+30 : f32
    %600 = vector.broadcast %cst_163 : f32 to vector<8x128xf32>
    %601 = arith.select %599, %596, %600 : vector<8x128xi1>, vector<8x128xf32>
    %cst_164 = arith.constant dense<0xFF800000> : vector<8xf32>
    %602 = vector.multi_reduction <maximumf>, %601, %cst_164 [1] : vector<8x128xf32> to vector<8xf32>
    %603 = vector.shape_cast %602 : vector<8xf32> to vector<8x1xf32>
    %604 = vector.broadcast %603 : vector<8x1xf32> to vector<8x128xf32>
    %605 = arith.subf %601, %604 : vector<8x128xf32>
    %606 = math.exp %605 : vector<8x128xf32>
    %cst_165 = arith.constant 0.000000e+00 : f32
    %607 = vector.broadcast %cst_165 : f32 to vector<8x128xf32>
    %608 = arith.select %599, %606, %607 : vector<8x128xi1>, vector<8x128xf32>
    %cst_166 = arith.constant dense<0.000000e+00> : vector<8xf32>
    %609 = vector.multi_reduction <add>, %608, %cst_166 [1] : vector<8x128xf32> to vector<8xf32>
    %610 = vector.shape_cast %609 : vector<8xf32> to vector<8x1xf32>
    %611 = vector.broadcast %610 : vector<8x1xf32> to vector<8x128xf32>
    %612 = arith.divf %608, %611 : vector<8x128xf32>
    %c0_167 = arith.constant 0 : index
    %c0_168 = arith.constant 0 : index
    %613 = vector.load %arg12[%c0_167, %c0_168] : memref<8x128xf32, #tpu.memory_space<vmem>>, vector<8x128xf32>
    tpu.vector_store %arg12[%c0_167, %c0_168], %612 {strides = array<i32>} : memref<8x128xf32, #tpu.memory_space<vmem>>, vector<8x128xf32>,
    return
  }
  func.func @transform_0(%arg0: i32) -> (i32, i32) {
    %c0_i32 = arith.constant 0 : i32
    %c0_i32_0 = arith.constant 0 : i32
    %c0_i32_1 = arith.constant 0 : i32
    return %c0_i32, %c0_i32_0 : i32, i32
  }
  func.func @transform_1(%arg0: i32) -> (i32, i32) {
    %c0_i32 = arith.constant 0 : i32
    %c0_i32_0 = arith.constant 0 : i32
    %c0_i32_1 = arith.constant 0 : i32
    return %c0_i32, %c0_i32_0 : i32, i32
  }
  func.func @transform_2(%arg0: i32) -> (i32, i32) {
    %c0_i32 = arith.constant 0 : i32
    %c0_i32_0 = arith.constant 0 : i32
    %c0_i32_1 = arith.constant 0 : i32
    return %c0_i32, %c0_i32_0 : i32, i32
  }
  func.func @transform_3(%arg0: i32) -> (i32, i32) {
    %c0_i32 = arith.constant 0 : i32
    %c0_i32_0 = arith.constant 0 : i32
    %c0_i32_1 = arith.constant 0 : i32
    return %c0_i32, %c0_i32_0 : i32, i32
  }
  func.func @transform_4(%arg0: i32) -> (i32, i32) {
    %c0_i32 = arith.constant 0 : i32
    %c0_i32_0 = arith.constant 0 : i32
    %c0_i32_1 = arith.constant 0 : i32
    return %c0_i32, %c0_i32_0 : i32, i32
  }
  func.func @transform_5(%arg0: i32) -> (i32, i32) {
    %c0_i32 = arith.constant 0 : i32
    %c0_i32_0 = arith.constant 0 : i32
    %c0_i32_1 = arith.constant 0 : i32
    return %c0_i32, %c0_i32_0 : i32, i32
  }
  func.func @transform_6(%arg0: i32) -> (i32, i32) {
    %c0_i32 = arith.constant 0 : i32
    %c0_i32_0 = arith.constant 0 : i32
    %c0_i32_1 = arith.constant 0 : i32
    return %c0_i32, %c0_i32_0 : i32, i32
  }
  func.func @transform_7(%arg0: i32) -> (i32, i32) {
    %c0_i32 = arith.constant 0 : i32
    %c0_i32_0 = arith.constant 0 : i32
    %c0_i32_1 = arith.constant 0 : i32
    return %c0_i32, %c0_i32_0 : i32, i32
  }
  func.func @transform_8(%arg0: i32) -> (i32, i32) {
    %c0_i32 = arith.constant 0 : i32
    %c0_i32_0 = arith.constant 0 : i32
    %c0_i32_1 = arith.constant 0 : i32
    return %c0_i32, %c0_i32_0 : i32, i32
  }
  func.func @transform_9(%arg0: i32) -> (i32, i32, i32) {
    %c0_i32 = arith.constant 0 : i32
    %c0_i32_0 = arith.constant 0 : i32
    %c0_i32_1 = arith.constant 0 : i32
    %c0_i32_2 = arith.constant 0 : i32
    return %c0_i32, %c0_i32_0, %c0_i32_1 : i32, i32, i32
  }
  func.func @transform_10(%arg0: i32) -> (i32, i32) {
    %c0_i32 = arith.constant 0 : i32
    %c0_i32_0 = arith.constant 0 : i32
    %c0_i32_1 = arith.constant 0 : i32
    return %c0_i32, %c0_i32_0 : i32, i32
  }
  func.func @transform_11(%arg0: i32) -> (i32, i32) {
    %c0_i32 = arith.constant 0 : i32
    %c0_i32_0 = arith.constant 0 : i32
    %c0_i32_1 = arith.constant 0 : i32
    return %c0_i32, %c0_i32_0 : i32, i32
  }
}

</mosaic_0001>

<llo_original>
// kernel: gru_forward.1
$region0: #{gru_forward.1}
  #allocation0 [shape = 'u32[]', space=smem, size = 0x4, offset = 0x4, fixed_abs, tag = 'smem constant byte address 0x4 - core index']
  #allocation1 [shape = 'u32[72,128]{1,0:T(1,128)}', space=vmem, size = 0x9000, scoped, tag = 'internal scratch']
  #allocation2 [shape = 'f32[8,2,128]{2,1,0:T(2,128)}', space=vmem, size = 0x2000, scoped, tag = 'scratch operand']
  %s0 = inlined_call_operand.vmem [shape: bf16[16,16], index: 0, kind: input, shape index: {}]
  %s1 = inlined_call_operand.vmem [shape: bf16[16,384], index: 1, kind: input, shape index: {}]
  %s2 = inlined_call_operand.vmem [shape: bf16[128,384], index: 2, kind: input, shape index: {}]
  %s3 = inlined_call_operand.vmem [shape: f32[1,384], index: 3, kind: input, shape index: {}]
  %s4 = inlined_call_operand.vmem [shape: f32[1,128], index: 4, kind: input, shape index: {}]
  %s5 = inlined_call_operand.vmem [shape: bf16[128,384], index: 5, kind: input, shape index: {}]
  %s6 = inlined_call_operand.vmem [shape: bf16[128,384], index: 6, kind: input, shape index: {}]
  %s7 = inlined_call_operand.vmem [shape: f32[1,384], index: 7, kind: input, shape index: {}]
  %s8 = inlined_call_operand.vmem [shape: f32[1,128], index: 8, kind: input, shape index: {}]
  %s9 = inlined_call_operand.vmem [shape: bf16[2,128,128], index: 9, kind: input, shape index: {}]
  %s10 = inlined_call_operand.vmem [shape: f32[1,128], index: 10, kind: input, shape index: {}]
  %s11 = inlined_call_operand.hbm [shape: f32[8,128], index: 11, kind: output, shape index: {}]
  %s12 = sld [smem:[#allocation0]]
  $region54: #{gru_forward.1} parent=0
    _
  %s14 = ssub.s32 1, %s12
  %s15 = scalar_select 0, %s14, %s12
  $region1: #{gru_forward.1} parent=0
    #allocation3 [shape = 'u8[4096]{0}', space=vmem, size = 0x1000, scoped, tag = 'output window, operand 0, single buffered']
    #allocation4 [shape = 's32[1]{0}', space=sflag, size = 0x4, scoped, tag = 'scoped memory for gru_forward.1']
    %16 = vsyncpa [#allocation4], 0
    // Predicated region
    $region2: #{gru_forward.1} parent=1 // pred_check
      _
    $region3: #{gru_forward.1} parent=1 // pred_check_branch
      %18 = sbr.rel (0) target = $region5
    $region4: #{gru_forward.1} parent=1 // pred_region
      _
    $region5: #{gru_forward.1} parent=1 // pred_fallthru
      _
    // Predicated region
    $region6: #{gru_forward.1} parent=1 // pred_check
      _
    $region7: #{gru_forward.1} parent=1 // pred_check_branch
      %20 = sbr.rel (0) target = $region9
    $region8: #{gru_forward.1} parent=1 // pred_region
      _
    $region9: #{gru_forward.1} parent=1 // pred_fallthru
      _
    // Predicated region
    $region10: #{gru_forward.1} parent=1 // pred_check
      _
    $region11: #{gru_forward.1} parent=1 // pred_check_branch
      %22 = sbr.rel (0) target = $region13
    $region12: #{gru_forward.1} parent=1 // pred_region
      _
    $region13: #{gru_forward.1} parent=1 // pred_fallthru
      _
    // Predicated region
    $region14: #{gru_forward.1} parent=1 // pred_check
      _
    $region15: #{gru_forward.1} parent=1 // pred_check_branch
      %24 = sbr.rel (0) target = $region17
    $region16: #{gru_forward.1} parent=1 // pred_region
      _
    $region17: #{gru_forward.1} parent=1 // pred_fallthru
      _
    // Predicated region
    $region18: #{gru_forward.1} parent=1 // pred_check
      _
    $region19: #{gru_forward.1} parent=1 // pred_check_branch
      %26 = sbr.rel (0) target = $region21
    $region20: #{gru_forward.1} parent=1 // pred_region
      _
    $region21: #{gru_forward.1} parent=1 // pred_fallthru
      _
    // Predicated region
    $region22: #{gru_forward.1} parent=1 // pred_check
      _
    $region23: #{gru_forward.1} parent=1 // pred_check_branch
      %28 = sbr.rel (0) target = $region25
    $region24: #{gru_forward.1} parent=1 // pred_region
      _
    $region25: #{gru_forward.1} parent=1 // pred_fallthru
      _
    // Predicated region
    $region26: #{gru_forward.1} parent=1 // pred_check
      _
    $region27: #{gru_forward.1} parent=1 // pred_check_branch
      %30 = sbr.rel (0) target = $region29
    $region28: #{gru_forward.1} parent=1 // pred_region
      _
    $region29: #{gru_forward.1} parent=1 // pred_fallthru
      _
    // Predicated region
    $region30: #{gru_forward.1} parent=1 // pred_check
      _
    $region31: #{gru_forward.1} parent=1 // pred_check_branch
      %32 = sbr.rel (0) target = $region33
    $region32: #{gru_forward.1} parent=1 // pred_region
      _
    $region33: #{gru_forward.1} parent=1 // pred_fallthru
      _
    // Predicated region
    $region34: #{gru_forward.1} parent=1 // pred_check
      _
    $region35: #{gru_forward.1} parent=1 // pred_check_branch
      %34 = sbr.rel (0) target = $region37
    $region36: #{gru_forward.1} parent=1 // pred_region
      _
    $region37: #{gru_forward.1} parent=1 // pred_fallthru
      _
    // Predicated region
    $region38: #{gru_forward.1} parent=1 // pred_check
      _
    $region39: #{gru_forward.1} parent=1 // pred_check_branch
      %36 = sbr.rel (0) target = $region41
    $region40: #{gru_forward.1} parent=1 // pred_region
      _
    $region41: #{gru_forward.1} parent=1 // pred_fallthru
      _
    // Predicated region
    $region42: #{gru_forward.1} parent=1 // pred_check
      _
    $region43: #{gru_forward.1} parent=1 // pred_check_branch
      %38 = sbr.rel (0) target = $region45
    $region44: #{gru_forward.1} parent=1 // pred_region
      _
    $region45: #{gru_forward.1} parent=1 // pred_fallthru
      _
    %v40 = vld [vmem:[%s0] sm:$0xf]
    %v41 = vld [vmem:[%s0 + $0x4] sm:$0xf]
    %v42 = vld [vmem:[%s1] sm:$0xff]
    %v43 = vld [vmem:[%s1 + $0x8] sm:$0xf]
    %v44 = vld [vmem:[%s1 + $0xc] sm:$0xff]
    %v45 = vld [vmem:[%s1 + $0x14] sm:$0xf]
    %v46 = vld [vmem:[%s3] sm:$0x7]
    %v48 = vperm.slane %v46, 0
    %v49 = vperm.slane %v46, 1
    %v50 = vperm.slane %v46, 2
    %v56 = vunpack.c.l.b16 %v40
    %v57 = vunpack.c.l.b16 %v41
    %v58 = vpack.c.b16 %v57, %v56
    %v63 = vunpack.c.l.b16 %v42
    %v64 = vunpack.c.h.b16 %v42
    %v65 = vunpack.c.l.b16 %v43
    %v66 = vunpack.c.l.b16 %v44
    %v67 = vunpack.c.h.b16 %v44
    %v68 = vunpack.c.l.b16 %v45
    %v69 = vpack.c.b16 %v66, %v63
    %v70 = vpack.c.b16 %v67, %v64
    %v71 = vpack.c.b16 %v68, %v65
    %vm75 = vcmask 130048
    %v77 = vsel %vm75, %v58, 0
    %79 = vmatpush.bf16.msra.mxu0 0
    %80 = vmatpush.bf16.msra.mxu0 0
    %81 = vmatpush.bf16.msra.mxu0 0
    %82 = vmatpush.bf16.msra.mxu0 0
    %83 = vmatpush.bf16.msra.mxu0 0
    %84 = vmatpush.bf16.msra.mxu0 0
    %85 = vmatpush.bf16.msra.mxu0 0
    %86 = vmatpush.bf16.msra.mxu0 %v69
    %87 = vmatmul.bf16.gmra.mxu0 %v77
    %v88 = vpop.f32.mrf.mxu0
    %v89 = vadd.f32 %v48, %v88
    %v90 = vpop.f32.mrf.mxu0
    %v91 = vadd.f32 %v48, %v90
    %92 = vdwg.mxu0
    %93 = vmatpush.bf16.msra.mxu0 0
    %94 = vmatpush.bf16.msra.mxu0 0
    %95 = vmatpush.bf16.msra.mxu0 0
    %96 = vmatpush.bf16.msra.mxu0 0
    %97 = vmatpush.bf16.msra.mxu0 0
    %98 = vmatpush.bf16.msra.mxu0 0
    %99 = vmatpush.bf16.msra.mxu0 0
    %100 = vmatpush.bf16.msra.mxu0 %v70
    %101 = vmatmul.bf16.gmra.mxu0 %v77
    %v102 = vpop.f32.mrf.mxu0
    %v103 = vadd.f32 %v49, %v102
    %v104 = vpop.f32.mrf.mxu0
    %v105 = vadd.f32 %v49, %v104
    %106 = vdwg.mxu0
    %107 = vmatpush.bf16.msra.mxu0 0
    %108 = vmatpush.bf16.msra.mxu0 0
    %109 = vmatpush.bf16.msra.mxu0 0
    %110 = vmatpush.bf16.msra.mxu0 0
    %111 = vmatpush.bf16.msra.mxu0 0
    %112 = vmatpush.bf16.msra.mxu0 0
    %113 = vmatpush.bf16.msra.mxu0 0
    %114 = vmatpush.bf16.msra.mxu0 %v71
    %115 = vmatmul.bf16.gmra.mxu0 %v77
    %v116 = vpop.f32.mrf.mxu0
    %v117 = vadd.f32 %v50, %v116
    %v118 = vpop.f32.mrf.mxu0
    %v119 = vadd.f32 %v50, %v118
    %120 = vdwg.mxu0
    %v121 = vld [vmem:[%s7] sm:$0x7]
    %v122 = vld [vmem:[%s4] sm:$0x1]
    %v123 = vld [vmem:[%s8] sm:$0x1]
    %v124 = vld [vmem:[%s2] sm:$0xff]
    %v125 = vld [vmem:[%s2 + $0x8] sm:$0xf]
    %v126 = vld [vmem:[%s2 + $0xc] sm:$0xff]
    %v127 = vld [vmem:[%s2 + $0x14] sm:$0xf]
    %v128 = vld [vmem:[%s2 + $0x18] sm:$0xff]
    %v129 = vld [vmem:[%s2 + $0x20] sm:$0xf]
    %v130 = vld [vmem:[%s2 + $0x24] sm:$0xff]
    %v131 = vld [vmem:[%s2 + $0x2c] sm:$0xf]
    %v132 = vld [vmem:[%s2 + $0x30] sm:$0xff]
    %v133 = vld [vmem:[%s2 + $0x38] sm:$0xf]
    %v134 = vld [vmem:[%s2 + $0x3c] sm:$0xff]
    %v135 = vld [vmem:[%s2 + $0x44] sm:$0xf]
    %v136 = vld [vmem:[%s2 + $0x48] sm:$0xff]
    %v137 = vld [vmem:[%s2 + $0x50] sm:$0xf]
    %v138 = vld [vmem:[%s2 + $0x54] sm:$0xff]
    %v139 = vld [vmem:[%s2 + $0x5c] sm:$0xf]
    %v140 = vld [vmem:[%s2 + $0x60] sm:$0xff]
    %v141 = vld [vmem:[%s2 + $0x68] sm:$0xf]
    %v142 = vld [vmem:[%s2 + $0x6c] sm:$0xff]
    %v143 = vld [vmem:[%s2 + $0x74] sm:$0xf]
    %v144 = vld [vmem:[%s2 + $0x78] sm:$0xff]
    %v145 = vld [vmem:[%s2 + $0x80] sm:$0xf]
    %v146 = vld [vmem:[%s2 + $0x84] sm:$0xff]
    %v147 = vld [vmem:[%s2 + $0x8c] sm:$0xf]
    %v148 = vld [vmem:[%s2 + $0x90] sm:$0xff]
    %v149 = vld [vmem:[%s2 + $0x98] sm:$0xf]
    %v150 = vld [vmem:[%s2 + $0x9c] sm:$0xff]
    %v151 = vld [vmem:[%s2 + $0xa4] sm:$0xf]
    %v152 = vld [vmem:[%s2 + $0xa8] sm:$0xff]
    %v153 = vld [vmem:[%s2 + $0xb0] sm:$0xf]
    %v154 = vld [vmem:[%s2 + $0xb4] sm:$0xff]
    %v155 = vld [vmem:[%s2 + $0xbc] sm:$0xf]
    %v188 = vunpack.c.l.b16 %v124
    %v189 = vunpack.c.h.b16 %v124
    %v190 = vunpack.c.l.b16 %v125
    %v191 = vunpack.c.l.b16 %v126
    %v192 = vunpack.c.h.b16 %v126
    %v193 = vunpack.c.l.b16 %v127
    %v194 = vunpack.c.l.b16 %v128
    %v195 = vunpack.c.h.b16 %v128
    %v196 = vunpack.c.l.b16 %v129
    %v197 = vunpack.c.l.b16 %v130
    %v198 = vunpack.c.h.b16 %v130
    %v199 = vunpack.c.l.b16 %v131
    %v200 = vunpack.c.l.b16 %v132
    %v201 = vunpack.c.h.b16 %v132
    %v202 = vunpack.c.l.b16 %v133
    %v203 = vunpack.c.l.b16 %v134
    %v204 = vunpack.c.h.b16 %v134
    %v205 = vunpack.c.l.b16 %v135
    %v206 = vunpack.c.l.b16 %v136
    %v207 = vunpack.c.h.b16 %v136
    %v208 = vunpack.c.l.b16 %v137
    %v209 = vunpack.c.l.b16 %v138
    %v210 = vunpack.c.h.b16 %v138
    %v211 = vunpack.c.l.b16 %v139
    %v212 = vunpack.c.l.b16 %v140
    %v213 = vunpack.c.h.b16 %v140
    %v214 = vunpack.c.l.b16 %v141
    %v215 = vunpack.c.l.b16 %v142
    %v216 = vunpack.c.h.b16 %v142
    %v217 = vunpack.c.l.b16 %v143
    %v218 = vunpack.c.l.b16 %v144
    %v219 = vunpack.c.h.b16 %v144
    %v220 = vunpack.c.l.b16 %v145
    %v221 = vunpack.c.l.b16 %v146
    %v222 = vunpack.c.h.b16 %v146
    %v223 = vunpack.c.l.b16 %v147
    %v224 = vunpack.c.l.b16 %v148
    %v225 = vunpack.c.h.b16 %v148
    %v226 = vunpack.c.l.b16 %v149
    %v227 = vunpack.c.l.b16 %v150
    %v228 = vunpack.c.h.b16 %v150
    %v229 = vunpack.c.l.b16 %v151
    %v230 = vunpack.c.l.b16 %v152
    %v231 = vunpack.c.h.b16 %v152
    %v232 = vunpack.c.l.b16 %v153
    %v233 = vunpack.c.l.b16 %v154
    %v234 = vunpack.c.h.b16 %v154
    %v235 = vunpack.c.l.b16 %v155
    %v236 = vpack.c.b16 %v191, %v188
    %v237 = vpack.c.b16 %v192, %v189
    %v238 = vpack.c.b16 %v193, %v190
    %v239 = vpack.c.b16 %v197, %v194
    %v240 = vpack.c.b16 %v198, %v195
    %v241 = vpack.c.b16 %v199, %v196
    %v242 = vpack.c.b16 %v203, %v200
    %v243 = vpack.c.b16 %v204, %v201
    %v244 = vpack.c.b16 %v205, %v202
    %v245 = vpack.c.b16 %v209, %v206
    %v246 = vpack.c.b16 %v210, %v207
    %v247 = vpack.c.b16 %v211, %v208
    %v248 = vpack.c.b16 %v215, %v212
    %v249 = vpack.c.b16 %v216, %v213
    %v250 = vpack.c.b16 %v217, %v214
    %v251 = vpack.c.b16 %v221, %v218
    %v252 = vpack.c.b16 %v222, %v219
    %v253 = vpack.c.b16 %v223, %v220
    %v254 = vpack.c.b16 %v227, %v224
    %v255 = vpack.c.b16 %v228, %v225
    %v256 = vpack.c.b16 %v229, %v226
    %v257 = vpack.c.b16 %v233, %v230
    %v258 = vpack.c.b16 %v234, %v231
    %v259 = vpack.c.b16 %v235, %v232
    %284 = vmatpush.bf16.msra.mxu0 %v257
    %285 = vmatpush.bf16.msra.mxu0 %v254
    %286 = vmatpush.bf16.msra.mxu0 %v251
    %287 = vmatpush.bf16.msra.mxu0 %v248
    %288 = vmatpush.bf16.msra.mxu0 %v245
    %289 = vmatpush.bf16.msra.mxu0 %v242
    %290 = vmatpush.bf16.msra.mxu0 %v239
    %291 = vmatpush.bf16.msra.mxu0 %v236
    %292 = vmatmul.bf16.gmra.mxu0 0
    %v293 = vpop.f32.mrf.mxu0
    %v294 = vadd.f32 0.0, %v293
    %v295 = vpop.f32.mrf.mxu0
    %296 = vdwg.mxu0
    %297 = vmatpush.bf16.msra.mxu0 %v258
    %298 = vmatpush.bf16.msra.mxu0 %v255
    %299 = vmatpush.bf16.msra.mxu0 %v252
    %300 = vmatpush.bf16.msra.mxu0 %v249
    %301 = vmatpush.bf16.msra.mxu0 %v246
    %302 = vmatpush.bf16.msra.mxu0 %v243
    %303 = vmatpush.bf16.msra.mxu0 %v240
    %304 = vmatpush.bf16.msra.mxu0 %v237
    %305 = vmatmul.bf16.gmra.mxu0 0
    %v306 = vpop.f32.mrf.mxu0
    %v307 = vadd.f32 0.0, %v306
    %v308 = vpop.f32.mrf.mxu0
    %309 = vdwg.mxu0
    %310 = vmatpush.bf16.msra.mxu0 %v259
    %311 = vmatpush.bf16.msra.mxu0 %v256
    %312 = vmatpush.bf16.msra.mxu0 %v253
    %313 = vmatpush.bf16.msra.mxu0 %v250
    %314 = vmatpush.bf16.msra.mxu0 %v247
    %315 = vmatpush.bf16.msra.mxu0 %v244
    %316 = vmatpush.bf16.msra.mxu0 %v241
    %317 = vmatpush.bf16.msra.mxu0 %v238
    %318 = vmatmul.bf16.gmra.mxu0 0
    %v319 = vpop.f32.mrf.mxu0
    %v320 = vadd.f32 0.0, %v319
    %v321 = vpop.f32.mrf.mxu0
    %322 = vdwg.mxu0
    %v323 = vadd.f32 %v89, %v294
    %v324 = vxor.u32 %v323, 2147483648
    %v325 = vmul.f32 %v324, 1.442695
    %v326 = vpow.pop %v325
    %v327 = vadd.f32 %v326, 1.0
    %v328 = vrcp.pop %v327
    %v329 = vmul.f32 %v327, %v328
    %v330 = vsub.f32 1.0, %v329
    %v331 = vmul.f32 %v328, %v330
    %v332 = vadd.f32 %v328, %v331
    %vm333 = vweird.f32 %v327
    %vm334 = vweird.f32 %v328
    %vm335 = vmor %vm333, %vm334
    %v336 = vsel %vm335, %v328, %v332
    %v337 = vand.u32 2147483647, %v327
    %vm338 = vcmp.eq.f32.partialorder %v337, 8.507059e+37
    %v339 = vand.u32 %v327, 2147483648
    %v340 = vor.u32 1.1754944e-38, %v339
    %v341 = vsel %vm338, %v340, %v336
    %v342 = vmul.f32 1.0, %v341
    %v343 = vadd.f32 %v103, %v307
    %v344 = vxor.u32 %v343, 2147483648
    %v345 = vmul.f32 %v344, 1.442695
    %v346 = vpow.pop %v345
    %v347 = vadd.f32 %v346, 1.0
    %v348 = vrcp.pop %v347
    %v349 = vmul.f32 %v347, %v348
    %v350 = vsub.f32 1.0, %v349
    %v351 = vmul.f32 %v348, %v350
    %v352 = vadd.f32 %v348, %v351
    %vm353 = vweird.f32 %v347
    %vm354 = vweird.f32 %v348
    %vm355 = vmor %vm353, %vm354
    %v356 = vsel %vm355, %v348, %v352
    %v357 = vand.u32 2147483647, %v347
    %vm358 = vcmp.eq.f32.partialorder %v357, 8.507059e+37
    %v359 = vand.u32 %v347, 2147483648
    %v360 = vor.u32 1.1754944e-38, %v359
    %v361 = vsel %vm358, %v360, %v356
    %v362 = vmul.f32 1.0, %v361
    %v364 = vperm.slane %v122, 0
    %v366 = vadd.f32 %v320, %v364
    %v367 = vmul.f32 %v342, %v366
    %v368 = vadd.f32 %v117, %v367
    %v369 = vtanh.pop %v368
    %v370 = vsub.f32 1.0, %v362
    %v371 = vmul.f32 %v370, %v369
    %v372 = vmul.f32 %v362, 0.0
    %v373 = vadd.f32 %v371, %v372
    %v374 = vpack.c.bf16 %v373, %v373
    %v375 = vld [vmem:[%s5] sm:$0xff]
    %v376 = vld [vmem:[%s5 + $0x8] sm:$0xf]
    %v377 = vld [vmem:[%s5 + $0xc] sm:$0xff]
    %v378 = vld [vmem:[%s5 + $0x14] sm:$0xf]
    %v379 = vld [vmem:[%s5 + $0x18] sm:$0xff]
    %v380 = vld [vmem:[%s5 + $0x20] sm:$0xf]
    %v381 = vld [vmem:[%s5 + $0x24] sm:$0xff]
    %v382 = vld [vmem:[%s5 + $0x2c] sm:$0xf]
    %v383 = vld [vmem:[%s5 + $0x30] sm:$0xff]
    %v384 = vld [vmem:[%s5 + $0x38] sm:$0xf]
    %v385 = vld [vmem:[%s5 + $0x3c] sm:$0xff]
    %v386 = vld [vmem:[%s5 + $0x44] sm:$0xf]
    %v387 = vld [vmem:[%s5 + $0x48] sm:$0xff]
    %v388 = vld [vmem:[%s5 + $0x50] sm:$0xf]
    %v389 = vld [vmem:[%s5 + $0x54] sm:$0xff]
    %v390 = vld [vmem:[%s5 + $0x5c] sm:$0xf]
    %v391 = vld [vmem:[%s5 + $0x60] sm:$0xff]
    %v392 = vld [vmem:[%s5 + $0x68] sm:$0xf]
    %v393 = vld [vmem:[%s5 + $0x6c] sm:$0xff]
    %v394 = vld [vmem:[%s5 + $0x74] sm:$0xf]
    %v395 = vld [vmem:[%s5 + $0x78] sm:$0xff]
    %v396 = vld [vmem:[%s5 + $0x80] sm:$0xf]
    %v397 = vld [vmem:[%s5 + $0x84] sm:$0xff]
    %v398 = vld [vmem:[%s5 + $0x8c] sm:$0xf]
    %v399 = vld [vmem:[%s5 + $0x90] sm:$0xff]
    %v400 = vld [vmem:[%s5 + $0x98] sm:$0xf]
    %v401 = vld [vmem:[%s5 + $0x9c] sm:$0xff]
    %v402 = vld [vmem:[%s5 + $0xa4] sm:$0xf]
    %v403 = vld [vmem:[%s5 + $0xa8] sm:$0xff]
    %v404 = vld [vmem:[%s5 + $0xb0] sm:$0xf]
    %v405 = vld [vmem:[%s5 + $0xb4] sm:$0xff]
    %v406 = vld [vmem:[%s5 + $0xbc] sm:$0xf]
    %v408 = vperm.slane %v121, 0
    %v409 = vperm.slane %v121, 1
    %v410 = vperm.slane %v121, 2
    %v446 = vunpack.c.l.b16 %v375
    %v447 = vunpack.c.h.b16 %v375
    %v448 = vunpack.c.l.b16 %v376
    %v449 = vunpack.c.l.b16 %v377
    %v450 = vunpack.c.h.b16 %v377
    %v451 = vunpack.c.l.b16 %v378
    %v452 = vunpack.c.l.b16 %v379
    %v453 = vunpack.c.h.b16 %v379
    %v454 = vunpack.c.l.b16 %v380
    %v455 = vunpack.c.l.b16 %v381
    %v456 = vunpack.c.h.b16 %v381
    %v457 = vunpack.c.l.b16 %v382
    %v458 = vunpack.c.l.b16 %v383
    %v459 = vunpack.c.h.b16 %v383
    %v460 = vunpack.c.l.b16 %v384
    %v461 = vunpack.c.l.b16 %v385
    %v462 = vunpack.c.h.b16 %v385
    %v463 = vunpack.c.l.b16 %v386
    %v464 = vunpack.c.l.b16 %v387
    %v465 = vunpack.c.h.b16 %v387
    %v466 = vunpack.c.l.b16 %v388
    %v467 = vunpack.c.l.b16 %v389
    %v468 = vunpack.c.h.b16 %v389
    %v469 = vunpack.c.l.b16 %v390
    %v470 = vunpack.c.l.b16 %v391
    %v471 = vunpack.c.h.b16 %v391
    %v472 = vunpack.c.l.b16 %v392
    %v473 = vunpack.c.l.b16 %v393
    %v474 = vunpack.c.h.b16 %v393
    %v475 = vunpack.c.l.b16 %v394
    %v476 = vunpack.c.l.b16 %v395
    %v477 = vunpack.c.h.b16 %v395
    %v478 = vunpack.c.l.b16 %v396
    %v479 = vunpack.c.l.b16 %v397
    %v480 = vunpack.c.h.b16 %v397
    %v481 = vunpack.c.l.b16 %v398
    %v482 = vunpack.c.l.b16 %v399
    %v483 = vunpack.c.h.b16 %v399
    %v484 = vunpack.c.l.b16 %v400
    %v485 = vunpack.c.l.b16 %v401
    %v486 = vunpack.c.h.b16 %v401
    %v487 = vunpack.c.l.b16 %v402
    %v488 = vunpack.c.l.b16 %v403
    %v489 = vunpack.c.h.b16 %v403
    %v490 = vunpack.c.l.b16 %v404
    %v491 = vunpack.c.l.b16 %v405
    %v492 = vunpack.c.h.b16 %v405
    %v493 = vunpack.c.l.b16 %v406
    %v494 = vpack.c.b16 %v449, %v446
    %v495 = vpack.c.b16 %v450, %v447
    %v496 = vpack.c.b16 %v451, %v448
    %v497 = vpack.c.b16 %v455, %v452
    %v498 = vpack.c.b16 %v456, %v453
    %v499 = vpack.c.b16 %v457, %v454
    %v500 = vpack.c.b16 %v461, %v458
    %v501 = vpack.c.b16 %v462, %v459
    %v502 = vpack.c.b16 %v463, %v460
    %v503 = vpack.c.b16 %v467, %v464
    %v504 = vpack.c.b16 %v468, %v465
    %v505 = vpack.c.b16 %v469, %v466
    %v506 = vpack.c.b16 %v473, %v470
    %v507 = vpack.c.b16 %v474, %v471
    %v508 = vpack.c.b16 %v475, %v472
    %v509 = vpack.c.b16 %v479, %v476
    %v510 = vpack.c.b16 %v480, %v477
    %v511 = vpack.c.b16 %v481, %v478
    %v512 = vpack.c.b16 %v485, %v482
    %v513 = vpack.c.b16 %v486, %v483
    %v514 = vpack.c.b16 %v487, %v484
    %v515 = vpack.c.b16 %v491, %v488
    %v516 = vpack.c.b16 %v492, %v489
    %v517 = vpack.c.b16 %v493, %v490
    %542 = vmatpush.bf16.msra.mxu0 %v515
    %543 = vmatpush.bf16.msra.mxu0 %v512
    %544 = vmatpush.bf16.msra.mxu0 %v509
    %545 = vmatpush.bf16.msra.mxu0 %v506
    %546 = vmatpush.bf16.msra.mxu0 %v503
    %547 = vmatpush.bf16.msra.mxu0 %v500
    %548 = vmatpush.bf16.msra.mxu0 %v497
    %549 = vmatpush.bf16.msra.mxu0 %v494
    %550 = vmatmul.bf16.gmra.mxu0 %v374
    %v551 = vpop.f32.mrf.mxu0
    %v552 = vadd.f32 %v408, %v551
    %v553 = vpop.f32.mrf.mxu0
    %554 = vdwg.mxu0
    %555 = vmatpush.bf16.msra.mxu0 %v516
    %556 = vmatpush.bf16.msra.mxu0 %v513
    %557 = vmatpush.bf16.msra.mxu0 %v510
    %558 = vmatpush.bf16.msra.mxu0 %v507
    %559 = vmatpush.bf16.msra.mxu0 %v504
    %560 = vmatpush.bf16.msra.mxu0 %v501
    %561 = vmatpush.bf16.msra.mxu0 %v498
    %562 = vmatpush.bf16.msra.mxu0 %v495
    %563 = vmatmul.bf16.gmra.mxu0 %v374
    %v564 = vpop.f32.mrf.mxu0
    %v565 = vadd.f32 %v409, %v564
    %v566 = vpop.f32.mrf.mxu0
    %567 = vdwg.mxu0
    %568 = vmatpush.bf16.msra.mxu0 %v517
    %569 = vmatpush.bf16.msra.mxu0 %v514
    %570 = vmatpush.bf16.msra.mxu0 %v511
    %571 = vmatpush.bf16.msra.mxu0 %v508
    %572 = vmatpush.bf16.msra.mxu0 %v505
    %573 = vmatpush.bf16.msra.mxu0 %v502
    %574 = vmatpush.bf16.msra.mxu0 %v499
    %575 = vmatpush.bf16.msra.mxu0 %v496
    %576 = vmatmul.bf16.gmra.mxu0 %v374
    %v577 = vpop.f32.mrf.mxu0
    %v578 = vadd.f32 %v410, %v577
    %v579 = vpop.f32.mrf.mxu0
    %580 = vdwg.mxu0
    %v581 = vld [vmem:[%s6] sm:$0xff]
    %v582 = vld [vmem:[%s6 + $0x8] sm:$0xf]
    %v583 = vld [vmem:[%s6 + $0xc] sm:$0xff]
    %v584 = vld [vmem:[%s6 + $0x14] sm:$0xf]
    %v585 = vld [vmem:[%s6 + $0x18] sm:$0xff]
    %v586 = vld [vmem:[%s6 + $0x20] sm:$0xf]
    %v587 = vld [vmem:[%s6 + $0x24] sm:$0xff]
    %v588 = vld [vmem:[%s6 + $0x2c] sm:$0xf]
    %v589 = vld [vmem:[%s6 + $0x30] sm:$0xff]
    %v590 = vld [vmem:[%s6 + $0x38] sm:$0xf]
    %v591 = vld [vmem:[%s6 + $0x3c] sm:$0xff]
    %v592 = vld [vmem:[%s6 + $0x44] sm:$0xf]
    %v593 = vld [vmem:[%s6 + $0x48] sm:$0xff]
    %v594 = vld [vmem:[%s6 + $0x50] sm:$0xf]
    %v595 = vld [vmem:[%s6 + $0x54] sm:$0xff]
    %v596 = vld [vmem:[%s6 + $0x5c] sm:$0xf]
    %v597 = vld [vmem:[%s6 + $0x60] sm:$0xff]
    %v598 = vld [vmem:[%s6 + $0x68] sm:$0xf]
    %v599 = vld [vmem:[%s6 + $0x6c] sm:$0xff]
    %v600 = vld [vmem:[%s6 + $0x74] sm:$0xf]
    %v601 = vld [vmem:[%s6 + $0x78] sm:$0xff]
    %v602 = vld [vmem:[%s6 + $0x80] sm:$0xf]
    %v603 = vld [vmem:[%s6 + $0x84] sm:$0xff]
    %v604 = vld [vmem:[%s6 + $0x8c] sm:$0xf]
    %v605 = vld [vmem:[%s6 + $0x90] sm:$0xff]
    %v606 = vld [vmem:[%s6 + $0x98] sm:$0xf]
    %v607 = vld [vmem:[%s6 + $0x9c] sm:$0xff]
    %v608 = vld [vmem:[%s6 + $0xa4] sm:$0xf]
    %v609 = vld [vmem:[%s6 + $0xa8] sm:$0xff]
    %v610 = vld [vmem:[%s6 + $0xb0] sm:$0xf]
    %v611 = vld [vmem:[%s6 + $0xb4] sm:$0xff]
    %v612 = vld [vmem:[%s6 + $0xbc] sm:$0xf]
    %v645 = vunpack.c.l.b16 %v581
    %v646 = vunpack.c.h.b16 %v581
    %v647 = vunpack.c.l.b16 %v582
    %v648 = vunpack.c.l.b16 %v583
    %v649 = vunpack.c.h.b16 %v583
    %v650 = vunpack.c.l.b16 %v584
    %v651 = vunpack.c.l.b16 %v585
    %v652 = vunpack.c.h.b16 %v585
    %v653 = vunpack.c.l.b16 %v586
    %v654 = vunpack.c.l.b16 %v587
    %v655 = vunpack.c.h.b16 %v587
    %v656 = vunpack.c.l.b16 %v588
    %v657 = vunpack.c.l.b16 %v589
    %v658 = vunpack.c.h.b16 %v589
    %v659 = vunpack.c.l.b16 %v590
    %v660 = vunpack.c.l.b16 %v591
    %v661 = vunpack.c.h.b16 %v591
    %v662 = vunpack.c.l.b16 %v592
    %v663 = vunpack.c.l.b16 %v593
    %v664 = vunpack.c.h.b16 %v593
    %v665 = vunpack.c.l.b16 %v594
    %v666 = vunpack.c.l.b16 %v595
    %v667 = vunpack.c.h.b16 %v595
    %v668 = vunpack.c.l.b16 %v596
    %v669 = vunpack.c.l.b16 %v597
    %v670 = vunpack.c.h.b16 %v597
    %v671 = vunpack.c.l.b16 %v598
    %v672 = vunpack.c.l.b16 %v599
    %v673 = vunpack.c.h.b16 %v599
    %v674 = vunpack.c.l.b16 %v600
    %v675 = vunpack.c.l.b16 %v601
    %v676 = vunpack.c.h.b16 %v601
    %v677 = vunpack.c.l.b16 %v602
    %v678 = vunpack.c.l.b16 %v603
    %v679 = vunpack.c.h.b16 %v603
    %v680 = vunpack.c.l.b16 %v604
    %v681 = vunpack.c.l.b16 %v605
    %v682 = vunpack.c.h.b16 %v605
    %v683 = vunpack.c.l.b16 %v606
    %v684 = vunpack.c.l.b16 %v607
    %v685 = vunpack.c.h.b16 %v607
    %v686 = vunpack.c.l.b16 %v608
    %v687 = vunpack.c.l.b16 %v609
    %v688 = vunpack.c.h.b16 %v609
    %v689 = vunpack.c.l.b16 %v610
    %v690 = vunpack.c.l.b16 %v611
    %v691 = vunpack.c.h.b16 %v611
    %v692 = vunpack.c.l.b16 %v612
    %v693 = vpack.c.b16 %v648, %v645
    %v694 = vpack.c.b16 %v649, %v646
    %v695 = vpack.c.b16 %v650, %v647
    %v696 = vpack.c.b16 %v654, %v651
    %v697 = vpack.c.b16 %v655, %v652
    %v698 = vpack.c.b16 %v656, %v653
    %v699 = vpack.c.b16 %v660, %v657
    %v700 = vpack.c.b16 %v661, %v658
    %v701 = vpack.c.b16 %v662, %v659
    %v702 = vpack.c.b16 %v666, %v663
    %v703 = vpack.c.b16 %v667, %v664
    %v704 = vpack.c.b16 %v668, %v665
    %v705 = vpack.c.b16 %v672, %v669
    %v706 = vpack.c.b16 %v673, %v670
    %v707 = vpack.c.b16 %v674, %v671
    %v708 = vpack.c.b16 %v678, %v675
    %v709 = vpack.c.b16 %v679, %v676
    %v710 = vpack.c.b16 %v680, %v677
    %v711 = vpack.c.b16 %v684, %v681
    %v712 = vpack.c.b16 %v685, %v682
    %v713 = vpack.c.b16 %v686, %v683
    %v714 = vpack.c.b16 %v690, %v687
    %v715 = vpack.c.b16 %v691, %v688
    %v716 = vpack.c.b16 %v692, %v689
    %741 = vmatpush.bf16.msra.mxu0 %v714
    %742 = vmatpush.bf16.msra.mxu0 %v711
    %743 = vmatpush.bf16.msra.mxu0 %v708
    %744 = vmatpush.bf16.msra.mxu0 %v705
    %745 = vmatpush.bf16.msra.mxu0 %v702
    %746 = vmatpush.bf16.msra.mxu0 %v699
    %747 = vmatpush.bf16.msra.mxu0 %v696
    %748 = vmatpush.bf16.msra.mxu0 %v693
    %749 = vmatmul.bf16.gmra.mxu0 0
    %v750 = vpop.f32.mrf.mxu0
    %v751 = vadd.f32 0.0, %v750
    %v752 = vpop.f32.mrf.mxu0
    %753 = vdwg.mxu0
    %754 = vmatpush.bf16.msra.mxu0 %v715
    %755 = vmatpush.bf16.msra.mxu0 %v712
    %756 = vmatpush.bf16.msra.mxu0 %v709
    %757 = vmatpush.bf16.msra.mxu0 %v706
    %758 = vmatpush.bf16.msra.mxu0 %v703
    %759 = vmatpush.bf16.msra.mxu0 %v700
    %760 = vmatpush.bf16.msra.mxu0 %v697
    %761 = vmatpush.bf16.msra.mxu0 %v694
    %762 = vmatmul.bf16.gmra.mxu0 0
    %v763 = vpop.f32.mrf.mxu0
    %v764 = vadd.f32 0.0, %v763
    %v765 = vpop.f32.mrf.mxu0
    %766 = vdwg.mxu0
    %767 = vmatpush.bf16.msra.mxu0 %v716
    %768 = vmatpush.bf16.msra.mxu0 %v713
    %769 = vmatpush.bf16.msra.mxu0 %v710
    %770 = vmatpush.bf16.msra.mxu0 %v707
    %771 = vmatpush.bf16.msra.mxu0 %v704
    %772 = vmatpush.bf16.msra.mxu0 %v701
    %773 = vmatpush.bf16.msra.mxu0 %v698
    %774 = vmatpush.bf16.msra.mxu0 %v695
    %775 = vmatmul.bf16.gmra.mxu0 0
    %v776 = vpop.f32.mrf.mxu0
    %v777 = vadd.f32 0.0, %v776
    %v778 = vpop.f32.mrf.mxu0
    %779 = vdwg.mxu0
    %v780 = vadd.f32 %v552, %v751
    %v781 = vxor.u32 %v780, 2147483648
    %v782 = vmul.f32 %v781, 1.442695
    %v783 = vpow.pop %v782
    %v784 = vadd.f32 %v783, 1.0
    %v785 = vrcp.pop %v784
    %v786 = vmul.f32 %v784, %v785
    %v787 = vsub.f32 1.0, %v786
    %v788 = vmul.f32 %v785, %v787
    %v789 = vadd.f32 %v785, %v788
    %vm790 = vweird.f32 %v784
    %vm791 = vweird.f32 %v785
    %vm792 = vmor %vm790, %vm791
    %v793 = vsel %vm792, %v785, %v789
    %v794 = vand.u32 2147483647, %v784
    %vm795 = vcmp.eq.f32.partialorder %v794, 8.507059e+37
    %v796 = vand.u32 %v784, 2147483648
    %v797 = vor.u32 1.1754944e-38, %v796
    %v798 = vsel %vm795, %v797, %v793
    %v799 = vmul.f32 1.0, %v798
    %v800 = vadd.f32 %v565, %v764
    %v801 = vxor.u32 %v800, 2147483648
    %v802 = vmul.f32 %v801, 1.442695
    %v803 = vpow.pop %v802
    %v804 = vadd.f32 %v803, 1.0
    %v805 = vrcp.pop %v804
    %v806 = vmul.f32 %v804, %v805
    %v807 = vsub.f32 1.0, %v806
    %v808 = vmul.f32 %v805, %v807
    %v809 = vadd.f32 %v805, %v808
    %vm810 = vweird.f32 %v804
    %vm811 = vweird.f32 %v805
    %vm812 = vmor %vm810, %vm811
    %v813 = vsel %vm812, %v805, %v809
    %v814 = vand.u32 2147483647, %v804
    %vm815 = vcmp.eq.f32.partialorder %v814, 8.507059e+37
    %v816 = vand.u32 %v804, 2147483648
    %v817 = vor.u32 1.1754944e-38, %v816
    %v818 = vsel %vm815, %v817, %v813
    %v819 = vmul.f32 1.0, %v818
    %v821 = vperm.slane %v123, 0
    %v823 = vadd.f32 %v777, %v821
    %v824 = vmul.f32 %v799, %v823
    %v825 = vadd.f32 %v578, %v824
    %v826 = vtanh.pop %v825
    %v827 = vsub.f32 1.0, %v819
    %v828 = vmul.f32 %v827, %v826
    %v829 = vmul.f32 %v819, 0.0
    %v830 = vadd.f32 %v828, %v829
    %831 = vst [vmem:[#allocation2] sm:$0x3] %v830
    %v832 = vld [vmem:[%s2] sm:$0xff]
    %v833 = vld [vmem:[%s2 + $0x8] sm:$0xf]
    %v834 = vld [vmem:[%s2 + $0xc] sm:$0xff]
    %v835 = vld [vmem:[%s2 + $0x14] sm:$0xf]
    %v836 = vld [vmem:[%s2 + $0x18] sm:$0xff]
    %v837 = vld [vmem:[%s2 + $0x20] sm:$0xf]
    %v838 = vld [vmem:[%s2 + $0x24] sm:$0xff]
    %v839 = vld [vmem:[%s2 + $0x2c] sm:$0xf]
    %v840 = vld [vmem:[%s2 + $0x30] sm:$0xff]
    %v841 = vld [vmem:[%s2 + $0x38] sm:$0xf]
    %v842 = vld [vmem:[%s2 + $0x3c] sm:$0xff]
    %v843 = vld [vmem:[%s2 + $0x44] sm:$0xf]
    %v844 = vld [vmem:[%s2 + $0x48] sm:$0xff]
    %v845 = vld [vmem:[%s2 + $0x50] sm:$0xf]
    %v846 = vld [vmem:[%s2 + $0x54] sm:$0xff]
    %v847 = vld [vmem:[%s2 + $0x5c] sm:$0xf]
    %v848 = vld [vmem:[%s2 + $0x60] sm:$0xff]
    %v849 = vld [vmem:[%s2 + $0x68] sm:$0xf]
    %v850 = vld [vmem:[%s2 + $0x6c] sm:$0xff]
    %v851 = vld [vmem:[%s2 + $0x74] sm:$0xf]
    %v852 = vld [vmem:[%s2 + $0x78] sm:$0xff]
    %v853 = vld [vmem:[%s2 + $0x80] sm:$0xf]
    %v854 = vld [vmem:[%s2 + $0x84] sm:$0xff]
    %v855 = vld [vmem:[%s2 + $0x8c] sm:$0xf]
    %v856 = vld [vmem:[%s2 + $0x90] sm:$0xff]
    %v857 = vld [vmem:[%s2 + $0x98] sm:$0xf]
    %v858 = vld [vmem:[%s2 + $0x9c] sm:$0xff]
    %v859 = vld [vmem:[%s2 + $0xa4] sm:$0xf]
    %v860 = vld [vmem:[%s2 + $0xa8] sm:$0xff]
    %v861 = vld [vmem:[%s2 + $0xb0] sm:$0xf]
    %v862 = vld [vmem:[%s2 + $0xb4] sm:$0xff]
    %v863 = vld [vmem:[%s2 + $0xbc] sm:$0xf]
    %v896 = vunpack.c.l.b16 %v832
    %v897 = vunpack.c.h.b16 %v832
    %v898 = vunpack.c.l.b16 %v833
    %v899 = vunpack.c.l.b16 %v834
    %v900 = vunpack.c.h.b16 %v834
    %v901 = vunpack.c.l.b16 %v835
    %v902 = vunpack.c.l.b16 %v836
    %v903 = vunpack.c.h.b16 %v836
    %v904 = vunpack.c.l.b16 %v837
    %v905 = vunpack.c.l.b16 %v838
    %v906 = vunpack.c.h.b16 %v838
    %v907 = vunpack.c.l.b16 %v839
    %v908 = vunpack.c.l.b16 %v840
    %v909 = vunpack.c.h.b16 %v840
    %v910 = vunpack.c.l.b16 %v841
    %v911 = vunpack.c.l.b16 %v842
    %v912 = vunpack.c.h.b16 %v842
    %v913 = vunpack.c.l.b16 %v843
    %v914 = vunpack.c.l.b16 %v844
    %v915 = vunpack.c.h.b16 %v844
    %v916 = vunpack.c.l.b16 %v845
    %v917 = vunpack.c.l.b16 %v846
    %v918 = vunpack.c.h.b16 %v846
    %v919 = vunpack.c.l.b16 %v847
    %v920 = vunpack.c.l.b16 %v848
    %v921 = vunpack.c.h.b16 %v848
    %v922 = vunpack.c.l.b16 %v849
    %v923 = vunpack.c.l.b16 %v850
    %v924 = vunpack.c.h.b16 %v850
    %v925 = vunpack.c.l.b16 %v851
    %v926 = vunpack.c.l.b16 %v852
    %v927 = vunpack.c.h.b16 %v852
    %v928 = vunpack.c.l.b16 %v853
    %v929 = vunpack.c.l.b16 %v854
    %v930 = vunpack.c.h.b16 %v854
    %v931 = vunpack.c.l.b16 %v855
    %v932 = vunpack.c.l.b16 %v856
    %v933 = vunpack.c.h.b16 %v856
    %v934 = vunpack.c.l.b16 %v857
    %v935 = vunpack.c.l.b16 %v858
    %v936 = vunpack.c.h.b16 %v858
    %v937 = vunpack.c.l.b16 %v859
    %v938 = vunpack.c.l.b16 %v860
    %v939 = vunpack.c.h.b16 %v860
    %v940 = vunpack.c.l.b16 %v861
    %v941 = vunpack.c.l.b16 %v862
    %v942 = vunpack.c.h.b16 %v862
    %v943 = vunpack.c.l.b16 %v863
    %v944 = vpack.c.b16 %v899, %v896
    %v945 = vpack.c.b16 %v900, %v897
    %v946 = vpack.c.b16 %v901, %v898
    %v947 = vpack.c.b16 %v905, %v902
    %v948 = vpack.c.b16 %v906, %v903
    %v949 = vpack.c.b16 %v907, %v904
    %v950 = vpack.c.b16 %v911, %v908
    %v951 = vpack.c.b16 %v912, %v909
    %v952 = vpack.c.b16 %v913, %v910
    %v953 = vpack.c.b16 %v917, %v914
    %v954 = vpack.c.b16 %v918, %v915
    %v955 = vpack.c.b16 %v919, %v916
    %v956 = vpack.c.b16 %v923, %v920
    %v957 = vpack.c.b16 %v924, %v921
    %v958 = vpack.c.b16 %v925, %v922
    %v959 = vpack.c.b16 %v929, %v926
    %v960 = vpack.c.b16 %v930, %v927
    %v961 = vpack.c.b16 %v931, %v928
    %v962 = vpack.c.b16 %v935, %v932
    %v963 = vpack.c.b16 %v936, %v933
    %v964 = vpack.c.b16 %v937, %v934
    %v965 = vpack.c.b16 %v941, %v938
    %v966 = vpack.c.b16 %v942, %v939
    %v967 = vpack.c.b16 %v943, %v940
    %992 = vmatpush.bf16.msra.mxu0 %v965
    %993 = vmatpush.bf16.msra.mxu0 %v962
    %994 = vmatpush.bf16.msra.mxu0 %v959
    %995 = vmatpush.bf16.msra.mxu0 %v956
    %996 = vmatpush.bf16.msra.mxu0 %v953
    %997 = vmatpush.bf16.msra.mxu0 %v950
    %998 = vmatpush.bf16.msra.mxu0 %v947
    %999 = vmatpush.bf16.msra.mxu0 %v944
    %1000 = vmatmul.bf16.gmra.mxu0 %v374
    %v1001 = vpop.f32.mrf.mxu0
    %v1002 = vadd.f32 0.0, %v1001
    %v1003 = vpop.f32.mrf.mxu0
    %1004 = vdwg.mxu0
    %1005 = vmatpush.bf16.msra.mxu0 %v966
    %1006 = vmatpush.bf16.msra.mxu0 %v963
    %1007 = vmatpush.bf16.msra.mxu0 %v960
    %1008 = vmatpush.bf16.msra.mxu0 %v957
    %1009 = vmatpush.bf16.msra.mxu0 %v954
    %1010 = vmatpush.bf16.msra.mxu0 %v951
    %1011 = vmatpush.bf16.msra.mxu0 %v948
    %1012 = vmatpush.bf16.msra.mxu0 %v945
    %1013 = vmatmul.bf16.gmra.mxu0 %v374
    %v1014 = vpop.f32.mrf.mxu0
    %v1015 = vadd.f32 0.0, %v1014
    %v1016 = vpop.f32.mrf.mxu0
    %1017 = vdwg.mxu0
    %1018 = vmatpush.bf16.msra.mxu0 %v967
    %1019 = vmatpush.bf16.msra.mxu0 %v964
    %1020 = vmatpush.bf16.msra.mxu0 %v961
    %1021 = vmatpush.bf16.msra.mxu0 %v958
    %1022 = vmatpush.bf16.msra.mxu0 %v955
    %1023 = vmatpush.bf16.msra.mxu0 %v952
    %1024 = vmatpush.bf16.msra.mxu0 %v949
    %1025 = vmatpush.bf16.msra.mxu0 %v946
    %1026 = vmatmul.bf16.gmra.mxu0 %v374
    %v1027 = vpop.f32.mrf.mxu0
    %v1028 = vadd.f32 0.0, %v1027
    %v1029 = vpop.f32.mrf.mxu0
    %1030 = vdwg.mxu0
    %v1032 = vrot.slane %v1002, 6
    %v1034 = vadd.f32 %v89, %v1032
    %v1035 = vxor.u32 %v1034, 2147483648
    %v1036 = vmul.f32 %v1035, 1.442695
    %v1037 = vpow.pop %v1036
    %v1038 = vadd.f32 %v1037, 1.0
    %v1039 = vrcp.pop %v1038
    %v1040 = vmul.f32 %v1038, %v1039
    %v1041 = vsub.f32 1.0, %v1040
    %v1042 = vmul.f32 %v1039, %v1041
    %v1043 = vadd.f32 %v1039, %v1042
    %vm1044 = vweird.f32 %v1038
    %vm1045 = vweird.f32 %v1039
    %vm1046 = vmor %vm1044, %vm1045
    %v1047 = vsel %vm1046, %v1039, %v1043
    %v1048 = vand.u32 2147483647, %v1038
    %vm1049 = vcmp.eq.f32.partialorder %v1048, 8.507059e+37
    %v1050 = vand.u32 %v1038, 2147483648
    %v1051 = vor.u32 1.1754944e-38, %v1050
    %v1052 = vsel %vm1049, %v1051, %v1047
    %v1053 = vmul.f32 1.0, %v1052
    %v1055 = vrot.slane %v1015, 6
    %v1057 = vadd.f32 %v103, %v1055
    %v1058 = vxor.u32 %v1057, 2147483648
    %v1059 = vmul.f32 %v1058, 1.442695
    %v1060 = vpow.pop %v1059
    %v1061 = vadd.f32 %v1060, 1.0
    %v1062 = vrcp.pop %v1061
    %v1063 = vmul.f32 %v1061, %v1062
    %v1064 = vsub.f32 1.0, %v1063
    %v1065 = vmul.f32 %v1062, %v1064
    %v1066 = vadd.f32 %v1062, %v1065
    %vm1067 = vweird.f32 %v1061
    %vm1068 = vweird.f32 %v1062
    %vm1069 = vmor %vm1067, %vm1068
    %v1070 = vsel %vm1069, %v1062, %v1066
    %v1071 = vand.u32 2147483647, %v1061
    %vm1072 = vcmp.eq.f32.partialorder %v1071, 8.507059e+37
    %v1073 = vand.u32 %v1061, 2147483648
    %v1074 = vor.u32 1.1754944e-38, %v1073
    %v1075 = vsel %vm1072, %v1074, %v1070
    %v1076 = vmul.f32 1.0, %v1075
    %v1077 = vadd.f32 %v1028, %v364
    %v1079 = vrot.slane %v1077, 6
    %v1081 = vmul.f32 %v1053, %v1079
    %v1082 = vadd.f32 %v117, %v1081
    %v1083 = vtanh.pop %v1082
    %v1084 = vsub.f32 1.0, %v1076
    %v1085 = vmul.f32 %v1084, %v1083
    %v1087 = vrot.slane %v373, 6
    %v1089 = vmul.f32 %v1076, %v1087
    %v1090 = vadd.f32 %v1085, %v1089
    %v1091 = vpack.c.bf16 %v1090, %v1090
    %v1092 = vld [vmem:[%s5] sm:$0xff]
    %v1093 = vld [vmem:[%s5 + $0x8] sm:$0xf]
    %v1094 = vld [vmem:[%s5 + $0xc] sm:$0xff]
    %v1095 = vld [vmem:[%s5 + $0x14] sm:$0xf]
    %v1096 = vld [vmem:[%s5 + $0x18] sm:$0xff]
    %v1097 = vld [vmem:[%s5 + $0x20] sm:$0xf]
    %v1098 = vld [vmem:[%s5 + $0x24] sm:$0xff]
    %v1099 = vld [vmem:[%s5 + $0x2c] sm:$0xf]
    %v1100 = vld [vmem:[%s5 + $0x30] sm:$0xff]
    %v1101 = vld [vmem:[%s5 + $0x38] sm:$0xf]
    %v1102 = vld [vmem:[%s5 + $0x3c] sm:$0xff]
    %v1103 = vld [vmem:[%s5 + $0x44] sm:$0xf]
    %v1104 = vld [vmem:[%s5 + $0x48] sm:$0xff]
    %v1105 = vld [vmem:[%s5 + $0x50] sm:$0xf]
    %v1106 = vld [vmem:[%s5 + $0x54] sm:$0xff]
    %v1107 = vld [vmem:[%s5 + $0x5c] sm:$0xf]
    %v1108 = vld [vmem:[%s5 + $0x60] sm:$0xff]
    %v1109 = vld [vmem:[%s5 + $0x68] sm:$0xf]
    %v1110 = vld [vmem:[%s5 + $0x6c] sm:$0xff]
    %v1111 = vld [vmem:[%s5 + $0x74] sm:$0xf]
    %v1112 = vld [vmem:[%s5 + $0x78] sm:$0xff]
    %v1113 = vld [vmem:[%s5 + $0x80] sm:$0xf]
    %v1114 = vld [vmem:[%s5 + $0x84] sm:$0xff]
    %v1115 = vld [vmem:[%s5 + $0x8c] sm:$0xf]
    %v1116 = vld [vmem:[%s5 + $0x90] sm:$0xff]
    %v1117 = vld [vmem:[%s5 + $0x98] sm:$0xf]
    %v1118 = vld [vmem:[%s5 + $0x9c] sm:$0xff]
    %v1119 = vld [vmem:[%s5 + $0xa4] sm:$0xf]
    %v1120 = vld [vmem:[%s5 + $0xa8] sm:$0xff]
    %v1121 = vld [vmem:[%s5 + $0xb0] sm:$0xf]
    %v1122 = vld [vmem:[%s5 + $0xb4] sm:$0xff]
    %v1123 = vld [vmem:[%s5 + $0xbc] sm:$0xf]
    %v1125 = vrot.slane %v1091, 1
    %v1159 = vunpack.c.l.b16 %v1092
    %v1160 = vunpack.c.h.b16 %v1092
    %v1161 = vunpack.c.l.b16 %v1093
    %v1162 = vunpack.c.l.b16 %v1094
    %v1163 = vunpack.c.h.b16 %v1094
    %v1164 = vunpack.c.l.b16 %v1095
    %v1165 = vunpack.c.l.b16 %v1096
    %v1166 = vunpack.c.h.b16 %v1096
    %v1167 = vunpack.c.l.b16 %v1097
    %v1168 = vunpack.c.l.b16 %v1098
    %v1169 = vunpack.c.h.b16 %v1098
    %v1170 = vunpack.c.l.b16 %v1099
    %v1171 = vunpack.c.l.b16 %v1100
    %v1172 = vunpack.c.h.b16 %v1100
    %v1173 = vunpack.c.l.b16 %v1101
    %v1174 = vunpack.c.l.b16 %v1102
    %v1175 = vunpack.c.h.b16 %v1102
    %v1176 = vunpack.c.l.b16 %v1103
    %v1177 = vunpack.c.l.b16 %v1104
    %v1178 = vunpack.c.h.b16 %v1104
    %v1179 = vunpack.c.l.b16 %v1105
    %v1180 = vunpack.c.l.b16 %v1106
    %v1181 = vunpack.c.h.b16 %v1106
    %v1182 = vunpack.c.l.b16 %v1107
    %v1183 = vunpack.c.l.b16 %v1108
    %v1184 = vunpack.c.h.b16 %v1108
    %v1185 = vunpack.c.l.b16 %v1109
    %v1186 = vunpack.c.l.b16 %v1110
    %v1187 = vunpack.c.h.b16 %v1110
    %v1188 = vunpack.c.l.b16 %v1111
    %v1189 = vunpack.c.l.b16 %v1112
    %v1190 = vunpack.c.h.b16 %v1112
    %v1191 = vunpack.c.l.b16 %v1113
    %v1192 = vunpack.c.l.b16 %v1114
    %v1193 = vunpack.c.h.b16 %v1114
    %v1194 = vunpack.c.l.b16 %v1115
    %v1195 = vunpack.c.l.b16 %v1116
    %v1196 = vunpack.c.h.b16 %v1116
    %v1197 = vunpack.c.l.b16 %v1117
    %v1198 = vunpack.c.l.b16 %v1118
    %v1199 = vunpack.c.h.b16 %v1118
    %v1200 = vunpack.c.l.b16 %v1119
    %v1201 = vunpack.c.l.b16 %v1120
    %v1202 = vunpack.c.h.b16 %v1120
    %v1203 = vunpack.c.l.b16 %v1121
    %v1204 = vunpack.c.l.b16 %v1122
    %v1205 = vunpack.c.h.b16 %v1122
    %v1206 = vunpack.c.l.b16 %v1123
    %v1207 = vpack.c.b16 %v1162, %v1159
    %v1208 = vpack.c.b16 %v1163, %v1160
    %v1209 = vpack.c.b16 %v1164, %v1161
    %v1210 = vpack.c.b16 %v1168, %v1165
    %v1211 = vpack.c.b16 %v1169, %v1166
    %v1212 = vpack.c.b16 %v1170, %v1167
    %v1213 = vpack.c.b16 %v1174, %v1171
    %v1214 = vpack.c.b16 %v1175, %v1172
    %v1215 = vpack.c.b16 %v1176, %v1173
    %v1216 = vpack.c.b16 %v1180, %v1177
    %v1217 = vpack.c.b16 %v1181, %v1178
    %v1218 = vpack.c.b16 %v1182, %v1179
    %v1219 = vpack.c.b16 %v1186, %v1183
    %v1220 = vpack.c.b16 %v1187, %v1184
    %v1221 = vpack.c.b16 %v1188, %v1185
    %v1222 = vpack.c.b16 %v1192, %v1189
    %v1223 = vpack.c.b16 %v1193, %v1190
    %v1224 = vpack.c.b16 %v1194, %v1191
    %v1225 = vpack.c.b16 %v1198, %v1195
    %v1226 = vpack.c.b16 %v1199, %v1196
    %v1227 = vpack.c.b16 %v1200, %v1197
    %v1228 = vpack.c.b16 %v1204, %v1201
    %v1229 = vpack.c.b16 %v1205, %v1202
    %v1230 = vpack.c.b16 %v1206, %v1203
    %1255 = vmatpush.bf16.msra.mxu0 %v1228
    %1256 = vmatpush.bf16.msra.mxu0 %v1225
    %1257 = vmatpush.bf16.msra.mxu0 %v1222
    %1258 = vmatpush.bf16.msra.mxu0 %v1219
    %1259 = vmatpush.bf16.msra.mxu0 %v1216
    %1260 = vmatpush.bf16.msra.mxu0 %v1213
    %1261 = vmatpush.bf16.msra.mxu0 %v1210
    %1262 = vmatpush.bf16.msra.mxu0 %v1207
    %1263 = vmatmul.bf16.gmra.mxu0 %v1125
    %v1264 = vpop.f32.mrf.mxu0
    %v1265 = vadd.f32 %v408, %v1264
    %v1266 = vpop.f32.mrf.mxu0
    %1267 = vdwg.mxu0
    %1268 = vmatpush.bf16.msra.mxu0 %v1229
    %1269 = vmatpush.bf16.msra.mxu0 %v1226
    %1270 = vmatpush.bf16.msra.mxu0 %v1223
    %1271 = vmatpush.bf16.msra.mxu0 %v1220
    %1272 = vmatpush.bf16.msra.mxu0 %v1217
    %1273 = vmatpush.bf16.msra.mxu0 %v1214
    %1274 = vmatpush.bf16.msra.mxu0 %v1211
    %1275 = vmatpush.bf16.msra.mxu0 %v1208
    %1276 = vmatmul.bf16.gmra.mxu0 %v1125
    %v1277 = vpop.f32.mrf.mxu0
    %v1278 = vadd.f32 %v409, %v1277
    %v1279 = vpop.f32.mrf.mxu0
    %1280 = vdwg.mxu0
    %1281 = vmatpush.bf16.msra.mxu0 %v1230
    %1282 = vmatpush.bf16.msra.mxu0 %v1227
    %1283 = vmatpush.bf16.msra.mxu0 %v1224
    %1284 = vmatpush.bf16.msra.mxu0 %v1221
    %1285 = vmatpush.bf16.msra.mxu0 %v1218
    %1286 = vmatpush.bf16.msra.mxu0 %v1215
    %1287 = vmatpush.bf16.msra.mxu0 %v1212
    %1288 = vmatpush.bf16.msra.mxu0 %v1209
    %1289 = vmatmul.bf16.gmra.mxu0 %v1125
    %v1290 = vpop.f32.mrf.mxu0
    %v1291 = vadd.f32 %v410, %v1290
    %v1292 = vpop.f32.mrf.mxu0
    %1293 = vdwg.mxu0
    %v1294 = vpack.c.bf16 %v830, %v830
    %v1295 = vld [vmem:[%s6] sm:$0xff]
    %v1296 = vld [vmem:[%s6 + $0x8] sm:$0xf]
    %v1297 = vld [vmem:[%s6 + $0xc] sm:$0xff]
    %v1298 = vld [vmem:[%s6 + $0x14] sm:$0xf]
    %v1299 = vld [vmem:[%s6 + $0x18] sm:$0xff]
    %v1300 = vld [vmem:[%s6 + $0x20] sm:$0xf]
    %v1301 = vld [vmem:[%s6 + $0x24] sm:$0xff]
    %v1302 = vld [vmem:[%s6 + $0x2c] sm:$0xf]
    %v1303 = vld [vmem:[%s6 + $0x30] sm:$0xff]
    %v1304 = vld [vmem:[%s6 + $0x38] sm:$0xf]
    %v1305 = vld [vmem:[%s6 + $0x3c] sm:$0xff]
    %v1306 = vld [vmem:[%s6 + $0x44] sm:$0xf]
    %v1307 = vld [vmem:[%s6 + $0x48] sm:$0xff]
    %v1308 = vld [vmem:[%s6 + $0x50] sm:$0xf]
    %v1309 = vld [vmem:[%s6 + $0x54] sm:$0xff]
    %v1310 = vld [vmem:[%s6 + $0x5c] sm:$0xf]
    %v1311 = vld [vmem:[%s6 + $0x60] sm:$0xff]
    %v1312 = vld [vmem:[%s6 + $0x68] sm:$0xf]
    %v1313 = vld [vmem:[%s6 + $0x6c] sm:$0xff]
    %v1314 = vld [vmem:[%s6 + $0x74] sm:$0xf]
    %v1315 = vld [vmem:[%s6 + $0x78] sm:$0xff]
    %v1316 = vld [vmem:[%s6 + $0x80] sm:$0xf]
    %v1317 = vld [vmem:[%s6 + $0x84] sm:$0xff]
    %v1318 = vld [vmem:[%s6 + $0x8c] sm:$0xf]
    %v1319 = vld [vmem:[%s6 + $0x90] sm:$0xff]
    %v1320 = vld [vmem:[%s6 + $0x98] sm:$0xf]
    %v1321 = vld [vmem:[%s6 + $0x9c] sm:$0xff]
    %v1322 = vld [vmem:[%s6 + $0xa4] sm:$0xf]
    %v1323 = vld [vmem:[%s6 + $0xa8] sm:$0xff]
    %v1324 = vld [vmem:[%s6 + $0xb0] sm:$0xf]
    %v1325 = vld [vmem:[%s6 + $0xb4] sm:$0xff]
    %v1326 = vld [vmem:[%s6 + $0xbc] sm:$0xf]
    %v1359 = vunpack.c.l.b16 %v1295
    %v1360 = vunpack.c.h.b16 %v1295
    %v1361 = vunpack.c.l.b16 %v1296
    %v1362 = vunpack.c.l.b16 %v1297
    %v1363 = vunpack.c.h.b16 %v1297
    %v1364 = vunpack.c.l.b16 %v1298
    %v1365 = vunpack.c.l.b16 %v1299
    %v1366 = vunpack.c.h.b16 %v1299
    %v1367 = vunpack.c.l.b16 %v1300
    %v1368 = vunpack.c.l.b16 %v1301
    %v1369 = vunpack.c.h.b16 %v1301
    %v1370 = vunpack.c.l.b16 %v1302
    %v1371 = vunpack.c.l.b16 %v1303
    %v1372 = vunpack.c.h.b16 %v1303
    %v1373 = vunpack.c.l.b16 %v1304
    %v1374 = vunpack.c.l.b16 %v1305
    %v1375 = vunpack.c.h.b16 %v1305
    %v1376 = vunpack.c.l.b16 %v1306
    %v1377 = vunpack.c.l.b16 %v1307
    %v1378 = vunpack.c.h.b16 %v1307
    %v1379 = vunpack.c.l.b16 %v1308
    %v1380 = vunpack.c.l.b16 %v1309
    %v1381 = vunpack.c.h.b16 %v1309
    %v1382 = vunpack.c.l.b16 %v1310
    %v1383 = vunpack.c.l.b16 %v1311
    %v1384 = vunpack.c.h.b16 %v1311
    %v1385 = vunpack.c.l.b16 %v1312
    %v1386 = vunpack.c.l.b16 %v1313
    %v1387 = vunpack.c.h.b16 %v1313
    %v1388 = vunpack.c.l.b16 %v1314
    %v1389 = vunpack.c.l.b16 %v1315
    %v1390 = vunpack.c.h.b16 %v1315
    %v1391 = vunpack.c.l.b16 %v1316
    %v1392 = vunpack.c.l.b16 %v1317
    %v1393 = vunpack.c.h.b16 %v1317
    %v1394 = vunpack.c.l.b16 %v1318
    %v1395 = vunpack.c.l.b16 %v1319
    %v1396 = vunpack.c.h.b16 %v1319
    %v1397 = vunpack.c.l.b16 %v1320
    %v1398 = vunpack.c.l.b16 %v1321
    %v1399 = vunpack.c.h.b16 %v1321
    %v1400 = vunpack.c.l.b16 %v1322
    %v1401 = vunpack.c.l.b16 %v1323
    %v1402 = vunpack.c.h.b16 %v1323
    %v1403 = vunpack.c.l.b16 %v1324
    %v1404 = vunpack.c.l.b16 %v1325
    %v1405 = vunpack.c.h.b16 %v1325
    %v1406 = vunpack.c.l.b16 %v1326
    %v1407 = vpack.c.b16 %v1362, %v1359
    %v1408 = vpack.c.b16 %v1363, %v1360
    %v1409 = vpack.c.b16 %v1364, %v1361
    %v1410 = vpack.c.b16 %v1368, %v1365
    %v1411 = vpack.c.b16 %v1369, %v1366
    %v1412 = vpack.c.b16 %v1370, %v1367
    %v1413 = vpack.c.b16 %v1374, %v1371
    %v1414 = vpack.c.b16 %v1375, %v1372
    %v1415 = vpack.c.b16 %v1376, %v1373
    %v1416 = vpack.c.b16 %v1380, %v1377
    %v1417 = vpack.c.b16 %v1381, %v1378
    %v1418 = vpack.c.b16 %v1382, %v1379
    %v1419 = vpack.c.b16 %v1386, %v1383
    %v1420 = vpack.c.b16 %v1387, %v1384
    %v1421 = vpack.c.b16 %v1388, %v1385
    %v1422 = vpack.c.b16 %v1392, %v1389
    %v1423 = vpack.c.b16 %v1393, %v1390
    %v1424 = vpack.c.b16 %v1394, %v1391
    %v1425 = vpack.c.b16 %v1398, %v1395
    %v1426 = vpack.c.b16 %v1399, %v1396
    %v1427 = vpack.c.b16 %v1400, %v1397
    %v1428 = vpack.c.b16 %v1404, %v1401
    %v1429 = vpack.c.b16 %v1405, %v1402
    %v1430 = vpack.c.b16 %v1406, %v1403
    %1455 = vmatpush.bf16.msra.mxu0 %v1428
    %1456 = vmatpush.bf16.msra.mxu0 %v1425
    %1457 = vmatpush.bf16.msra.mxu0 %v1422
    %1458 = vmatpush.bf16.msra.mxu0 %v1419
    %1459 = vmatpush.bf16.msra.mxu0 %v1416
    %1460 = vmatpush.bf16.msra.mxu0 %v1413
    %1461 = vmatpush.bf16.msra.mxu0 %v1410
    %1462 = vmatpush.bf16.msra.mxu0 %v1407
    %1463 = vmatmul.bf16.gmra.mxu0 %v1294
    %v1464 = vpop.f32.mrf.mxu0
    %v1465 = vadd.f32 0.0, %v1464
    %v1466 = vpop.f32.mrf.mxu0
    %1467 = vdwg.mxu0
    %1468 = vmatpush.bf16.msra.mxu0 %v1429
    %1469 = vmatpush.bf16.msra.mxu0 %v1426
    %1470 = vmatpush.bf16.msra.mxu0 %v1423
    %1471 = vmatpush.bf16.msra.mxu0 %v1420
    %1472 = vmatpush.bf16.msra.mxu0 %v1417
    %1473 = vmatpush.bf16.msra.mxu0 %v1414
    %1474 = vmatpush.bf16.msra.mxu0 %v1411
    %1475 = vmatpush.bf16.msra.mxu0 %v1408
    %1476 = vmatmul.bf16.gmra.mxu0 %v1294
    %v1477 = vpop.f32.mrf.mxu0
    %v1478 = vadd.f32 0.0, %v1477
    %v1479 = vpop.f32.mrf.mxu0
    %1480 = vdwg.mxu0
    %1481 = vmatpush.bf16.msra.mxu0 %v1430
    %1482 = vmatpush.bf16.msra.mxu0 %v1427
    %1483 = vmatpush.bf16.msra.mxu0 %v1424
    %1484 = vmatpush.bf16.msra.mxu0 %v1421
    %1485 = vmatpush.bf16.msra.mxu0 %v1418
    %1486 = vmatpush.bf16.msra.mxu0 %v1415
    %1487 = vmatpush.bf16.msra.mxu0 %v1412
    %1488 = vmatpush.bf16.msra.mxu0 %v1409
    %1489 = vmatmul.bf16.gmra.mxu0 %v1294
    %v1490 = vpop.f32.mrf.mxu0
    %v1491 = vadd.f32 0.0, %v1490
    %v1492 = vpop.f32.mrf.mxu0
    %1493 = vdwg.mxu0
    %v1494 = vadd.f32 %v1265, %v1465
    %v1495 = vxor.u32 %v1494, 2147483648
    %v1496 = vmul.f32 %v1495, 1.442695
    %v1497 = vpow.pop %v1496
    %v1498 = vadd.f32 %v1497, 1.0
    %v1499 = vrcp.pop %v1498
    %v1500 = vmul.f32 %v1498, %v1499
    %v1501 = vsub.f32 1.0, %v1500
    %v1502 = vmul.f32 %v1499, %v1501
    %v1503 = vadd.f32 %v1499, %v1502
    %vm1504 = vweird.f32 %v1498
    %vm1505 = vweird.f32 %v1499
    %vm1506 = vmor %vm1504, %vm1505
    %v1507 = vsel %vm1506, %v1499, %v1503
    %v1508 = vand.u32 2147483647, %v1498
    %vm1509 = vcmp.eq.f32.partialorder %v1508, 8.507059e+37
    %v1510 = vand.u32 %v1498, 2147483648
    %v1511 = vor.u32 1.1754944e-38, %v1510
    %v1512 = vsel %vm1509, %v1511, %v1507
    %v1513 = vmul.f32 1.0, %v1512
    %v1514 = vadd.f32 %v1278, %v1478
    %v1515 = vxor.u32 %v1514, 2147483648
    %v1516 = vmul.f32 %v1515, 1.442695
    %v1517 = vpow.pop %v1516
    %v1518 = vadd.f32 %v1517, 1.0
    %v1519 = vrcp.pop %v1518
    %v1520 = vmul.f32 %v1518, %v1519
    %v1521 = vsub.f32 1.0, %v1520
    %v1522 = vmul.f32 %v1519, %v1521
    %v1523 = vadd.f32 %v1519, %v1522
    %vm1524 = vweird.f32 %v1518
    %vm1525 = vweird.f32 %v1519
    %vm1526 = vmor %vm1524, %vm1525
    %v1527 = vsel %vm1526, %v1519, %v1523
    %v1528 = vand.u32 2147483647, %v1518
    %vm1529 = vcmp.eq.f32.partialorder %v1528, 8.507059e+37
    %v1530 = vand.u32 %v1518, 2147483648
    %v1531 = vor.u32 1.1754944e-38, %v1530
    %v1532 = vsel %vm1529, %v1531, %v1527
    %v1533 = vmul.f32 1.0, %v1532
    %v1534 = vadd.f32 %v1491, %v821
    %v1535 = vmul.f32 %v1513, %v1534
    %v1536 = vadd.f32 %v1291, %v1535
    %v1537 = vtanh.pop %v1536
    %v1538 = vsub.f32 1.0, %v1533
    %v1539 = vmul.f32 %v1538, %v1537
    %v1540 = vmul.f32 %v1533, %v830
    %v1541 = vadd.f32 %v1539, %v1540
    %s1542 = scalar_lea.vmem [#allocation2], 2
    %1543 = vst [vmem:[%s1542] sm:$0x3] %v1541
    %v1544 = vld [vmem:[%s2] sm:$0xff]
    %v1545 = vld [vmem:[%s2 + $0x8] sm:$0xf]
    %v1546 = vld [vmem:[%s2 + $0xc] sm:$0xff]
    %v1547 = vld [vmem:[%s2 + $0x14] sm:$0xf]
    %v1548 = vld [vmem:[%s2 + $0x18] sm:$0xff]
    %v1549 = vld [vmem:[%s2 + $0x20] sm:$0xf]
    %v1550 = vld [vmem:[%s2 + $0x24] sm:$0xff]
    %v1551 = vld [vmem:[%s2 + $0x2c] sm:$0xf]
    %v1552 = vld [vmem:[%s2 + $0x30] sm:$0xff]
    %v1553 = vld [vmem:[%s2 + $0x38] sm:$0xf]
    %v1554 = vld [vmem:[%s2 + $0x3c] sm:$0xff]
    %v1555 = vld [vmem:[%s2 + $0x44] sm:$0xf]
    %v1556 = vld [vmem:[%s2 + $0x48] sm:$0xff]
    %v1557 = vld [vmem:[%s2 + $0x50] sm:$0xf]
    %v1558 = vld [vmem:[%s2 + $0x54] sm:$0xff]
    %v1559 = vld [vmem:[%s2 + $0x5c] sm:$0xf]
    %v1560 = vld [vmem:[%s2 + $0x60] sm:$0xff]
    %v1561 = vld [vmem:[%s2 + $0x68] sm:$0xf]
    %v1562 = vld [vmem:[%s2 + $0x6c] sm:$0xff]
    %v1563 = vld [vmem:[%s2 + $0x74] sm:$0xf]
    %v1564 = vld [vmem:[%s2 + $0x78] sm:$0xff]
    %v1565 = vld [vmem:[%s2 + $0x80] sm:$0xf]
    %v1566 = vld [vmem:[%s2 + $0x84] sm:$0xff]
    %v1567 = vld [vmem:[%s2 + $0x8c] sm:$0xf]
    %v1568 = vld [vmem:[%s2 + $0x90] sm:$0xff]
    %v1569 = vld [vmem:[%s2 + $0x98] sm:$0xf]
    %v1570 = vld [vmem:[%s2 + $0x9c] sm:$0xff]
    %v1571 = vld [vmem:[%s2 + $0xa4] sm:$0xf]
    %v1572 = vld [vmem:[%s2 + $0xa8] sm:$0xff]
    %v1573 = vld [vmem:[%s2 + $0xb0] sm:$0xf]
    %v1574 = vld [vmem:[%s2 + $0xb4] sm:$0xff]
    %v1575 = vld [vmem:[%s2 + $0xbc] sm:$0xf]
    %v1608 = vunpack.c.l.b16 %v1544
    %v1609 = vunpack.c.h.b16 %v1544
    %v1610 = vunpack.c.l.b16 %v1545
    %v1611 = vunpack.c.l.b16 %v1546
    %v1612 = vunpack.c.h.b16 %v1546
    %v1613 = vunpack.c.l.b16 %v1547
    %v1614 = vunpack.c.l.b16 %v1548
    %v1615 = vunpack.c.h.b16 %v1548
    %v1616 = vunpack.c.l.b16 %v1549
    %v1617 = vunpack.c.l.b16 %v1550
    %v1618 = vunpack.c.h.b16 %v1550
    %v1619 = vunpack.c.l.b16 %v1551
    %v1620 = vunpack.c.l.b16 %v1552
    %v1621 = vunpack.c.h.b16 %v1552
    %v1622 = vunpack.c.l.b16 %v1553
    %v1623 = vunpack.c.l.b16 %v1554
    %v1624 = vunpack.c.h.b16 %v1554
    %v1625 = vunpack.c.l.b16 %v1555
    %v1626 = vunpack.c.l.b16 %v1556
    %v1627 = vunpack.c.h.b16 %v1556
    %v1628 = vunpack.c.l.b16 %v1557
    %v1629 = vunpack.c.l.b16 %v1558
    %v1630 = vunpack.c.h.b16 %v1558
    %v1631 = vunpack.c.l.b16 %v1559
    %v1632 = vunpack.c.l.b16 %v1560
    %v1633 = vunpack.c.h.b16 %v1560
    %v1634 = vunpack.c.l.b16 %v1561
    %v1635 = vunpack.c.l.b16 %v1562
    %v1636 = vunpack.c.h.b16 %v1562
    %v1637 = vunpack.c.l.b16 %v1563
    %v1638 = vunpack.c.l.b16 %v1564
    %v1639 = vunpack.c.h.b16 %v1564
    %v1640 = vunpack.c.l.b16 %v1565
    %v1641 = vunpack.c.l.b16 %v1566
    %v1642 = vunpack.c.h.b16 %v1566
    %v1643 = vunpack.c.l.b16 %v1567
    %v1644 = vunpack.c.l.b16 %v1568
    %v1645 = vunpack.c.h.b16 %v1568
    %v1646 = vunpack.c.l.b16 %v1569
    %v1647 = vunpack.c.l.b16 %v1570
    %v1648 = vunpack.c.h.b16 %v1570
    %v1649 = vunpack.c.l.b16 %v1571
    %v1650 = vunpack.c.l.b16 %v1572
    %v1651 = vunpack.c.h.b16 %v1572
    %v1652 = vunpack.c.l.b16 %v1573
    %v1653 = vunpack.c.l.b16 %v1574
    %v1654 = vunpack.c.h.b16 %v1574
    %v1655 = vunpack.c.l.b16 %v1575
    %v1656 = vpack.c.b16 %v1611, %v1608
    %v1657 = vpack.c.b16 %v1612, %v1609
    %v1658 = vpack.c.b16 %v1613, %v1610
    %v1659 = vpack.c.b16 %v1617, %v1614
    %v1660 = vpack.c.b16 %v1618, %v1615
    %v1661 = vpack.c.b16 %v1619, %v1616
    %v1662 = vpack.c.b16 %v1623, %v1620
    %v1663 = vpack.c.b16 %v1624, %v1621
    %v1664 = vpack.c.b16 %v1625, %v1622
    %v1665 = vpack.c.b16 %v1629, %v1626
    %v1666 = vpack.c.b16 %v1630, %v1627
    %v1667 = vpack.c.b16 %v1631, %v1628
    %v1668 = vpack.c.b16 %v1635, %v1632
    %v1669 = vpack.c.b16 %v1636, %v1633
    %v1670 = vpack.c.b16 %v1637, %v1634
    %v1671 = vpack.c.b16 %v1641, %v1638
    %v1672 = vpack.c.b16 %v1642, %v1639
    %v1673 = vpack.c.b16 %v1643, %v1640
    %v1674 = vpack.c.b16 %v1647, %v1644
    %v1675 = vpack.c.b16 %v1648, %v1645
    %v1676 = vpack.c.b16 %v1649, %v1646
    %v1677 = vpack.c.b16 %v1653, %v1650
    %v1678 = vpack.c.b16 %v1654, %v1651
    %v1679 = vpack.c.b16 %v1655, %v1652
    %1704 = vmatpush.bf16.msra.mxu0 %v1677
    %1705 = vmatpush.bf16.msra.mxu0 %v1674
    %1706 = vmatpush.bf16.msra.mxu0 %v1671
    %1707 = vmatpush.bf16.msra.mxu0 %v1668
    %1708 = vmatpush.bf16.msra.mxu0 %v1665
    %1709 = vmatpush.bf16.msra.mxu0 %v1662
    %1710 = vmatpush.bf16.msra.mxu0 %v1659
    %1711 = vmatpush.bf16.msra.mxu0 %v1656
    %1712 = vmatmul.bf16.gmra.mxu0 %v1125
    %v1713 = vpop.f32.mrf.mxu0
    %v1714 = vadd.f32 0.0, %v1713
    %v1715 = vpop.f32.mrf.mxu0
    %1716 = vdwg.mxu0
    %1717 = vmatpush.bf16.msra.mxu0 %v1678
    %1718 = vmatpush.bf16.msra.mxu0 %v1675
    %1719 = vmatpush.bf16.msra.mxu0 %v1672
    %1720 = vmatpush.bf16.msra.mxu0 %v1669
    %1721 = vmatpush.bf16.msra.mxu0 %v1666
    %1722 = vmatpush.bf16.msra.mxu0 %v1663
    %1723 = vmatpush.bf16.msra.mxu0 %v1660
    %1724 = vmatpush.bf16.msra.mxu0 %v1657
    %1725 = vmatmul.bf16.gmra.mxu0 %v1125
    %v1726 = vpop.f32.mrf.mxu0
    %v1727 = vadd.f32 0.0, %v1726
    %v1728 = vpop.f32.mrf.mxu0
    %1729 = vdwg.mxu0
    %1730 = vmatpush.bf16.msra.mxu0 %v1679
    %1731 = vmatpush.bf16.msra.mxu0 %v1676
    %1732 = vmatpush.bf16.msra.mxu0 %v1673
    %1733 = vmatpush.bf16.msra.mxu0 %v1670
    %1734 = vmatpush.bf16.msra.mxu0 %v1667
    %1735 = vmatpush.bf16.msra.mxu0 %v1664
    %1736 = vmatpush.bf16.msra.mxu0 %v1661
    %1737 = vmatpush.bf16.msra.mxu0 %v1658
    %1738 = vmatmul.bf16.gmra.mxu0 %v1125
    %v1739 = vpop.f32.mrf.mxu0
    %v1740 = vadd.f32 0.0, %v1739
    %v1741 = vpop.f32.mrf.mxu0
    %1742 = vdwg.mxu0
    %v1744 = vrot.slane %v1714, 4
    %v1746 = vadd.f32 %v89, %v1744
    %v1747 = vxor.u32 %v1746, 2147483648
    %v1748 = vmul.f32 %v1747, 1.442695
    %v1749 = vpow.pop %v1748
    %v1750 = vadd.f32 %v1749, 1.0
    %v1751 = vrcp.pop %v1750
    %v1752 = vmul.f32 %v1750, %v1751
    %v1753 = vsub.f32 1.0, %v1752
    %v1754 = vmul.f32 %v1751, %v1753
    %v1755 = vadd.f32 %v1751, %v1754
    %vm1756 = vweird.f32 %v1750
    %vm1757 = vweird.f32 %v1751
    %vm1758 = vmor %vm1756, %vm1757
    %v1759 = vsel %vm1758, %v1751, %v1755
    %v1760 = vand.u32 2147483647, %v1750
    %vm1761 = vcmp.eq.f32.partialorder %v1760, 8.507059e+37
    %v1762 = vand.u32 %v1750, 2147483648
    %v1763 = vor.u32 1.1754944e-38, %v1762
    %v1764 = vsel %vm1761, %v1763, %v1759
    %v1765 = vmul.f32 1.0, %v1764
    %v1767 = vrot.slane %v1727, 4
    %v1769 = vadd.f32 %v103, %v1767
    %v1770 = vxor.u32 %v1769, 2147483648
    %v1771 = vmul.f32 %v1770, 1.442695
    %v1772 = vpow.pop %v1771
    %v1773 = vadd.f32 %v1772, 1.0
    %v1774 = vrcp.pop %v1773
    %v1775 = vmul.f32 %v1773, %v1774
    %v1776 = vsub.f32 1.0, %v1775
    %v1777 = vmul.f32 %v1774, %v1776
    %v1778 = vadd.f32 %v1774, %v1777
    %vm1779 = vweird.f32 %v1773
    %vm1780 = vweird.f32 %v1774
    %vm1781 = vmor %vm1779, %vm1780
    %v1782 = vsel %vm1781, %v1774, %v1778
    %v1783 = vand.u32 2147483647, %v1773
    %vm1784 = vcmp.eq.f32.partialorder %v1783, 8.507059e+37
    %v1785 = vand.u32 %v1773, 2147483648
    %v1786 = vor.u32 1.1754944e-38, %v1785
    %v1787 = vsel %vm1784, %v1786, %v1782
    %v1788 = vmul.f32 1.0, %v1787
    %v1789 = vadd.f32 %v1740, %v364
    %v1791 = vrot.slane %v1789, 4
    %v1793 = vmul.f32 %v1765, %v1791
    %v1794 = vadd.f32 %v117, %v1793
    %v1795 = vtanh.pop %v1794
    %v1796 = vsub.f32 1.0, %v1788
    %v1797 = vmul.f32 %v1796, %v1795
    %v1799 = vrot.slane %v1090, 6
    %v1801 = vmul.f32 %v1788, %v1799
    %v1802 = vadd.f32 %v1797, %v1801
    %v1803 = vpack.c.bf16 %v1802, %v1802
    %v1804 = vld [vmem:[%s5] sm:$0xff]
    %v1805 = vld [vmem:[%s5 + $0x8] sm:$0xf]
    %v1806 = vld [vmem:[%s5 + $0xc] sm:$0xff]
    %v1807 = vld [vmem:[%s5 + $0x14] sm:$0xf]
    %v1808 = vld [vmem:[%s5 + $0x18] sm:$0xff]
    %v1809 = vld [vmem:[%s5 + $0x20] sm:$0xf]
    %v1810 = vld [vmem:[%s5 + $0x24] sm:$0xff]
    %v1811 = vld [vmem:[%s5 + $0x2c] sm:$0xf]
    %v1812 = vld [vmem:[%s5 + $0x30] sm:$0xff]
    %v1813 = vld [vmem:[%s5 + $0x38] sm:$0xf]
    %v1814 = vld [vmem:[%s5 + $0x3c] sm:$0xff]
    %v1815 = vld [vmem:[%s5 + $0x44] sm:$0xf]
    %v1816 = vld [vmem:[%s5 + $0x48] sm:$0xff]
    %v1817 = vld [vmem:[%s5 + $0x50] sm:$0xf]
    %v1818 = vld [vmem:[%s5 + $0x54] sm:$0xff]
    %v1819 = vld [vmem:[%s5 + $0x5c] sm:$0xf]
    %v1820 = vld [vmem:[%s5 + $0x60] sm:$0xff]
    %v1821 = vld [vmem:[%s5 + $0x68] sm:$0xf]
    %v1822 = vld [vmem:[%s5 + $0x6c] sm:$0xff]
    %v1823 = vld [vmem:[%s5 + $0x74] sm:$0xf]
    %v1824 = vld [vmem:[%s5 + $0x78] sm:$0xff]
    %v1825 = vld [vmem:[%s5 + $0x80] sm:$0xf]
    %v1826 = vld [vmem:[%s5 + $0x84] sm:$0xff]
    %v1827 = vld [vmem:[%s5 + $0x8c] sm:$0xf]
    %v1828 = vld [vmem:[%s5 + $0x90] sm:$0xff]
    %v1829 = vld [vmem:[%s5 + $0x98] sm:$0xf]
    %v1830 = vld [vmem:[%s5 + $0x9c] sm:$0xff]
    %v1831 = vld [vmem:[%s5 + $0xa4] sm:$0xf]
    %v1832 = vld [vmem:[%s5 + $0xa8] sm:$0xff]
    %v1833 = vld [vmem:[%s5 + $0xb0] sm:$0xf]
    %v1834 = vld [vmem:[%s5 + $0xb4] sm:$0xff]
    %v1835 = vld [vmem:[%s5 + $0xbc] sm:$0xf]
    %v1837 = vrot.slane %v1803, 2
    %v1871 = vunpack.c.l.b16 %v1804
    %v1872 = vunpack.c.h.b16 %v1804
    %v1873 = vunpack.c.l.b16 %v1805
    %v1874 = vunpack.c.l.b16 %v1806
    %v1875 = vunpack.c.h.b16 %v1806
    %v1876 = vunpack.c.l.b16 %v1807
    %v1877 = vunpack.c.l.b16 %v1808
    %v1878 = vunpack.c.h.b16 %v1808
    %v1879 = vunpack.c.l.b16 %v1809
    %v1880 = vunpack.c.l.b16 %v1810
    %v1881 = vunpack.c.h.b16 %v1810
    %v1882 = vunpack.c.l.b16 %v1811
    %v1883 = vunpack.c.l.b16 %v1812
    %v1884 = vunpack.c.h.b16 %v1812
    %v1885 = vunpack.c.l.b16 %v1813
    %v1886 = vunpack.c.l.b16 %v1814
    %v1887 = vunpack.c.h.b16 %v1814
    %v1888 = vunpack.c.l.b16 %v1815
    %v1889 = vunpack.c.l.b16 %v1816
    %v1890 = vunpack.c.h.b16 %v1816
    %v1891 = vunpack.c.l.b16 %v1817
    %v1892 = vunpack.c.l.b16 %v1818
    %v1893 = vunpack.c.h.b16 %v1818
    %v1894 = vunpack.c.l.b16 %v1819
    %v1895 = vunpack.c.l.b16 %v1820
    %v1896 = vunpack.c.h.b16 %v1820
    %v1897 = vunpack.c.l.b16 %v1821
    %v1898 = vunpack.c.l.b16 %v1822
    %v1899 = vunpack.c.h.b16 %v1822
    %v1900 = vunpack.c.l.b16 %v1823
    %v1901 = vunpack.c.l.b16 %v1824
    %v1902 = vunpack.c.h.b16 %v1824
    %v1903 = vunpack.c.l.b16 %v1825
    %v1904 = vunpack.c.l.b16 %v1826
    %v1905 = vunpack.c.h.b16 %v1826
    %v1906 = vunpack.c.l.b16 %v1827
    %v1907 = vunpack.c.l.b16 %v1828
    %v1908 = vunpack.c.h.b16 %v1828
    %v1909 = vunpack.c.l.b16 %v1829
    %v1910 = vunpack.c.l.b16 %v1830
    %v1911 = vunpack.c.h.b16 %v1830
    %v1912 = vunpack.c.l.b16 %v1831
    %v1913 = vunpack.c.l.b16 %v1832
    %v1914 = vunpack.c.h.b16 %v1832
    %v1915 = vunpack.c.l.b16 %v1833
    %v1916 = vunpack.c.l.b16 %v1834
    %v1917 = vunpack.c.h.b16 %v1834
    %v1918 = vunpack.c.l.b16 %v1835
    %v1919 = vpack.c.b16 %v1874, %v1871
    %v1920 = vpack.c.b16 %v1875, %v1872
    %v1921 = vpack.c.b16 %v1876, %v1873
    %v1922 = vpack.c.b16 %v1880, %v1877
    %v1923 = vpack.c.b16 %v1881, %v1878
    %v1924 = vpack.c.b16 %v1882, %v1879
    %v1925 = vpack.c.b16 %v1886, %v1883
    %v1926 = vpack.c.b16 %v1887, %v1884
    %v1927 = vpack.c.b16 %v1888, %v1885
    %v1928 = vpack.c.b16 %v1892, %v1889
    %v1929 = vpack.c.b16 %v1893, %v1890
    %v1930 = vpack.c.b16 %v1894, %v1891
    %v1931 = vpack.c.b16 %v1898, %v1895
    %v1932 = vpack.c.b16 %v1899, %v1896
    %v1933 = vpack.c.b16 %v1900, %v1897
    %v1934 = vpack.c.b16 %v1904, %v1901
    %v1935 = vpack.c.b16 %v1905, %v1902
    %v1936 = vpack.c.b16 %v1906, %v1903
    %v1937 = vpack.c.b16 %v1910, %v1907
    %v1938 = vpack.c.b16 %v1911, %v1908
    %v1939 = vpack.c.b16 %v1912, %v1909
    %v1940 = vpack.c.b16 %v1916, %v1913
    %v1941 = vpack.c.b16 %v1917, %v1914
    %v1942 = vpack.c.b16 %v1918, %v1915
    %1967 = vmatpush.bf16.msra.mxu0 %v1940
    %1968 = vmatpush.bf16.msra.mxu0 %v1937
    %1969 = vmatpush.bf16.msra.mxu0 %v1934
    %1970 = vmatpush.bf16.msra.mxu0 %v1931
    %1971 = vmatpush.bf16.msra.mxu0 %v1928
    %1972 = vmatpush.bf16.msra.mxu0 %v1925
    %1973 = vmatpush.bf16.msra.mxu0 %v1922
    %1974 = vmatpush.bf16.msra.mxu0 %v1919
    %1975 = vmatmul.bf16.gmra.mxu0 %v1837
    %v1976 = vpop.f32.mrf.mxu0
    %v1977 = vadd.f32 %v408, %v1976
    %v1978 = vpop.f32.mrf.mxu0
    %1979 = vdwg.mxu0
    %1980 = vmatpush.bf16.msra.mxu0 %v1941
    %1981 = vmatpush.bf16.msra.mxu0 %v1938
    %1982 = vmatpush.bf16.msra.mxu0 %v1935
    %1983 = vmatpush.bf16.msra.mxu0 %v1932
    %1984 = vmatpush.bf16.msra.mxu0 %v1929
    %1985 = vmatpush.bf16.msra.mxu0 %v1926
    %1986 = vmatpush.bf16.msra.mxu0 %v1923
    %1987 = vmatpush.bf16.msra.mxu0 %v1920
    %1988 = vmatmul.bf16.gmra.mxu0 %v1837
    %v1989 = vpop.f32.mrf.mxu0
    %v1990 = vadd.f32 %v409, %v1989
    %v1991 = vpop.f32.mrf.mxu0
    %1992 = vdwg.mxu0
    %1993 = vmatpush.bf16.msra.mxu0 %v1942
    %1994 = vmatpush.bf16.msra.mxu0 %v1939
    %1995 = vmatpush.bf16.msra.mxu0 %v1936
    %1996 = vmatpush.bf16.msra.mxu0 %v1933
    %1997 = vmatpush.bf16.msra.mxu0 %v1930
    %1998 = vmatpush.bf16.msra.mxu0 %v1927
    %1999 = vmatpush.bf16.msra.mxu0 %v1924
    %2000 = vmatpush.bf16.msra.mxu0 %v1921
    %2001 = vmatmul.bf16.gmra.mxu0 %v1837
    %v2002 = vpop.f32.mrf.mxu0
    %v2003 = vadd.f32 %v410, %v2002
    %v2004 = vpop.f32.mrf.mxu0
    %2005 = vdwg.mxu0
    %v2006 = vpack.c.bf16 %v1541, %v1541
    %v2007 = vld [vmem:[%s6] sm:$0xff]
    %v2008 = vld [vmem:[%s6 + $0x8] sm:$0xf]
    %v2009 = vld [vmem:[%s6 + $0xc] sm:$0xff]
    %v2010 = vld [vmem:[%s6 + $0x14] sm:$0xf]
    %v2011 = vld [vmem:[%s6 + $0x18] sm:$0xff]
    %v2012 = vld [vmem:[%s6 + $0x20] sm:$0xf]
    %v2013 = vld [vmem:[%s6 + $0x24] sm:$0xff]
    %v2014 = vld [vmem:[%s6 + $0x2c] sm:$0xf]
    %v2015 = vld [vmem:[%s6 + $0x30] sm:$0xff]
    %v2016 = vld [vmem:[%s6 + $0x38] sm:$0xf]
    %v2017 = vld [vmem:[%s6 + $0x3c] sm:$0xff]
    %v2018 = vld [vmem:[%s6 + $0x44] sm:$0xf]
    %v2019 = vld [vmem:[%s6 + $0x48] sm:$0xff]
    %v2020 = vld [vmem:[%s6 + $0x50] sm:$0xf]
    %v2021 = vld [vmem:[%s6 + $0x54] sm:$0xff]
    %v2022 = vld [vmem:[%s6 + $0x5c] sm:$0xf]
    %v2023 = vld [vmem:[%s6 + $0x60] sm:$0xff]
    %v2024 = vld [vmem:[%s6 + $0x68] sm:$0xf]
    %v2025 = vld [vmem:[%s6 + $0x6c] sm:$0xff]
    %v2026 = vld [vmem:[%s6 + $0x74] sm:$0xf]
    %v2027 = vld [vmem:[%s6 + $0x78] sm:$0xff]
    %v2028 = vld [vmem:[%s6 + $0x80] sm:$0xf]
    %v2029 = vld [vmem:[%s6 + $0x84] sm:$0xff]
    %v2030 = vld [vmem:[%s6 + $0x8c] sm:$0xf]
    %v2031 = vld [vmem:[%s6 + $0x90] sm:$0xff]
    %v2032 = vld [vmem:[%s6 + $0x98] sm:$0xf]
    %v2033 = vld [vmem:[%s6 + $0x9c] sm:$0xff]
    %v2034 = vld [vmem:[%s6 + $0xa4] sm:$0xf]
    %v2035 = vld [vmem:[%s6 + $0xa8] sm:$0xff]
    %v2036 = vld [vmem:[%s6 + $0xb0] sm:$0xf]
    %v2037 = vld [vmem:[%s6 + $0xb4] sm:$0xff]
    %v2038 = vld [vmem:[%s6 + $0xbc] sm:$0xf]
    %v2071 = vunpack.c.l.b16 %v2007
    %v2072 = vunpack.c.h.b16 %v2007
    %v2073 = vunpack.c.l.b16 %v2008
    %v2074 = vunpack.c.l.b16 %v2009
    %v2075 = vunpack.c.h.b16 %v2009
    %v2076 = vunpack.c.l.b16 %v2010
    %v2077 = vunpack.c.l.b16 %v2011
    %v2078 = vunpack.c.h.b16 %v2011
    %v2079 = vunpack.c.l.b16 %v2012
    %v2080 = vunpack.c.l.b16 %v2013
    %v2081 = vunpack.c.h.b16 %v2013
    %v2082 = vunpack.c.l.b16 %v2014
    %v2083 = vunpack.c.l.b16 %v2015
    %v2084 = vunpack.c.h.b16 %v2015
    %v2085 = vunpack.c.l.b16 %v2016
    %v2086 = vunpack.c.l.b16 %v2017
    %v2087 = vunpack.c.h.b16 %v2017
    %v2088 = vunpack.c.l.b16 %v2018
    %v2089 = vunpack.c.l.b16 %v2019
    %v2090 = vunpack.c.h.b16 %v2019
    %v2091 = vunpack.c.l.b16 %v2020
    %v2092 = vunpack.c.l.b16 %v2021
    %v2093 = vunpack.c.h.b16 %v2021
    %v2094 = vunpack.c.l.b16 %v2022
    %v2095 = vunpack.c.l.b16 %v2023
    %v2096 = vunpack.c.h.b16 %v2023
    %v2097 = vunpack.c.l.b16 %v2024
    %v2098 = vunpack.c.l.b16 %v2025
    %v2099 = vunpack.c.h.b16 %v2025
    %v2100 = vunpack.c.l.b16 %v2026
    %v2101 = vunpack.c.l.b16 %v2027
    %v2102 = vunpack.c.h.b16 %v2027
    %v2103 = vunpack.c.l.b16 %v2028
    %v2104 = vunpack.c.l.b16 %v2029
    %v2105 = vunpack.c.h.b16 %v2029
    %v2106 = vunpack.c.l.b16 %v2030
    %v2107 = vunpack.c.l.b16 %v2031
    %v2108 = vunpack.c.h.b16 %v2031
    %v2109 = vunpack.c.l.b16 %v2032
    %v2110 = vunpack.c.l.b16 %v2033
    %v2111 = vunpack.c.h.b16 %v2033
    %v2112 = vunpack.c.l.b16 %v2034
    %v2113 = vunpack.c.l.b16 %v2035
    %v2114 = vunpack.c.h.b16 %v2035
    %v2115 = vunpack.c.l.b16 %v2036
    %v2116 = vunpack.c.l.b16 %v2037
    %v2117 = vunpack.c.h.b16 %v2037
    %v2118 = vunpack.c.l.b16 %v2038
    %v2119 = vpack.c.b16 %v2074, %v2071
    %v2120 = vpack.c.b16 %v2075, %v2072
    %v2121 = vpack.c.b16 %v2076, %v2073
    %v2122 = vpack.c.b16 %v2080, %v2077
    %v2123 = vpack.c.b16 %v2081, %v2078
    %v2124 = vpack.c.b16 %v2082, %v2079
    %v2125 = vpack.c.b16 %v2086, %v2083
    %v2126 = vpack.c.b16 %v2087, %v2084
    %v2127 = vpack.c.b16 %v2088, %v2085
    %v2128 = vpack.c.b16 %v2092, %v2089
    %v2129 = vpack.c.b16 %v2093, %v2090
    %v2130 = vpack.c.b16 %v2094, %v2091
    %v2131 = vpack.c.b16 %v2098, %v2095
    %v2132 = vpack.c.b16 %v2099, %v2096
    %v2133 = vpack.c.b16 %v2100, %v2097
    %v2134 = vpack.c.b16 %v2104, %v2101
    %v2135 = vpack.c.b16 %v2105, %v2102
    %v2136 = vpack.c.b16 %v2106, %v2103
    %v2137 = vpack.c.b16 %v2110, %v2107
    %v2138 = vpack.c.b16 %v2111, %v2108
    %v2139 = vpack.c.b16 %v2112, %v2109
    %v2140 = vpack.c.b16 %v2116, %v2113
    %v2141 = vpack.c.b16 %v2117, %v2114
    %v2142 = vpack.c.b16 %v2118, %v2115
    %2167 = vmatpush.bf16.msra.mxu0 %v2140
    %2168 = vmatpush.bf16.msra.mxu0 %v2137
    %2169 = vmatpush.bf16.msra.mxu0 %v2134
    %2170 = vmatpush.bf16.msra.mxu0 %v2131
    %2171 = vmatpush.bf16.msra.mxu0 %v2128
    %2172 = vmatpush.bf16.msra.mxu0 %v2125
    %2173 = vmatpush.bf16.msra.mxu0 %v2122
    %2174 = vmatpush.bf16.msra.mxu0 %v2119
    %2175 = vmatmul.bf16.gmra.mxu0 %v2006
    %v2176 = vpop.f32.mrf.mxu0
    %v2177 = vadd.f32 0.0, %v2176
    %v2178 = vpop.f32.mrf.mxu0
    %2179 = vdwg.mxu0
    %2180 = vmatpush.bf16.msra.mxu0 %v2141
    %2181 = vmatpush.bf16.msra.mxu0 %v2138
    %2182 = vmatpush.bf16.msra.mxu0 %v2135
    %2183 = vmatpush.bf16.msra.mxu0 %v2132
    %2184 = vmatpush.bf16.msra.mxu0 %v2129
    %2185 = vmatpush.bf16.msra.mxu0 %v2126
    %2186 = vmatpush.bf16.msra.mxu0 %v2123
    %2187 = vmatpush.bf16.msra.mxu0 %v2120
    %2188 = vmatmul.bf16.gmra.mxu0 %v2006
    %v2189 = vpop.f32.mrf.mxu0
    %v2190 = vadd.f32 0.0, %v2189
    %v2191 = vpop.f32.mrf.mxu0
    %2192 = vdwg.mxu0
    %2193 = vmatpush.bf16.msra.mxu0 %v2142
    %2194 = vmatpush.bf16.msra.mxu0 %v2139
    %2195 = vmatpush.bf16.msra.mxu0 %v2136
    %2196 = vmatpush.bf16.msra.mxu0 %v2133
    %2197 = vmatpush.bf16.msra.mxu0 %v2130
    %2198 = vmatpush.bf16.msra.mxu0 %v2127
    %2199 = vmatpush.bf16.msra.mxu0 %v2124
    %2200 = vmatpush.bf16.msra.mxu0 %v2121
    %2201 = vmatmul.bf16.gmra.mxu0 %v2006
    %v2202 = vpop.f32.mrf.mxu0
    %v2203 = vadd.f32 0.0, %v2202
    %v2204 = vpop.f32.mrf.mxu0
    %2205 = vdwg.mxu0
    %v2206 = vadd.f32 %v1977, %v2177
    %v2207 = vxor.u32 %v2206, 2147483648
    %v2208 = vmul.f32 %v2207, 1.442695
    %v2209 = vpow.pop %v2208
    %v2210 = vadd.f32 %v2209, 1.0
    %v2211 = vrcp.pop %v2210
    %v2212 = vmul.f32 %v2210, %v2211
    %v2213 = vsub.f32 1.0, %v2212
    %v2214 = vmul.f32 %v2211, %v2213
    %v2215 = vadd.f32 %v2211, %v2214
    %vm2216 = vweird.f32 %v2210
    %vm2217 = vweird.f32 %v2211
    %vm2218 = vmor %vm2216, %vm2217
    %v2219 = vsel %vm2218, %v2211, %v2215
    %v2220 = vand.u32 2147483647, %v2210
    %vm2221 = vcmp.eq.f32.partialorder %v2220, 8.507059e+37
    %v2222 = vand.u32 %v2210, 2147483648
    %v2223 = vor.u32 1.1754944e-38, %v2222
    %v2224 = vsel %vm2221, %v2223, %v2219
    %v2225 = vmul.f32 1.0, %v2224
    %v2226 = vadd.f32 %v1990, %v2190
    %v2227 = vxor.u32 %v2226, 2147483648
    %v2228 = vmul.f32 %v2227, 1.442695
    %v2229 = vpow.pop %v2228
    %v2230 = vadd.f32 %v2229, 1.0
    %v2231 = vrcp.pop %v2230
    %v2232 = vmul.f32 %v2230, %v2231
    %v2233 = vsub.f32 1.0, %v2232
    %v2234 = vmul.f32 %v2231, %v2233
    %v2235 = vadd.f32 %v2231, %v2234
    %vm2236 = vweird.f32 %v2230
    %vm2237 = vweird.f32 %v2231
    %vm2238 = vmor %vm2236, %vm2237
    %v2239 = vsel %vm2238, %v2231, %v2235
    %v2240 = vand.u32 2147483647, %v2230
    %vm2241 = vcmp.eq.f32.partialorder %v2240, 8.507059e+37
    %v2242 = vand.u32 %v2230, 2147483648
    %v2243 = vor.u32 1.1754944e-38, %v2242
    %v2244 = vsel %vm2241, %v2243, %v2239
    %v2245 = vmul.f32 1.0, %v2244
    %v2246 = vadd.f32 %v2203, %v821
    %v2247 = vmul.f32 %v2225, %v2246
    %v2248 = vadd.f32 %v2003, %v2247
    %v2249 = vtanh.pop %v2248
    %v2250 = vsub.f32 1.0, %v2245
    %v2251 = vmul.f32 %v2250, %v2249
    %v2252 = vmul.f32 %v2245, %v1541
    %v2253 = vadd.f32 %v2251, %v2252
    %s2254 = scalar_lea.vmem [#allocation2], 4
    %2255 = vst [vmem:[%s2254] sm:$0x3] %v2253
    %v2256 = vld [vmem:[%s2] sm:$0xff]
    %v2257 = vld [vmem:[%s2 + $0x8] sm:$0xf]
    %v2258 = vld [vmem:[%s2 + $0xc] sm:$0xff]
    %v2259 = vld [vmem:[%s2 + $0x14] sm:$0xf]
    %v2260 = vld [vmem:[%s2 + $0x18] sm:$0xff]
    %v2261 = vld [vmem:[%s2 + $0x20] sm:$0xf]
    %v2262 = vld [vmem:[%s2 + $0x24] sm:$0xff]
    %v2263 = vld [vmem:[%s2 + $0x2c] sm:$0xf]
    %v2264 = vld [vmem:[%s2 + $0x30] sm:$0xff]
    %v2265 = vld [vmem:[%s2 + $0x38] sm:$0xf]
    %v2266 = vld [vmem:[%s2 + $0x3c] sm:$0xff]
    %v2267 = vld [vmem:[%s2 + $0x44] sm:$0xf]
    %v2268 = vld [vmem:[%s2 + $0x48] sm:$0xff]
    %v2269 = vld [vmem:[%s2 + $0x50] sm:$0xf]
    %v2270 = vld [vmem:[%s2 + $0x54] sm:$0xff]
    %v2271 = vld [vmem:[%s2 + $0x5c] sm:$0xf]
    %v2272 = vld [vmem:[%s2 + $0x60] sm:$0xff]
    %v2273 = vld [vmem:[%s2 + $0x68] sm:$0xf]
    %v2274 = vld [vmem:[%s2 + $0x6c] sm:$0xff]
    %v2275 = vld [vmem:[%s2 + $0x74] sm:$0xf]
    %v2276 = vld [vmem:[%s2 + $0x78] sm:$0xff]
    %v2277 = vld [vmem:[%s2 + $0x80] sm:$0xf]
    %v2278 = vld [vmem:[%s2 + $0x84] sm:$0xff]
    %v2279 = vld [vmem:[%s2 + $0x8c] sm:$0xf]
    %v2280 = vld [vmem:[%s2 + $0x90] sm:$0xff]
    %v2281 = vld [vmem:[%s2 + $0x98] sm:$0xf]
    %v2282 = vld [vmem:[%s2 + $0x9c] sm:$0xff]
    %v2283 = vld [vmem:[%s2 + $0xa4] sm:$0xf]
    %v2284 = vld [vmem:[%s2 + $0xa8] sm:$0xff]
    %v2285 = vld [vmem:[%s2 + $0xb0] sm:$0xf]
    %v2286 = vld [vmem:[%s2 + $0xb4] sm:$0xff]
    %v2287 = vld [vmem:[%s2 + $0xbc] sm:$0xf]
    %v2320 = vunpack.c.l.b16 %v2256
    %v2321 = vunpack.c.h.b16 %v2256
    %v2322 = vunpack.c.l.b16 %v2257
    %v2323 = vunpack.c.l.b16 %v2258
    %v2324 = vunpack.c.h.b16 %v2258
    %v2325 = vunpack.c.l.b16 %v2259
    %v2326 = vunpack.c.l.b16 %v2260
    %v2327 = vunpack.c.h.b16 %v2260
    %v2328 = vunpack.c.l.b16 %v2261
    %v2329 = vunpack.c.l.b16 %v2262
    %v2330 = vunpack.c.h.b16 %v2262
    %v2331 = vunpack.c.l.b16 %v2263
    %v2332 = vunpack.c.l.b16 %v2264
    %v2333 = vunpack.c.h.b16 %v2264
    %v2334 = vunpack.c.l.b16 %v2265
    %v2335 = vunpack.c.l.b16 %v2266
    %v2336 = vunpack.c.h.b16 %v2266
    %v2337 = vunpack.c.l.b16 %v2267
    %v2338 = vunpack.c.l.b16 %v2268
    %v2339 = vunpack.c.h.b16 %v2268
    %v2340 = vunpack.c.l.b16 %v2269
    %v2341 = vunpack.c.l.b16 %v2270
    %v2342 = vunpack.c.h.b16 %v2270
    %v2343 = vunpack.c.l.b16 %v2271
    %v2344 = vunpack.c.l.b16 %v2272
    %v2345 = vunpack.c.h.b16 %v2272
    %v2346 = vunpack.c.l.b16 %v2273
    %v2347 = vunpack.c.l.b16 %v2274
    %v2348 = vunpack.c.h.b16 %v2274
    %v2349 = vunpack.c.l.b16 %v2275
    %v2350 = vunpack.c.l.b16 %v2276
    %v2351 = vunpack.c.h.b16 %v2276
    %v2352 = vunpack.c.l.b16 %v2277
    %v2353 = vunpack.c.l.b16 %v2278
    %v2354 = vunpack.c.h.b16 %v2278
    %v2355 = vunpack.c.l.b16 %v2279
    %v2356 = vunpack.c.l.b16 %v2280
    %v2357 = vunpack.c.h.b16 %v2280
    %v2358 = vunpack.c.l.b16 %v2281
    %v2359 = vunpack.c.l.b16 %v2282
    %v2360 = vunpack.c.h.b16 %v2282
    %v2361 = vunpack.c.l.b16 %v2283
    %v2362 = vunpack.c.l.b16 %v2284
    %v2363 = vunpack.c.h.b16 %v2284
    %v2364 = vunpack.c.l.b16 %v2285
    %v2365 = vunpack.c.l.b16 %v2286
    %v2366 = vunpack.c.h.b16 %v2286
    %v2367 = vunpack.c.l.b16 %v2287
    %v2368 = vpack.c.b16 %v2323, %v2320
    %v2369 = vpack.c.b16 %v2324, %v2321
    %v2370 = vpack.c.b16 %v2325, %v2322
    %v2371 = vpack.c.b16 %v2329, %v2326
    %v2372 = vpack.c.b16 %v2330, %v2327
    %v2373 = vpack.c.b16 %v2331, %v2328
    %v2374 = vpack.c.b16 %v2335, %v2332
    %v2375 = vpack.c.b16 %v2336, %v2333
    %v2376 = vpack.c.b16 %v2337, %v2334
    %v2377 = vpack.c.b16 %v2341, %v2338
    %v2378 = vpack.c.b16 %v2342, %v2339
    %v2379 = vpack.c.b16 %v2343, %v2340
    %v2380 = vpack.c.b16 %v2347, %v2344
    %v2381 = vpack.c.b16 %v2348, %v2345
    %v2382 = vpack.c.b16 %v2349, %v2346
    %v2383 = vpack.c.b16 %v2353, %v2350
    %v2384 = vpack.c.b16 %v2354, %v2351
    %v2385 = vpack.c.b16 %v2355, %v2352
    %v2386 = vpack.c.b16 %v2359, %v2356
    %v2387 = vpack.c.b16 %v2360, %v2357
    %v2388 = vpack.c.b16 %v2361, %v2358
    %v2389 = vpack.c.b16 %v2365, %v2362
    %v2390 = vpack.c.b16 %v2366, %v2363
    %v2391 = vpack.c.b16 %v2367, %v2364
    %2416 = vmatpush.bf16.msra.mxu0 %v2389
    %2417 = vmatpush.bf16.msra.mxu0 %v2386
    %2418 = vmatpush.bf16.msra.mxu0 %v2383
    %2419 = vmatpush.bf16.msra.mxu0 %v2380
    %2420 = vmatpush.bf16.msra.mxu0 %v2377
    %2421 = vmatpush.bf16.msra.mxu0 %v2374
    %2422 = vmatpush.bf16.msra.mxu0 %v2371
    %2423 = vmatpush.bf16.msra.mxu0 %v2368
    %2424 = vmatmul.bf16.gmra.mxu0 %v1837
    %v2425 = vpop.f32.mrf.mxu0
    %v2426 = vadd.f32 0.0, %v2425
    %v2427 = vpop.f32.mrf.mxu0
    %2428 = vdwg.mxu0
    %2429 = vmatpush.bf16.msra.mxu0 %v2390
    %2430 = vmatpush.bf16.msra.mxu0 %v2387
    %2431 = vmatpush.bf16.msra.mxu0 %v2384
    %2432 = vmatpush.bf16.msra.mxu0 %v2381
    %2433 = vmatpush.bf16.msra.mxu0 %v2378
    %2434 = vmatpush.bf16.msra.mxu0 %v2375
    %2435 = vmatpush.bf16.msra.mxu0 %v2372
    %2436 = vmatpush.bf16.msra.mxu0 %v2369
    %2437 = vmatmul.bf16.gmra.mxu0 %v1837
    %v2438 = vpop.f32.mrf.mxu0
    %v2439 = vadd.f32 0.0, %v2438
    %v2440 = vpop.f32.mrf.mxu0
    %2441 = vdwg.mxu0
    %2442 = vmatpush.bf16.msra.mxu0 %v2391
    %2443 = vmatpush.bf16.msra.mxu0 %v2388
    %2444 = vmatpush.bf16.msra.mxu0 %v2385
    %2445 = vmatpush.bf16.msra.mxu0 %v2382
    %2446 = vmatpush.bf16.msra.mxu0 %v2379
    %2447 = vmatpush.bf16.msra.mxu0 %v2376
    %2448 = vmatpush.bf16.msra.mxu0 %v2373
    %2449 = vmatpush.bf16.msra.mxu0 %v2370
    %2450 = vmatmul.bf16.gmra.mxu0 %v1837
    %v2451 = vpop.f32.mrf.mxu0
    %v2452 = vadd.f32 0.0, %v2451
    %v2453 = vpop.f32.mrf.mxu0
    %2454 = vdwg.mxu0
    %v2456 = vrot.slane %v2426, 2
    %v2458 = vadd.f32 %v89, %v2456
    %v2459 = vxor.u32 %v2458, 2147483648
    %v2460 = vmul.f32 %v2459, 1.442695
    %v2461 = vpow.pop %v2460
    %v2462 = vadd.f32 %v2461, 1.0
    %v2463 = vrcp.pop %v2462
    %v2464 = vmul.f32 %v2462, %v2463
    %v2465 = vsub.f32 1.0, %v2464
    %v2466 = vmul.f32 %v2463, %v2465
    %v2467 = vadd.f32 %v2463, %v2466
    %vm2468 = vweird.f32 %v2462
    %vm2469 = vweird.f32 %v2463
    %vm2470 = vmor %vm2468, %vm2469
    %v2471 = vsel %vm2470, %v2463, %v2467
    %v2472 = vand.u32 2147483647, %v2462
    %vm2473 = vcmp.eq.f32.partialorder %v2472, 8.507059e+37
    %v2474 = vand.u32 %v2462, 2147483648
    %v2475 = vor.u32 1.1754944e-38, %v2474
    %v2476 = vsel %vm2473, %v2475, %v2471
    %v2477 = vmul.f32 1.0, %v2476
    %v2479 = vrot.slane %v2439, 2
    %v2481 = vadd.f32 %v103, %v2479
    %v2482 = vxor.u32 %v2481, 2147483648
    %v2483 = vmul.f32 %v2482, 1.442695
    %v2484 = vpow.pop %v2483
    %v2485 = vadd.f32 %v2484, 1.0
    %v2486 = vrcp.pop %v2485
    %v2487 = vmul.f32 %v2485, %v2486
    %v2488 = vsub.f32 1.0, %v2487
    %v2489 = vmul.f32 %v2486, %v2488
    %v2490 = vadd.f32 %v2486, %v2489
    %vm2491 = vweird.f32 %v2485
    %vm2492 = vweird.f32 %v2486
    %vm2493 = vmor %vm2491, %vm2492
    %v2494 = vsel %vm2493, %v2486, %v2490
    %v2495 = vand.u32 2147483647, %v2485
    %vm2496 = vcmp.eq.f32.partialorder %v2495, 8.507059e+37
    %v2497 = vand.u32 %v2485, 2147483648
    %v2498 = vor.u32 1.1754944e-38, %v2497
    %v2499 = vsel %vm2496, %v2498, %v2494
    %v2500 = vmul.f32 1.0, %v2499
    %v2501 = vadd.f32 %v2452, %v364
    %v2503 = vrot.slane %v2501, 2
    %v2505 = vmul.f32 %v2477, %v2503
    %v2506 = vadd.f32 %v117, %v2505
    %v2507 = vtanh.pop %v2506
    %v2508 = vsub.f32 1.0, %v2500
    %v2509 = vmul.f32 %v2508, %v2507
    %v2511 = vrot.slane %v1802, 6
    %v2513 = vmul.f32 %v2500, %v2511
    %v2514 = vadd.f32 %v2509, %v2513
    %v2515 = vpack.c.bf16 %v2514, %v2514
    %v2516 = vld [vmem:[%s5] sm:$0xff]
    %v2517 = vld [vmem:[%s5 + $0x8] sm:$0xf]
    %v2518 = vld [vmem:[%s5 + $0xc] sm:$0xff]
    %v2519 = vld [vmem:[%s5 + $0x14] sm:$0xf]
    %v2520 = vld [vmem:[%s5 + $0x18] sm:$0xff]
    %v2521 = vld [vmem:[%s5 + $0x20] sm:$0xf]
    %v2522 = vld [vmem:[%s5 + $0x24] sm:$0xff]
    %v2523 = vld [vmem:[%s5 + $0x2c] sm:$0xf]
    %v2524 = vld [vmem:[%s5 + $0x30] sm:$0xff]
    %v2525 = vld [vmem:[%s5 + $0x38] sm:$0xf]
    %v2526 = vld [vmem:[%s5 + $0x3c] sm:$0xff]
    %v2527 = vld [vmem:[%s5 + $0x44] sm:$0xf]
    %v2528 = vld [vmem:[%s5 + $0x48] sm:$0xff]
    %v2529 = vld [vmem:[%s5 + $0x50] sm:$0xf]
    %v2530 = vld [vmem:[%s5 + $0x54] sm:$0xff]
    %v2531 = vld [vmem:[%s5 + $0x5c] sm:$0xf]
    %v2532 = vld [vmem:[%s5 + $0x60] sm:$0xff]
    %v2533 = vld [vmem:[%s5 + $0x68] sm:$0xf]
    %v2534 = vld [vmem:[%s5 + $0x6c] sm:$0xff]
    %v2535 = vld [vmem:[%s5 + $0x74] sm:$0xf]
    %v2536 = vld [vmem:[%s5 + $0x78] sm:$0xff]
    %v2537 = vld [vmem:[%s5 + $0x80] sm:$0xf]
    %v2538 = vld [vmem:[%s5 + $0x84] sm:$0xff]
    %v2539 = vld [vmem:[%s5 + $0x8c] sm:$0xf]
    %v2540 = vld [vmem:[%s5 + $0x90] sm:$0xff]
    %v2541 = vld [vmem:[%s5 + $0x98] sm:$0xf]
    %v2542 = vld [vmem:[%s5 + $0x9c] sm:$0xff]
    %v2543 = vld [vmem:[%s5 + $0xa4] sm:$0xf]
    %v2544 = vld [vmem:[%s5 + $0xa8] sm:$0xff]
    %v2545 = vld [vmem:[%s5 + $0xb0] sm:$0xf]
    %v2546 = vld [vmem:[%s5 + $0xb4] sm:$0xff]
    %v2547 = vld [vmem:[%s5 + $0xbc] sm:$0xf]
    %v2549 = vrot.slane %v2515, 3
    %v2583 = vunpack.c.l.b16 %v2516
    %v2584 = vunpack.c.h.b16 %v2516
    %v2585 = vunpack.c.l.b16 %v2517
    %v2586 = vunpack.c.l.b16 %v2518
    %v2587 = vunpack.c.h.b16 %v2518
    %v2588 = vunpack.c.l.b16 %v2519
    %v2589 = vunpack.c.l.b16 %v2520
    %v2590 = vunpack.c.h.b16 %v2520
    %v2591 = vunpack.c.l.b16 %v2521
    %v2592 = vunpack.c.l.b16 %v2522
    %v2593 = vunpack.c.h.b16 %v2522
    %v2594 = vunpack.c.l.b16 %v2523
    %v2595 = vunpack.c.l.b16 %v2524
    %v2596 = vunpack.c.h.b16 %v2524
    %v2597 = vunpack.c.l.b16 %v2525
    %v2598 = vunpack.c.l.b16 %v2526
    %v2599 = vunpack.c.h.b16 %v2526
    %v2600 = vunpack.c.l.b16 %v2527
    %v2601 = vunpack.c.l.b16 %v2528
    %v2602 = vunpack.c.h.b16 %v2528
    %v2603 = vunpack.c.l.b16 %v2529
    %v2604 = vunpack.c.l.b16 %v2530
    %v2605 = vunpack.c.h.b16 %v2530
    %v2606 = vunpack.c.l.b16 %v2531
    %v2607 = vunpack.c.l.b16 %v2532
    %v2608 = vunpack.c.h.b16 %v2532
    %v2609 = vunpack.c.l.b16 %v2533
    %v2610 = vunpack.c.l.b16 %v2534
    %v2611 = vunpack.c.h.b16 %v2534
    %v2612 = vunpack.c.l.b16 %v2535
    %v2613 = vunpack.c.l.b16 %v2536
    %v2614 = vunpack.c.h.b16 %v2536
    %v2615 = vunpack.c.l.b16 %v2537
    %v2616 = vunpack.c.l.b16 %v2538
    %v2617 = vunpack.c.h.b16 %v2538
    %v2618 = vunpack.c.l.b16 %v2539
    %v2619 = vunpack.c.l.b16 %v2540
    %v2620 = vunpack.c.h.b16 %v2540
    %v2621 = vunpack.c.l.b16 %v2541
    %v2622 = vunpack.c.l.b16 %v2542
    %v2623 = vunpack.c.h.b16 %v2542
    %v2624 = vunpack.c.l.b16 %v2543
    %v2625 = vunpack.c.l.b16 %v2544
    %v2626 = vunpack.c.h.b16 %v2544
    %v2627 = vunpack.c.l.b16 %v2545
    %v2628 = vunpack.c.l.b16 %v2546
    %v2629 = vunpack.c.h.b16 %v2546
    %v2630 = vunpack.c.l.b16 %v2547
    %v2631 = vpack.c.b16 %v2586, %v2583
    %v2632 = vpack.c.b16 %v2587, %v2584
    %v2633 = vpack.c.b16 %v2588, %v2585
    %v2634 = vpack.c.b16 %v2592, %v2589
    %v2635 = vpack.c.b16 %v2593, %v2590
    %v2636 = vpack.c.b16 %v2594, %v2591
    %v2637 = vpack.c.b16 %v2598, %v2595
    %v2638 = vpack.c.b16 %v2599, %v2596
    %v2639 = vpack.c.b16 %v2600, %v2597
    %v2640 = vpack.c.b16 %v2604, %v2601
    %v2641 = vpack.c.b16 %v2605, %v2602
    %v2642 = vpack.c.b16 %v2606, %v2603
    %v2643 = vpack.c.b16 %v2610, %v2607
    %v2644 = vpack.c.b16 %v2611, %v2608
    %v2645 = vpack.c.b16 %v2612, %v2609
    %v2646 = vpack.c.b16 %v2616, %v2613
    %v2647 = vpack.c.b16 %v2617, %v2614
    %v2648 = vpack.c.b16 %v2618, %v2615
    %v2649 = vpack.c.b16 %v2622, %v2619
    %v2650 = vpack.c.b16 %v2623, %v2620
    %v2651 = vpack.c.b16 %v2624, %v2621
    %v2652 = vpack.c.b16 %v2628, %v2625
    %v2653 = vpack.c.b16 %v2629, %v2626
    %v2654 = vpack.c.b16 %v2630, %v2627
    %2679 = vmatpush.bf16.msra.mxu0 %v2652
    %2680 = vmatpush.bf16.msra.mxu0 %v2649
    %2681 = vmatpush.bf16.msra.mxu0 %v2646
    %2682 = vmatpush.bf16.msra.mxu0 %v2643
    %2683 = vmatpush.bf16.msra.mxu0 %v2640
    %2684 = vmatpush.bf16.msra.mxu0 %v2637
    %2685 = vmatpush.bf16.msra.mxu0 %v2634
    %2686 = vmatpush.bf16.msra.mxu0 %v2631
    %2687 = vmatmul.bf16.gmra.mxu0 %v2549
    %v2688 = vpop.f32.mrf.mxu0
    %v2689 = vadd.f32 %v408, %v2688
    %v2690 = vpop.f32.mrf.mxu0
    %2691 = vdwg.mxu0
    %2692 = vmatpush.bf16.msra.mxu0 %v2653
    %2693 = vmatpush.bf16.msra.mxu0 %v2650
    %2694 = vmatpush.bf16.msra.mxu0 %v2647
    %2695 = vmatpush.bf16.msra.mxu0 %v2644
    %2696 = vmatpush.bf16.msra.mxu0 %v2641
    %2697 = vmatpush.bf16.msra.mxu0 %v2638
    %2698 = vmatpush.bf16.msra.mxu0 %v2635
    %2699 = vmatpush.bf16.msra.mxu0 %v2632
    %2700 = vmatmul.bf16.gmra.mxu0 %v2549
    %v2701 = vpop.f32.mrf.mxu0
    %v2702 = vadd.f32 %v409, %v2701
    %v2703 = vpop.f32.mrf.mxu0
    %2704 = vdwg.mxu0
    %2705 = vmatpush.bf16.msra.mxu0 %v2654
    %2706 = vmatpush.bf16.msra.mxu0 %v2651
    %2707 = vmatpush.bf16.msra.mxu0 %v2648
    %2708 = vmatpush.bf16.msra.mxu0 %v2645
    %2709 = vmatpush.bf16.msra.mxu0 %v2642
    %2710 = vmatpush.bf16.msra.mxu0 %v2639
    %2711 = vmatpush.bf16.msra.mxu0 %v2636
    %2712 = vmatpush.bf16.msra.mxu0 %v2633
    %2713 = vmatmul.bf16.gmra.mxu0 %v2549
    %v2714 = vpop.f32.mrf.mxu0
    %v2715 = vadd.f32 %v410, %v2714
    %v2716 = vpop.f32.mrf.mxu0
    %2717 = vdwg.mxu0
    %v2718 = vpack.c.bf16 %v2253, %v2253
    %v2719 = vld [vmem:[%s6] sm:$0xff]
    %v2720 = vld [vmem:[%s6 + $0x8] sm:$0xf]
    %v2721 = vld [vmem:[%s6 + $0xc] sm:$0xff]
    %v2722 = vld [vmem:[%s6 + $0x14] sm:$0xf]
    %v2723 = vld [vmem:[%s6 + $0x18] sm:$0xff]
    %v2724 = vld [vmem:[%s6 + $0x20] sm:$0xf]
    %v2725 = vld [vmem:[%s6 + $0x24] sm:$0xff]
    %v2726 = vld [vmem:[%s6 + $0x2c] sm:$0xf]
    %v2727 = vld [vmem:[%s6 + $0x30] sm:$0xff]
    %v2728 = vld [vmem:[%s6 + $0x38] sm:$0xf]
    %v2729 = vld [vmem:[%s6 + $0x3c] sm:$0xff]
    %v2730 = vld [vmem:[%s6 + $0x44] sm:$0xf]
    %v2731 = vld [vmem:[%s6 + $0x48] sm:$0xff]
    %v2732 = vld [vmem:[%s6 + $0x50] sm:$0xf]
    %v2733 = vld [vmem:[%s6 + $0x54] sm:$0xff]
    %v2734 = vld [vmem:[%s6 + $0x5c] sm:$0xf]
    %v2735 = vld [vmem:[%s6 + $0x60] sm:$0xff]
    %v2736 = vld [vmem:[%s6 + $0x68] sm:$0xf]
    %v2737 = vld [vmem:[%s6 + $0x6c] sm:$0xff]
    %v2738 = vld [vmem:[%s6 + $0x74] sm:$0xf]
    %v2739 = vld [vmem:[%s6 + $0x78] sm:$0xff]
    %v2740 = vld [vmem:[%s6 + $0x80] sm:$0xf]
    %v2741 = vld [vmem:[%s6 + $0x84] sm:$0xff]
    %v2742 = vld [vmem:[%s6 + $0x8c] sm:$0xf]
    %v2743 = vld [vmem:[%s6 + $0x90] sm:$0xff]
    %v2744 = vld [vmem:[%s6 + $0x98] sm:$0xf]
    %v2745 = vld [vmem:[%s6 + $0x9c] sm:$0xff]
    %v2746 = vld [vmem:[%s6 + $0xa4] sm:$0xf]
    %v2747 = vld [vmem:[%s6 + $0xa8] sm:$0xff]
    %v2748 = vld [vmem:[%s6 + $0xb0] sm:$0xf]
    %v2749 = vld [vmem:[%s6 + $0xb4] sm:$0xff]
    %v2750 = vld [vmem:[%s6 + $0xbc] sm:$0xf]
    %v2783 = vunpack.c.l.b16 %v2719
    %v2784 = vunpack.c.h.b16 %v2719
    %v2785 = vunpack.c.l.b16 %v2720
    %v2786 = vunpack.c.l.b16 %v2721
    %v2787 = vunpack.c.h.b16 %v2721
    %v2788 = vunpack.c.l.b16 %v2722
    %v2789 = vunpack.c.l.b16 %v2723
    %v2790 = vunpack.c.h.b16 %v2723
    %v2791 = vunpack.c.l.b16 %v2724
    %v2792 = vunpack.c.l.b16 %v2725
    %v2793 = vunpack.c.h.b16 %v2725
    %v2794 = vunpack.c.l.b16 %v2726
    %v2795 = vunpack.c.l.b16 %v2727
    %v2796 = vunpack.c.h.b16 %v2727
    %v2797 = vunpack.c.l.b16 %v2728
    %v2798 = vunpack.c.l.b16 %v2729
    %v2799 = vunpack.c.h.b16 %v2729
    %v2800 = vunpack.c.l.b16 %v2730
    %v2801 = vunpack.c.l.b16 %v2731
    %v2802 = vunpack.c.h.b16 %v2731
    %v2803 = vunpack.c.l.b16 %v2732
    %v2804 = vunpack.c.l.b16 %v2733
    %v2805 = vunpack.c.h.b16 %v2733
    %v2806 = vunpack.c.l.b16 %v2734
    %v2807 = vunpack.c.l.b16 %v2735
    %v2808 = vunpack.c.h.b16 %v2735
    %v2809 = vunpack.c.l.b16 %v2736
    %v2810 = vunpack.c.l.b16 %v2737
    %v2811 = vunpack.c.h.b16 %v2737
    %v2812 = vunpack.c.l.b16 %v2738
    %v2813 = vunpack.c.l.b16 %v2739
    %v2814 = vunpack.c.h.b16 %v2739
    %v2815 = vunpack.c.l.b16 %v2740
    %v2816 = vunpack.c.l.b16 %v2741
    %v2817 = vunpack.c.h.b16 %v2741
    %v2818 = vunpack.c.l.b16 %v2742
    %v2819 = vunpack.c.l.b16 %v2743
    %v2820 = vunpack.c.h.b16 %v2743
    %v2821 = vunpack.c.l.b16 %v2744
    %v2822 = vunpack.c.l.b16 %v2745
    %v2823 = vunpack.c.h.b16 %v2745
    %v2824 = vunpack.c.l.b16 %v2746
    %v2825 = vunpack.c.l.b16 %v2747
    %v2826 = vunpack.c.h.b16 %v2747
    %v2827 = vunpack.c.l.b16 %v2748
    %v2828 = vunpack.c.l.b16 %v2749
    %v2829 = vunpack.c.h.b16 %v2749
    %v2830 = vunpack.c.l.b16 %v2750
    %v2831 = vpack.c.b16 %v2786, %v2783
    %v2832 = vpack.c.b16 %v2787, %v2784
    %v2833 = vpack.c.b16 %v2788, %v2785
    %v2834 = vpack.c.b16 %v2792, %v2789
    %v2835 = vpack.c.b16 %v2793, %v2790
    %v2836 = vpack.c.b16 %v2794, %v2791
    %v2837 = vpack.c.b16 %v2798, %v2795
    %v2838 = vpack.c.b16 %v2799, %v2796
    %v2839 = vpack.c.b16 %v2800, %v2797
    %v2840 = vpack.c.b16 %v2804, %v2801
    %v2841 = vpack.c.b16 %v2805, %v2802
    %v2842 = vpack.c.b16 %v2806, %v2803
    %v2843 = vpack.c.b16 %v2810, %v2807
    %v2844 = vpack.c.b16 %v2811, %v2808
    %v2845 = vpack.c.b16 %v2812, %v2809
    %v2846 = vpack.c.b16 %v2816, %v2813
    %v2847 = vpack.c.b16 %v2817, %v2814
    %v2848 = vpack.c.b16 %v2818, %v2815
    %v2849 = vpack.c.b16 %v2822, %v2819
    %v2850 = vpack.c.b16 %v2823, %v2820
    %v2851 = vpack.c.b16 %v2824, %v2821
    %v2852 = vpack.c.b16 %v2828, %v2825
    %v2853 = vpack.c.b16 %v2829, %v2826
    %v2854 = vpack.c.b16 %v2830, %v2827
    %2879 = vmatpush.bf16.msra.mxu0 %v2852
    %2880 = vmatpush.bf16.msra.mxu0 %v2849
    %2881 = vmatpush.bf16.msra.mxu0 %v2846
    %2882 = vmatpush.bf16.msra.mxu0 %v2843
    %2883 = vmatpush.bf16.msra.mxu0 %v2840
    %2884 = vmatpush.bf16.msra.mxu0 %v2837
    %2885 = vmatpush.bf16.msra.mxu0 %v2834
    %2886 = vmatpush.bf16.msra.mxu0 %v2831
    %2887 = vmatmul.bf16.gmra.mxu0 %v2718
    %v2888 = vpop.f32.mrf.mxu0
    %v2889 = vadd.f32 0.0, %v2888
    %v2890 = vpop.f32.mrf.mxu0
    %2891 = vdwg.mxu0
    %2892 = vmatpush.bf16.msra.mxu0 %v2853
    %2893 = vmatpush.bf16.msra.mxu0 %v2850
    %2894 = vmatpush.bf16.msra.mxu0 %v2847
    %2895 = vmatpush.bf16.msra.mxu0 %v2844
    %2896 = vmatpush.bf16.msra.mxu0 %v2841
    %2897 = vmatpush.bf16.msra.mxu0 %v2838
    %2898 = vmatpush.bf16.msra.mxu0 %v2835
    %2899 = vmatpush.bf16.msra.mxu0 %v2832
    %2900 = vmatmul.bf16.gmra.mxu0 %v2718
    %v2901 = vpop.f32.mrf.mxu0
    %v2902 = vadd.f32 0.0, %v2901
    %v2903 = vpop.f32.mrf.mxu0
    %2904 = vdwg.mxu0
    %2905 = vmatpush.bf16.msra.mxu0 %v2854
    %2906 = vmatpush.bf16.msra.mxu0 %v2851
    %2907 = vmatpush.bf16.msra.mxu0 %v2848
    %2908 = vmatpush.bf16.msra.mxu0 %v2845
    %2909 = vmatpush.bf16.msra.mxu0 %v2842
    %2910 = vmatpush.bf16.msra.mxu0 %v2839
    %2911 = vmatpush.bf16.msra.mxu0 %v2836
    %2912 = vmatpush.bf16.msra.mxu0 %v2833
    %2913 = vmatmul.bf16.gmra.mxu0 %v2718
    %v2914 = vpop.f32.mrf.mxu0
    %v2915 = vadd.f32 0.0, %v2914
    %v2916 = vpop.f32.mrf.mxu0
    %2917 = vdwg.mxu0
    %v2918 = vadd.f32 %v2689, %v2889
    %v2919 = vxor.u32 %v2918, 2147483648
    %v2920 = vmul.f32 %v2919, 1.442695
    %v2921 = vpow.pop %v2920
    %v2922 = vadd.f32 %v2921, 1.0
    %v2923 = vrcp.pop %v2922
    %v2924 = vmul.f32 %v2922, %v2923
    %v2925 = vsub.f32 1.0, %v2924
    %v2926 = vmul.f32 %v2923, %v2925
    %v2927 = vadd.f32 %v2923, %v2926
    %vm2928 = vweird.f32 %v2922
    %vm2929 = vweird.f32 %v2923
    %vm2930 = vmor %vm2928, %vm2929
    %v2931 = vsel %vm2930, %v2923, %v2927
    %v2932 = vand.u32 2147483647, %v2922
    %vm2933 = vcmp.eq.f32.partialorder %v2932, 8.507059e+37
    %v2934 = vand.u32 %v2922, 2147483648
    %v2935 = vor.u32 1.1754944e-38, %v2934
    %v2936 = vsel %vm2933, %v2935, %v2931
    %v2937 = vmul.f32 1.0, %v2936
    %v2938 = vadd.f32 %v2702, %v2902
    %v2939 = vxor.u32 %v2938, 2147483648
    %v2940 = vmul.f32 %v2939, 1.442695
    %v2941 = vpow.pop %v2940
    %v2942 = vadd.f32 %v2941, 1.0
    %v2943 = vrcp.pop %v2942
    %v2944 = vmul.f32 %v2942, %v2943
    %v2945 = vsub.f32 1.0, %v2944
    %v2946 = vmul.f32 %v2943, %v2945
    %v2947 = vadd.f32 %v2943, %v2946
    %vm2948 = vweird.f32 %v2942
    %vm2949 = vweird.f32 %v2943
    %vm2950 = vmor %vm2948, %vm2949
    %v2951 = vsel %vm2950, %v2943, %v2947
    %v2952 = vand.u32 2147483647, %v2942
    %vm2953 = vcmp.eq.f32.partialorder %v2952, 8.507059e+37
    %v2954 = vand.u32 %v2942, 2147483648
    %v2955 = vor.u32 1.1754944e-38, %v2954
    %v2956 = vsel %vm2953, %v2955, %v2951
    %v2957 = vmul.f32 1.0, %v2956
    %v2958 = vadd.f32 %v2915, %v821
    %v2959 = vmul.f32 %v2937, %v2958
    %v2960 = vadd.f32 %v2715, %v2959
    %v2961 = vtanh.pop %v2960
    %v2962 = vsub.f32 1.0, %v2957
    %v2963 = vmul.f32 %v2962, %v2961
    %v2964 = vmul.f32 %v2957, %v2253
    %v2965 = vadd.f32 %v2963, %v2964
    %s2966 = scalar_lea.vmem [#allocation2], 6
    %2967 = vst [vmem:[%s2966] sm:$0x3] %v2965
    %v2968 = vld [vmem:[%s2] sm:$0xff]
    %v2969 = vld [vmem:[%s2 + $0x8] sm:$0xf]
    %v2970 = vld [vmem:[%s2 + $0xc] sm:$0xff]
    %v2971 = vld [vmem:[%s2 + $0x14] sm:$0xf]
    %v2972 = vld [vmem:[%s2 + $0x18] sm:$0xff]
    %v2973 = vld [vmem:[%s2 + $0x20] sm:$0xf]
    %v2974 = vld [vmem:[%s2 + $0x24] sm:$0xff]
    %v2975 = vld [vmem:[%s2 + $0x2c] sm:$0xf]
    %v2976 = vld [vmem:[%s2 + $0x30] sm:$0xff]
    %v2977 = vld [vmem:[%s2 + $0x38] sm:$0xf]
    %v2978 = vld [vmem:[%s2 + $0x3c] sm:$0xff]
    %v2979 = vld [vmem:[%s2 + $0x44] sm:$0xf]
    %v2980 = vld [vmem:[%s2 + $0x48] sm:$0xff]
    %v2981 = vld [vmem:[%s2 + $0x50] sm:$0xf]
    %v2982 = vld [vmem:[%s2 + $0x54] sm:$0xff]
    %v2983 = vld [vmem:[%s2 + $0x5c] sm:$0xf]
    %v2984 = vld [vmem:[%s2 + $0x60] sm:$0xff]
    %v2985 = vld [vmem:[%s2 + $0x68] sm:$0xf]
    %v2986 = vld [vmem:[%s2 + $0x6c] sm:$0xff]
    %v2987 = vld [vmem:[%s2 + $0x74] sm:$0xf]
    %v2988 = vld [vmem:[%s2 + $0x78] sm:$0xff]
    %v2989 = vld [vmem:[%s2 + $0x80] sm:$0xf]
    %v2990 = vld [vmem:[%s2 + $0x84] sm:$0xff]
    %v2991 = vld [vmem:[%s2 + $0x8c] sm:$0xf]
    %v2992 = vld [vmem:[%s2 + $0x90] sm:$0xff]
    %v2993 = vld [vmem:[%s2 + $0x98] sm:$0xf]
    %v2994 = vld [vmem:[%s2 + $0x9c] sm:$0xff]
    %v2995 = vld [vmem:[%s2 + $0xa4] sm:$0xf]
    %v2996 = vld [vmem:[%s2 + $0xa8] sm:$0xff]
    %v2997 = vld [vmem:[%s2 + $0xb0] sm:$0xf]
    %v2998 = vld [vmem:[%s2 + $0xb4] sm:$0xff]
    %v2999 = vld [vmem:[%s2 + $0xbc] sm:$0xf]
    %v3032 = vunpack.c.l.b16 %v2968
    %v3033 = vunpack.c.h.b16 %v2968
    %v3034 = vunpack.c.l.b16 %v2969
    %v3035 = vunpack.c.l.b16 %v2970
    %v3036 = vunpack.c.h.b16 %v2970
    %v3037 = vunpack.c.l.b16 %v2971
    %v3038 = vunpack.c.l.b16 %v2972
    %v3039 = vunpack.c.h.b16 %v2972
    %v3040 = vunpack.c.l.b16 %v2973
    %v3041 = vunpack.c.l.b16 %v2974
    %v3042 = vunpack.c.h.b16 %v2974
    %v3043 = vunpack.c.l.b16 %v2975
    %v3044 = vunpack.c.l.b16 %v2976
    %v3045 = vunpack.c.h.b16 %v2976
    %v3046 = vunpack.c.l.b16 %v2977
    %v3047 = vunpack.c.l.b16 %v2978
    %v3048 = vunpack.c.h.b16 %v2978
    %v3049 = vunpack.c.l.b16 %v2979
    %v3050 = vunpack.c.l.b16 %v2980
    %v3051 = vunpack.c.h.b16 %v2980
    %v3052 = vunpack.c.l.b16 %v2981
    %v3053 = vunpack.c.l.b16 %v2982
    %v3054 = vunpack.c.h.b16 %v2982
    %v3055 = vunpack.c.l.b16 %v2983
    %v3056 = vunpack.c.l.b16 %v2984
    %v3057 = vunpack.c.h.b16 %v2984
    %v3058 = vunpack.c.l.b16 %v2985
    %v3059 = vunpack.c.l.b16 %v2986
    %v3060 = vunpack.c.h.b16 %v2986
    %v3061 = vunpack.c.l.b16 %v2987
    %v3062 = vunpack.c.l.b16 %v2988
    %v3063 = vunpack.c.h.b16 %v2988
    %v3064 = vunpack.c.l.b16 %v2989
    %v3065 = vunpack.c.l.b16 %v2990
    %v3066 = vunpack.c.h.b16 %v2990
    %v3067 = vunpack.c.l.b16 %v2991
    %v3068 = vunpack.c.l.b16 %v2992
    %v3069 = vunpack.c.h.b16 %v2992
    %v3070 = vunpack.c.l.b16 %v2993
    %v3071 = vunpack.c.l.b16 %v2994
    %v3072 = vunpack.c.h.b16 %v2994
    %v3073 = vunpack.c.l.b16 %v2995
    %v3074 = vunpack.c.l.b16 %v2996
    %v3075 = vunpack.c.h.b16 %v2996
    %v3076 = vunpack.c.l.b16 %v2997
    %v3077 = vunpack.c.l.b16 %v2998
    %v3078 = vunpack.c.h.b16 %v2998
    %v3079 = vunpack.c.l.b16 %v2999
    %v3080 = vpack.c.b16 %v3035, %v3032
    %v3081 = vpack.c.b16 %v3036, %v3033
    %v3082 = vpack.c.b16 %v3037, %v3034
    %v3083 = vpack.c.b16 %v3041, %v3038
    %v3084 = vpack.c.b16 %v3042, %v3039
    %v3085 = vpack.c.b16 %v3043, %v3040
    %v3086 = vpack.c.b16 %v3047, %v3044
    %v3087 = vpack.c.b16 %v3048, %v3045
    %v3088 = vpack.c.b16 %v3049, %v3046
    %v3089 = vpack.c.b16 %v3053, %v3050
    %v3090 = vpack.c.b16 %v3054, %v3051
    %v3091 = vpack.c.b16 %v3055, %v3052
    %v3092 = vpack.c.b16 %v3059, %v3056
    %v3093 = vpack.c.b16 %v3060, %v3057
    %v3094 = vpack.c.b16 %v3061, %v3058
    %v3095 = vpack.c.b16 %v3065, %v3062
    %v3096 = vpack.c.b16 %v3066, %v3063
    %v3097 = vpack.c.b16 %v3067, %v3064
    %v3098 = vpack.c.b16 %v3071, %v3068
    %v3099 = vpack.c.b16 %v3072, %v3069
    %v3100 = vpack.c.b16 %v3073, %v3070
    %v3101 = vpack.c.b16 %v3077, %v3074
    %v3102 = vpack.c.b16 %v3078, %v3075
    %v3103 = vpack.c.b16 %v3079, %v3076
    %3128 = vmatpush.bf16.msra.mxu0 %v3101
    %3129 = vmatpush.bf16.msra.mxu0 %v3098
    %3130 = vmatpush.bf16.msra.mxu0 %v3095
    %3131 = vmatpush.bf16.msra.mxu0 %v3092
    %3132 = vmatpush.bf16.msra.mxu0 %v3089
    %3133 = vmatpush.bf16.msra.mxu0 %v3086
    %3134 = vmatpush.bf16.msra.mxu0 %v3083
    %3135 = vmatpush.bf16.msra.mxu0 %v3080
    %3136 = vmatmul.bf16.gmra.mxu0 %v2549
    %v3137 = vpop.f32.mrf.mxu0
    %v3138 = vadd.f32 0.0, %v3137
    %v3139 = vpop.f32.mrf.mxu0
    %3140 = vdwg.mxu0
    %3141 = vmatpush.bf16.msra.mxu0 %v3102
    %3142 = vmatpush.bf16.msra.mxu0 %v3099
    %3143 = vmatpush.bf16.msra.mxu0 %v3096
    %3144 = vmatpush.bf16.msra.mxu0 %v3093
    %3145 = vmatpush.bf16.msra.mxu0 %v3090
    %3146 = vmatpush.bf16.msra.mxu0 %v3087
    %3147 = vmatpush.bf16.msra.mxu0 %v3084
    %3148 = vmatpush.bf16.msra.mxu0 %v3081
    %3149 = vmatmul.bf16.gmra.mxu0 %v2549
    %v3150 = vpop.f32.mrf.mxu0
    %v3151 = vadd.f32 0.0, %v3150
    %v3152 = vpop.f32.mrf.mxu0
    %3153 = vdwg.mxu0
    %3154 = vmatpush.bf16.msra.mxu0 %v3103
    %3155 = vmatpush.bf16.msra.mxu0 %v3100
    %3156 = vmatpush.bf16.msra.mxu0 %v3097
    %3157 = vmatpush.bf16.msra.mxu0 %v3094
    %3158 = vmatpush.bf16.msra.mxu0 %v3091
    %3159 = vmatpush.bf16.msra.mxu0 %v3088
    %3160 = vmatpush.bf16.msra.mxu0 %v3085
    %3161 = vmatpush.bf16.msra.mxu0 %v3082
    %3162 = vmatmul.bf16.gmra.mxu0 %v2549
    %v3163 = vpop.f32.mrf.mxu0
    %v3164 = vadd.f32 0.0, %v3163
    %v3165 = vpop.f32.mrf.mxu0
    %3166 = vdwg.mxu0
    %v3167 = vadd.f32 %v91, %v3138
    %v3168 = vxor.u32 %v3167, 2147483648
    %v3169 = vmul.f32 %v3168, 1.442695
    %v3170 = vpow.pop %v3169
    %v3171 = vadd.f32 %v3170, 1.0
    %v3172 = vrcp.pop %v3171
    %v3173 = vmul.f32 %v3171, %v3172
    %v3174 = vsub.f32 1.0, %v3173
    %v3175 = vmul.f32 %v3172, %v3174
    %v3176 = vadd.f32 %v3172, %v3175
    %vm3177 = vweird.f32 %v3171
    %vm3178 = vweird.f32 %v3172
    %vm3179 = vmor %vm3177, %vm3178
    %v3180 = vsel %vm3179, %v3172, %v3176
    %v3181 = vand.u32 2147483647, %v3171
    %vm3182 = vcmp.eq.f32.partialorder %v3181, 8.507059e+37
    %v3183 = vand.u32 %v3171, 2147483648
    %v3184 = vor.u32 1.1754944e-38, %v3183
    %v3185 = vsel %vm3182, %v3184, %v3180
    %v3186 = vmul.f32 1.0, %v3185
    %v3187 = vadd.f32 %v105, %v3151
    %v3188 = vxor.u32 %v3187, 2147483648
    %v3189 = vmul.f32 %v3188, 1.442695
    %v3190 = vpow.pop %v3189
    %v3191 = vadd.f32 %v3190, 1.0
    %v3192 = vrcp.pop %v3191
    %v3193 = vmul.f32 %v3191, %v3192
    %v3194 = vsub.f32 1.0, %v3193
    %v3195 = vmul.f32 %v3192, %v3194
    %v3196 = vadd.f32 %v3192, %v3195
    %vm3197 = vweird.f32 %v3191
    %vm3198 = vweird.f32 %v3192
    %vm3199 = vmor %vm3197, %vm3198
    %v3200 = vsel %vm3199, %v3192, %v3196
    %v3201 = vand.u32 2147483647, %v3191
    %vm3202 = vcmp.eq.f32.partialorder %v3201, 8.507059e+37
    %v3203 = vand.u32 %v3191, 2147483648
    %v3204 = vor.u32 1.1754944e-38, %v3203
    %v3205 = vsel %vm3202, %v3204, %v3200
    %v3206 = vmul.f32 1.0, %v3205
    %v3207 = vadd.f32 %v3164, %v364
    %v3208 = vmul.f32 %v3186, %v3207
    %v3209 = vadd.f32 %v119, %v3208
    %v3210 = vtanh.pop %v3209
    %v3211 = vsub.f32 1.0, %v3206
    %v3212 = vmul.f32 %v3211, %v3210
    %v3214 = vrot.slane %v2514, 6
    %v3216 = vmul.f32 %v3206, %v3214
    %v3217 = vadd.f32 %v3212, %v3216
    %v3218 = vpack.c.bf16 %v3217, %v3217
    %v3219 = vld [vmem:[%s5] sm:$0xff]
    %v3220 = vld [vmem:[%s5 + $0x8] sm:$0xf]
    %v3221 = vld [vmem:[%s5 + $0xc] sm:$0xff]
    %v3222 = vld [vmem:[%s5 + $0x14] sm:$0xf]
    %v3223 = vld [vmem:[%s5 + $0x18] sm:$0xff]
    %v3224 = vld [vmem:[%s5 + $0x20] sm:$0xf]
    %v3225 = vld [vmem:[%s5 + $0x24] sm:$0xff]
    %v3226 = vld [vmem:[%s5 + $0x2c] sm:$0xf]
    %v3227 = vld [vmem:[%s5 + $0x30] sm:$0xff]
    %v3228 = vld [vmem:[%s5 + $0x38] sm:$0xf]
    %v3229 = vld [vmem:[%s5 + $0x3c] sm:$0xff]
    %v3230 = vld [vmem:[%s5 + $0x44] sm:$0xf]
    %v3231 = vld [vmem:[%s5 + $0x48] sm:$0xff]
    %v3232 = vld [vmem:[%s5 + $0x50] sm:$0xf]
    %v3233 = vld [vmem:[%s5 + $0x54] sm:$0xff]
    %v3234 = vld [vmem:[%s5 + $0x5c] sm:$0xf]
    %v3235 = vld [vmem:[%s5 + $0x60] sm:$0xff]
    %v3236 = vld [vmem:[%s5 + $0x68] sm:$0xf]
    %v3237 = vld [vmem:[%s5 + $0x6c] sm:$0xff]
    %v3238 = vld [vmem:[%s5 + $0x74] sm:$0xf]
    %v3239 = vld [vmem:[%s5 + $0x78] sm:$0xff]
    %v3240 = vld [vmem:[%s5 + $0x80] sm:$0xf]
    %v3241 = vld [vmem:[%s5 + $0x84] sm:$0xff]
    %v3242 = vld [vmem:[%s5 + $0x8c] sm:$0xf]
    %v3243 = vld [vmem:[%s5 + $0x90] sm:$0xff]
    %v3244 = vld [vmem:[%s5 + $0x98] sm:$0xf]
    %v3245 = vld [vmem:[%s5 + $0x9c] sm:$0xff]
    %v3246 = vld [vmem:[%s5 + $0xa4] sm:$0xf]
    %v3247 = vld [vmem:[%s5 + $0xa8] sm:$0xff]
    %v3248 = vld [vmem:[%s5 + $0xb0] sm:$0xf]
    %v3249 = vld [vmem:[%s5 + $0xb4] sm:$0xff]
    %v3250 = vld [vmem:[%s5 + $0xbc] sm:$0xf]
    %v3283 = vunpack.c.l.b16 %v3219
    %v3284 = vunpack.c.h.b16 %v3219
    %v3285 = vunpack.c.l.b16 %v3220
    %v3286 = vunpack.c.l.b16 %v3221
    %v3287 = vunpack.c.h.b16 %v3221
    %v3288 = vunpack.c.l.b16 %v3222
    %v3289 = vunpack.c.l.b16 %v3223
    %v3290 = vunpack.c.h.b16 %v3223
    %v3291 = vunpack.c.l.b16 %v3224
    %v3292 = vunpack.c.l.b16 %v3225
    %v3293 = vunpack.c.h.b16 %v3225
    %v3294 = vunpack.c.l.b16 %v3226
    %v3295 = vunpack.c.l.b16 %v3227
    %v3296 = vunpack.c.h.b16 %v3227
    %v3297 = vunpack.c.l.b16 %v3228
    %v3298 = vunpack.c.l.b16 %v3229
    %v3299 = vunpack.c.h.b16 %v3229
    %v3300 = vunpack.c.l.b16 %v3230
    %v3301 = vunpack.c.l.b16 %v3231
    %v3302 = vunpack.c.h.b16 %v3231
    %v3303 = vunpack.c.l.b16 %v3232
    %v3304 = vunpack.c.l.b16 %v3233
    %v3305 = vunpack.c.h.b16 %v3233
    %v3306 = vunpack.c.l.b16 %v3234
    %v3307 = vunpack.c.l.b16 %v3235
    %v3308 = vunpack.c.h.b16 %v3235
    %v3309 = vunpack.c.l.b16 %v3236
    %v3310 = vunpack.c.l.b16 %v3237
    %v3311 = vunpack.c.h.b16 %v3237
    %v3312 = vunpack.c.l.b16 %v3238
    %v3313 = vunpack.c.l.b16 %v3239
    %v3314 = vunpack.c.h.b16 %v3239
    %v3315 = vunpack.c.l.b16 %v3240
    %v3316 = vunpack.c.l.b16 %v3241
    %v3317 = vunpack.c.h.b16 %v3241
    %v3318 = vunpack.c.l.b16 %v3242
    %v3319 = vunpack.c.l.b16 %v3243
    %v3320 = vunpack.c.h.b16 %v3243
    %v3321 = vunpack.c.l.b16 %v3244
    %v3322 = vunpack.c.l.b16 %v3245
    %v3323 = vunpack.c.h.b16 %v3245
    %v3324 = vunpack.c.l.b16 %v3246
    %v3325 = vunpack.c.l.b16 %v3247
    %v3326 = vunpack.c.h.b16 %v3247
    %v3327 = vunpack.c.l.b16 %v3248
    %v3328 = vunpack.c.l.b16 %v3249
    %v3329 = vunpack.c.h.b16 %v3249
    %v3330 = vunpack.c.l.b16 %v3250
    %v3331 = vpack.c.b16 %v3286, %v3283
    %v3332 = vpack.c.b16 %v3287, %v3284
    %v3333 = vpack.c.b16 %v3288, %v3285
    %v3334 = vpack.c.b16 %v3292, %v3289
    %v3335 = vpack.c.b16 %v3293, %v3290
    %v3336 = vpack.c.b16 %v3294, %v3291
    %v3337 = vpack.c.b16 %v3298, %v3295
    %v3338 = vpack.c.b16 %v3299, %v3296
    %v3339 = vpack.c.b16 %v3300, %v3297
    %v3340 = vpack.c.b16 %v3304, %v3301
    %v3341 = vpack.c.b16 %v3305, %v3302
    %v3342 = vpack.c.b16 %v3306, %v3303
    %v3343 = vpack.c.b16 %v3310, %v3307
    %v3344 = vpack.c.b16 %v3311, %v3308
    %v3345 = vpack.c.b16 %v3312, %v3309
    %v3346 = vpack.c.b16 %v3316, %v3313
    %v3347 = vpack.c.b16 %v3317, %v3314
    %v3348 = vpack.c.b16 %v3318, %v3315
    %v3349 = vpack.c.b16 %v3322, %v3319
    %v3350 = vpack.c.b16 %v3323, %v3320
    %v3351 = vpack.c.b16 %v3324, %v3321
    %v3352 = vpack.c.b16 %v3328, %v3325
    %v3353 = vpack.c.b16 %v3329, %v3326
    %v3354 = vpack.c.b16 %v3330, %v3327
    %3379 = vmatpush.bf16.msra.mxu0 %v3352
    %3380 = vmatpush.bf16.msra.mxu0 %v3349
    %3381 = vmatpush.bf16.msra.mxu0 %v3346
    %3382 = vmatpush.bf16.msra.mxu0 %v3343
    %3383 = vmatpush.bf16.msra.mxu0 %v3340
    %3384 = vmatpush.bf16.msra.mxu0 %v3337
    %3385 = vmatpush.bf16.msra.mxu0 %v3334
    %3386 = vmatpush.bf16.msra.mxu0 %v3331
    %3387 = vmatmul.bf16.gmra.mxu0 %v3218
    %v3388 = vpop.f32.mrf.mxu0
    %v3389 = vadd.f32 %v408, %v3388
    %v3390 = vpop.f32.mrf.mxu0
    %3391 = vdwg.mxu0
    %3392 = vmatpush.bf16.msra.mxu0 %v3353
    %3393 = vmatpush.bf16.msra.mxu0 %v3350
    %3394 = vmatpush.bf16.msra.mxu0 %v3347
    %3395 = vmatpush.bf16.msra.mxu0 %v3344
    %3396 = vmatpush.bf16.msra.mxu0 %v3341
    %3397 = vmatpush.bf16.msra.mxu0 %v3338
    %3398 = vmatpush.bf16.msra.mxu0 %v3335
    %3399 = vmatpush.bf16.msra.mxu0 %v3332
    %3400 = vmatmul.bf16.gmra.mxu0 %v3218
    %v3401 = vpop.f32.mrf.mxu0
    %v3402 = vadd.f32 %v409, %v3401
    %v3403 = vpop.f32.mrf.mxu0
    %3404 = vdwg.mxu0
    %3405 = vmatpush.bf16.msra.mxu0 %v3354
    %3406 = vmatpush.bf16.msra.mxu0 %v3351
    %3407 = vmatpush.bf16.msra.mxu0 %v3348
    %3408 = vmatpush.bf16.msra.mxu0 %v3345
    %3409 = vmatpush.bf16.msra.mxu0 %v3342
    %3410 = vmatpush.bf16.msra.mxu0 %v3339
    %3411 = vmatpush.bf16.msra.mxu0 %v3336
    %3412 = vmatpush.bf16.msra.mxu0 %v3333
    %3413 = vmatmul.bf16.gmra.mxu0 %v3218
    %v3414 = vpop.f32.mrf.mxu0
    %v3415 = vadd.f32 %v410, %v3414
    %v3416 = vpop.f32.mrf.mxu0
    %3417 = vdwg.mxu0
    %v3418 = vpack.c.bf16 %v2965, %v2965
    %v3419 = vld [vmem:[%s6] sm:$0xff]
    %v3420 = vld [vmem:[%s6 + $0x8] sm:$0xf]
    %v3421 = vld [vmem:[%s6 + $0xc] sm:$0xff]
    %v3422 = vld [vmem:[%s6 + $0x14] sm:$0xf]
    %v3423 = vld [vmem:[%s6 + $0x18] sm:$0xff]
    %v3424 = vld [vmem:[%s6 + $0x20] sm:$0xf]
    %v3425 = vld [vmem:[%s6 + $0x24] sm:$0xff]
    %v3426 = vld [vmem:[%s6 + $0x2c] sm:$0xf]
    %v3427 = vld [vmem:[%s6 + $0x30] sm:$0xff]
    %v3428 = vld [vmem:[%s6 + $0x38] sm:$0xf]
    %v3429 = vld [vmem:[%s6 + $0x3c] sm:$0xff]
    %v3430 = vld [vmem:[%s6 + $0x44] sm:$0xf]
    %v3431 = vld [vmem:[%s6 + $0x48] sm:$0xff]
    %v3432 = vld [vmem:[%s6 + $0x50] sm:$0xf]
    %v3433 = vld [vmem:[%s6 + $0x54] sm:$0xff]
    %v3434 = vld [vmem:[%s6 + $0x5c] sm:$0xf]
    %v3435 = vld [vmem:[%s6 + $0x60] sm:$0xff]
    %v3436 = vld [vmem:[%s6 + $0x68] sm:$0xf]
    %v3437 = vld [vmem:[%s6 + $0x6c] sm:$0xff]
    %v3438 = vld [vmem:[%s6 + $0x74] sm:$0xf]
    %v3439 = vld [vmem:[%s6 + $0x78] sm:$0xff]
    %v3440 = vld [vmem:[%s6 + $0x80] sm:$0xf]
    %v3441 = vld [vmem:[%s6 + $0x84] sm:$0xff]
    %v3442 = vld [vmem:[%s6 + $0x8c] sm:$0xf]
    %v3443 = vld [vmem:[%s6 + $0x90] sm:$0xff]
    %v3444 = vld [vmem:[%s6 + $0x98] sm:$0xf]
    %v3445 = vld [vmem:[%s6 + $0x9c] sm:$0xff]
    %v3446 = vld [vmem:[%s6 + $0xa4] sm:$0xf]
    %v3447 = vld [vmem:[%s6 + $0xa8] sm:$0xff]
    %v3448 = vld [vmem:[%s6 + $0xb0] sm:$0xf]
    %v3449 = vld [vmem:[%s6 + $0xb4] sm:$0xff]
    %v3450 = vld [vmem:[%s6 + $0xbc] sm:$0xf]
    %v3483 = vunpack.c.l.b16 %v3419
    %v3484 = vunpack.c.h.b16 %v3419
    %v3485 = vunpack.c.l.b16 %v3420
    %v3486 = vunpack.c.l.b16 %v3421
    %v3487 = vunpack.c.h.b16 %v3421
    %v3488 = vunpack.c.l.b16 %v3422
    %v3489 = vunpack.c.l.b16 %v3423
    %v3490 = vunpack.c.h.b16 %v3423
    %v3491 = vunpack.c.l.b16 %v3424
    %v3492 = vunpack.c.l.b16 %v3425
    %v3493 = vunpack.c.h.b16 %v3425
    %v3494 = vunpack.c.l.b16 %v3426
    %v3495 = vunpack.c.l.b16 %v3427
    %v3496 = vunpack.c.h.b16 %v3427
    %v3497 = vunpack.c.l.b16 %v3428
    %v3498 = vunpack.c.l.b16 %v3429
    %v3499 = vunpack.c.h.b16 %v3429
    %v3500 = vunpack.c.l.b16 %v3430
    %v3501 = vunpack.c.l.b16 %v3431
    %v3502 = vunpack.c.h.b16 %v3431
    %v3503 = vunpack.c.l.b16 %v3432
    %v3504 = vunpack.c.l.b16 %v3433
    %v3505 = vunpack.c.h.b16 %v3433
    %v3506 = vunpack.c.l.b16 %v3434
    %v3507 = vunpack.c.l.b16 %v3435
    %v3508 = vunpack.c.h.b16 %v3435
    %v3509 = vunpack.c.l.b16 %v3436
    %v3510 = vunpack.c.l.b16 %v3437
    %v3511 = vunpack.c.h.b16 %v3437
    %v3512 = vunpack.c.l.b16 %v3438
    %v3513 = vunpack.c.l.b16 %v3439
    %v3514 = vunpack.c.h.b16 %v3439
    %v3515 = vunpack.c.l.b16 %v3440
    %v3516 = vunpack.c.l.b16 %v3441
    %v3517 = vunpack.c.h.b16 %v3441
    %v3518 = vunpack.c.l.b16 %v3442
    %v3519 = vunpack.c.l.b16 %v3443
    %v3520 = vunpack.c.h.b16 %v3443
    %v3521 = vunpack.c.l.b16 %v3444
    %v3522 = vunpack.c.l.b16 %v3445
    %v3523 = vunpack.c.h.b16 %v3445
    %v3524 = vunpack.c.l.b16 %v3446
    %v3525 = vunpack.c.l.b16 %v3447
    %v3526 = vunpack.c.h.b16 %v3447
    %v3527 = vunpack.c.l.b16 %v3448
    %v3528 = vunpack.c.l.b16 %v3449
    %v3529 = vunpack.c.h.b16 %v3449
    %v3530 = vunpack.c.l.b16 %v3450
    %v3531 = vpack.c.b16 %v3486, %v3483
    %v3532 = vpack.c.b16 %v3487, %v3484
    %v3533 = vpack.c.b16 %v3488, %v3485
    %v3534 = vpack.c.b16 %v3492, %v3489
    %v3535 = vpack.c.b16 %v3493, %v3490
    %v3536 = vpack.c.b16 %v3494, %v3491
    %v3537 = vpack.c.b16 %v3498, %v3495
    %v3538 = vpack.c.b16 %v3499, %v3496
    %v3539 = vpack.c.b16 %v3500, %v3497
    %v3540 = vpack.c.b16 %v3504, %v3501
    %v3541 = vpack.c.b16 %v3505, %v3502
    %v3542 = vpack.c.b16 %v3506, %v3503
    %v3543 = vpack.c.b16 %v3510, %v3507
    %v3544 = vpack.c.b16 %v3511, %v3508
    %v3545 = vpack.c.b16 %v3512, %v3509
    %v3546 = vpack.c.b16 %v3516, %v3513
    %v3547 = vpack.c.b16 %v3517, %v3514
    %v3548 = vpack.c.b16 %v3518, %v3515
    %v3549 = vpack.c.b16 %v3522, %v3519
    %v3550 = vpack.c.b16 %v3523, %v3520
    %v3551 = vpack.c.b16 %v3524, %v3521
    %v3552 = vpack.c.b16 %v3528, %v3525
    %v3553 = vpack.c.b16 %v3529, %v3526
    %v3554 = vpack.c.b16 %v3530, %v3527
    %3579 = vmatpush.bf16.msra.mxu0 %v3552
    %3580 = vmatpush.bf16.msra.mxu0 %v3549
    %3581 = vmatpush.bf16.msra.mxu0 %v3546
    %3582 = vmatpush.bf16.msra.mxu0 %v3543
    %3583 = vmatpush.bf16.msra.mxu0 %v3540
    %3584 = vmatpush.bf16.msra.mxu0 %v3537
    %3585 = vmatpush.bf16.msra.mxu0 %v3534
    %3586 = vmatpush.bf16.msra.mxu0 %v3531
    %3587 = vmatmul.bf16.gmra.mxu0 %v3418
    %v3588 = vpop.f32.mrf.mxu0
    %v3589 = vadd.f32 0.0, %v3588
    %v3590 = vpop.f32.mrf.mxu0
    %3591 = vdwg.mxu0
    %3592 = vmatpush.bf16.msra.mxu0 %v3553
    %3593 = vmatpush.bf16.msra.mxu0 %v3550
    %3594 = vmatpush.bf16.msra.mxu0 %v3547
    %3595 = vmatpush.bf16.msra.mxu0 %v3544
    %3596 = vmatpush.bf16.msra.mxu0 %v3541
    %3597 = vmatpush.bf16.msra.mxu0 %v3538
    %3598 = vmatpush.bf16.msra.mxu0 %v3535
    %3599 = vmatpush.bf16.msra.mxu0 %v3532
    %3600 = vmatmul.bf16.gmra.mxu0 %v3418
    %v3601 = vpop.f32.mrf.mxu0
    %v3602 = vadd.f32 0.0, %v3601
    %v3603 = vpop.f32.mrf.mxu0
    %3604 = vdwg.mxu0
    %3605 = vmatpush.bf16.msra.mxu0 %v3554
    %3606 = vmatpush.bf16.msra.mxu0 %v3551
    %3607 = vmatpush.bf16.msra.mxu0 %v3548
    %3608 = vmatpush.bf16.msra.mxu0 %v3545
    %3609 = vmatpush.bf16.msra.mxu0 %v3542
    %3610 = vmatpush.bf16.msra.mxu0 %v3539
    %3611 = vmatpush.bf16.msra.mxu0 %v3536
    %3612 = vmatpush.bf16.msra.mxu0 %v3533
    %3613 = vmatmul.bf16.gmra.mxu0 %v3418
    %v3614 = vpop.f32.mrf.mxu0
    %v3615 = vadd.f32 0.0, %v3614
    %v3616 = vpop.f32.mrf.mxu0
    %3617 = vdwg.mxu0
    %v3618 = vadd.f32 %v3389, %v3589
    %v3619 = vxor.u32 %v3618, 2147483648
    %v3620 = vmul.f32 %v3619, 1.442695
    %v3621 = vpow.pop %v3620
    %v3622 = vadd.f32 %v3621, 1.0
    %v3623 = vrcp.pop %v3622
    %v3624 = vmul.f32 %v3622, %v3623
    %v3625 = vsub.f32 1.0, %v3624
    %v3626 = vmul.f32 %v3623, %v3625
    %v3627 = vadd.f32 %v3623, %v3626
    %vm3628 = vweird.f32 %v3622
    %vm3629 = vweird.f32 %v3623
    %vm3630 = vmor %vm3628, %vm3629
    %v3631 = vsel %vm3630, %v3623, %v3627
    %v3632 = vand.u32 2147483647, %v3622
    %vm3633 = vcmp.eq.f32.partialorder %v3632, 8.507059e+37
    %v3634 = vand.u32 %v3622, 2147483648
    %v3635 = vor.u32 1.1754944e-38, %v3634
    %v3636 = vsel %vm3633, %v3635, %v3631
    %v3637 = vmul.f32 1.0, %v3636
    %v3638 = vadd.f32 %v3402, %v3602
    %v3639 = vxor.u32 %v3638, 2147483648
    %v3640 = vmul.f32 %v3639, 1.442695
    %v3641 = vpow.pop %v3640
    %v3642 = vadd.f32 %v3641, 1.0
    %v3643 = vrcp.pop %v3642
    %v3644 = vmul.f32 %v3642, %v3643
    %v3645 = vsub.f32 1.0, %v3644
    %v3646 = vmul.f32 %v3643, %v3645
    %v3647 = vadd.f32 %v3643, %v3646
    %vm3648 = vweird.f32 %v3642
    %vm3649 = vweird.f32 %v3643
    %vm3650 = vmor %vm3648, %vm3649
    %v3651 = vsel %vm3650, %v3643, %v3647
    %v3652 = vand.u32 2147483647, %v3642
    %vm3653 = vcmp.eq.f32.partialorder %v3652, 8.507059e+37
    %v3654 = vand.u32 %v3642, 2147483648
    %v3655 = vor.u32 1.1754944e-38, %v3654
    %v3656 = vsel %vm3653, %v3655, %v3651
    %v3657 = vmul.f32 1.0, %v3656
    %v3658 = vadd.f32 %v3615, %v821
    %v3659 = vmul.f32 %v3637, %v3658
    %v3660 = vadd.f32 %v3415, %v3659
    %v3661 = vtanh.pop %v3660
    %v3662 = vsub.f32 1.0, %v3657
    %v3663 = vmul.f32 %v3662, %v3661
    %v3664 = vmul.f32 %v3657, %v2965
    %v3665 = vadd.f32 %v3663, %v3664
    %s3666 = scalar_lea.vmem [#allocation2], 8
    %3667 = vst [vmem:[%s3666] sm:$0x3] %v3665
    %v3668 = vld [vmem:[%s2] sm:$0xff]
    %v3669 = vld [vmem:[%s2 + $0x8] sm:$0xf]
    %v3670 = vld [vmem:[%s2 + $0xc] sm:$0xff]
    %v3671 = vld [vmem:[%s2 + $0x14] sm:$0xf]
    %v3672 = vld [vmem:[%s2 + $0x18] sm:$0xff]
    %v3673 = vld [vmem:[%s2 + $0x20] sm:$0xf]
    %v3674 = vld [vmem:[%s2 + $0x24] sm:$0xff]
    %v3675 = vld [vmem:[%s2 + $0x2c] sm:$0xf]
    %v3676 = vld [vmem:[%s2 + $0x30] sm:$0xff]
    %v3677 = vld [vmem:[%s2 + $0x38] sm:$0xf]
    %v3678 = vld [vmem:[%s2 + $0x3c] sm:$0xff]
    %v3679 = vld [vmem:[%s2 + $0x44] sm:$0xf]
    %v3680 = vld [vmem:[%s2 + $0x48] sm:$0xff]
    %v3681 = vld [vmem:[%s2 + $0x50] sm:$0xf]
    %v3682 = vld [vmem:[%s2 + $0x54] sm:$0xff]
    %v3683 = vld [vmem:[%s2 + $0x5c] sm:$0xf]
    %v3684 = vld [vmem:[%s2 + $0x60] sm:$0xff]
    %v3685 = vld [vmem:[%s2 + $0x68] sm:$0xf]
    %v3686 = vld [vmem:[%s2 + $0x6c] sm:$0xff]
    %v3687 = vld [vmem:[%s2 + $0x74] sm:$0xf]
    %v3688 = vld [vmem:[%s2 + $0x78] sm:$0xff]
    %v3689 = vld [vmem:[%s2 + $0x80] sm:$0xf]
    %v3690 = vld [vmem:[%s2 + $0x84] sm:$0xff]
    %v3691 = vld [vmem:[%s2 + $0x8c] sm:$0xf]
    %v3692 = vld [vmem:[%s2 + $0x90] sm:$0xff]
    %v3693 = vld [vmem:[%s2 + $0x98] sm:$0xf]
    %v3694 = vld [vmem:[%s2 + $0x9c] sm:$0xff]
    %v3695 = vld [vmem:[%s2 + $0xa4] sm:$0xf]
    %v3696 = vld [vmem:[%s2 + $0xa8] sm:$0xff]
    %v3697 = vld [vmem:[%s2 + $0xb0] sm:$0xf]
    %v3698 = vld [vmem:[%s2 + $0xb4] sm:$0xff]
    %v3699 = vld [vmem:[%s2 + $0xbc] sm:$0xf]
    %v3732 = vunpack.c.l.b16 %v3668
    %v3733 = vunpack.c.h.b16 %v3668
    %v3734 = vunpack.c.l.b16 %v3669
    %v3735 = vunpack.c.l.b16 %v3670
    %v3736 = vunpack.c.h.b16 %v3670
    %v3737 = vunpack.c.l.b16 %v3671
    %v3738 = vunpack.c.l.b16 %v3672
    %v3739 = vunpack.c.h.b16 %v3672
    %v3740 = vunpack.c.l.b16 %v3673
    %v3741 = vunpack.c.l.b16 %v3674
    %v3742 = vunpack.c.h.b16 %v3674
    %v3743 = vunpack.c.l.b16 %v3675
    %v3744 = vunpack.c.l.b16 %v3676
    %v3745 = vunpack.c.h.b16 %v3676
    %v3746 = vunpack.c.l.b16 %v3677
    %v3747 = vunpack.c.l.b16 %v3678
    %v3748 = vunpack.c.h.b16 %v3678
    %v3749 = vunpack.c.l.b16 %v3679
    %v3750 = vunpack.c.l.b16 %v3680
    %v3751 = vunpack.c.h.b16 %v3680
    %v3752 = vunpack.c.l.b16 %v3681
    %v3753 = vunpack.c.l.b16 %v3682
    %v3754 = vunpack.c.h.b16 %v3682
    %v3755 = vunpack.c.l.b16 %v3683
    %v3756 = vunpack.c.l.b16 %v3684
    %v3757 = vunpack.c.h.b16 %v3684
    %v3758 = vunpack.c.l.b16 %v3685
    %v3759 = vunpack.c.l.b16 %v3686
    %v3760 = vunpack.c.h.b16 %v3686
    %v3761 = vunpack.c.l.b16 %v3687
    %v3762 = vunpack.c.l.b16 %v3688
    %v3763 = vunpack.c.h.b16 %v3688
    %v3764 = vunpack.c.l.b16 %v3689
    %v3765 = vunpack.c.l.b16 %v3690
    %v3766 = vunpack.c.h.b16 %v3690
    %v3767 = vunpack.c.l.b16 %v3691
    %v3768 = vunpack.c.l.b16 %v3692
    %v3769 = vunpack.c.h.b16 %v3692
    %v3770 = vunpack.c.l.b16 %v3693
    %v3771 = vunpack.c.l.b16 %v3694
    %v3772 = vunpack.c.h.b16 %v3694
    %v3773 = vunpack.c.l.b16 %v3695
    %v3774 = vunpack.c.l.b16 %v3696
    %v3775 = vunpack.c.h.b16 %v3696
    %v3776 = vunpack.c.l.b16 %v3697
    %v3777 = vunpack.c.l.b16 %v3698
    %v3778 = vunpack.c.h.b16 %v3698
    %v3779 = vunpack.c.l.b16 %v3699
    %v3780 = vpack.c.b16 %v3735, %v3732
    %v3781 = vpack.c.b16 %v3736, %v3733
    %v3782 = vpack.c.b16 %v3737, %v3734
    %v3783 = vpack.c.b16 %v3741, %v3738
    %v3784 = vpack.c.b16 %v3742, %v3739
    %v3785 = vpack.c.b16 %v3743, %v3740
    %v3786 = vpack.c.b16 %v3747, %v3744
    %v3787 = vpack.c.b16 %v3748, %v3745
    %v3788 = vpack.c.b16 %v3749, %v3746
    %v3789 = vpack.c.b16 %v3753, %v3750
    %v3790 = vpack.c.b16 %v3754, %v3751
    %v3791 = vpack.c.b16 %v3755, %v3752
    %v3792 = vpack.c.b16 %v3759, %v3756
    %v3793 = vpack.c.b16 %v3760, %v3757
    %v3794 = vpack.c.b16 %v3761, %v3758
    %v3795 = vpack.c.b16 %v3765, %v3762
    %v3796 = vpack.c.b16 %v3766, %v3763
    %v3797 = vpack.c.b16 %v3767, %v3764
    %v3798 = vpack.c.b16 %v3771, %v3768
    %v3799 = vpack.c.b16 %v3772, %v3769
    %v3800 = vpack.c.b16 %v3773, %v3770
    %v3801 = vpack.c.b16 %v3777, %v3774
    %v3802 = vpack.c.b16 %v3778, %v3775
    %v3803 = vpack.c.b16 %v3779, %v3776
    %3828 = vmatpush.bf16.msra.mxu0 %v3801
    %3829 = vmatpush.bf16.msra.mxu0 %v3798
    %3830 = vmatpush.bf16.msra.mxu0 %v3795
    %3831 = vmatpush.bf16.msra.mxu0 %v3792
    %3832 = vmatpush.bf16.msra.mxu0 %v3789
    %3833 = vmatpush.bf16.msra.mxu0 %v3786
    %3834 = vmatpush.bf16.msra.mxu0 %v3783
    %3835 = vmatpush.bf16.msra.mxu0 %v3780
    %3836 = vmatmul.bf16.gmra.mxu0 %v3218
    %v3837 = vpop.f32.mrf.mxu0
    %v3838 = vadd.f32 0.0, %v3837
    %v3839 = vpop.f32.mrf.mxu0
    %3840 = vdwg.mxu0
    %3841 = vmatpush.bf16.msra.mxu0 %v3802
    %3842 = vmatpush.bf16.msra.mxu0 %v3799
    %3843 = vmatpush.bf16.msra.mxu0 %v3796
    %3844 = vmatpush.bf16.msra.mxu0 %v3793
    %3845 = vmatpush.bf16.msra.mxu0 %v3790
    %3846 = vmatpush.bf16.msra.mxu0 %v3787
    %3847 = vmatpush.bf16.msra.mxu0 %v3784
    %3848 = vmatpush.bf16.msra.mxu0 %v3781
    %3849 = vmatmul.bf16.gmra.mxu0 %v3218
    %v3850 = vpop.f32.mrf.mxu0
    %v3851 = vadd.f32 0.0, %v3850
    %v3852 = vpop.f32.mrf.mxu0
    %3853 = vdwg.mxu0
    %3854 = vmatpush.bf16.msra.mxu0 %v3803
    %3855 = vmatpush.bf16.msra.mxu0 %v3800
    %3856 = vmatpush.bf16.msra.mxu0 %v3797
    %3857 = vmatpush.bf16.msra.mxu0 %v3794
    %3858 = vmatpush.bf16.msra.mxu0 %v3791
    %3859 = vmatpush.bf16.msra.mxu0 %v3788
    %3860 = vmatpush.bf16.msra.mxu0 %v3785
    %3861 = vmatpush.bf16.msra.mxu0 %v3782
    %3862 = vmatmul.bf16.gmra.mxu0 %v3218
    %v3863 = vpop.f32.mrf.mxu0
    %v3864 = vadd.f32 0.0, %v3863
    %v3865 = vpop.f32.mrf.mxu0
    %3866 = vdwg.mxu0
    %v3868 = vrot.slane %v3838, 6
    %v3870 = vadd.f32 %v91, %v3868
    %v3871 = vxor.u32 %v3870, 2147483648
    %v3872 = vmul.f32 %v3871, 1.442695
    %v3873 = vpow.pop %v3872
    %v3874 = vadd.f32 %v3873, 1.0
    %v3875 = vrcp.pop %v3874
    %v3876 = vmul.f32 %v3874, %v3875
    %v3877 = vsub.f32 1.0, %v3876
    %v3878 = vmul.f32 %v3875, %v3877
    %v3879 = vadd.f32 %v3875, %v3878
    %vm3880 = vweird.f32 %v3874
    %vm3881 = vweird.f32 %v3875
    %vm3882 = vmor %vm3880, %vm3881
    %v3883 = vsel %vm3882, %v3875, %v3879
    %v3884 = vand.u32 2147483647, %v3874
    %vm3885 = vcmp.eq.f32.partialorder %v3884, 8.507059e+37
    %v3886 = vand.u32 %v3874, 2147483648
    %v3887 = vor.u32 1.1754944e-38, %v3886
    %v3888 = vsel %vm3885, %v3887, %v3883
    %v3889 = vmul.f32 1.0, %v3888
    %v3891 = vrot.slane %v3851, 6
    %v3893 = vadd.f32 %v105, %v3891
    %v3894 = vxor.u32 %v3893, 2147483648
    %v3895 = vmul.f32 %v3894, 1.442695
    %v3896 = vpow.pop %v3895
    %v3897 = vadd.f32 %v3896, 1.0
    %v3898 = vrcp.pop %v3897
    %v3899 = vmul.f32 %v3897, %v3898
    %v3900 = vsub.f32 1.0, %v3899
    %v3901 = vmul.f32 %v3898, %v3900
    %v3902 = vadd.f32 %v3898, %v3901
    %vm3903 = vweird.f32 %v3897
    %vm3904 = vweird.f32 %v3898
    %vm3905 = vmor %vm3903, %vm3904
    %v3906 = vsel %vm3905, %v3898, %v3902
    %v3907 = vand.u32 2147483647, %v3897
    %vm3908 = vcmp.eq.f32.partialorder %v3907, 8.507059e+37
    %v3909 = vand.u32 %v3897, 2147483648
    %v3910 = vor.u32 1.1754944e-38, %v3909
    %v3911 = vsel %vm3908, %v3910, %v3906
    %v3912 = vmul.f32 1.0, %v3911
    %v3913 = vadd.f32 %v3864, %v364
    %v3915 = vrot.slane %v3913, 6
    %v3917 = vmul.f32 %v3889, %v3915
    %v3918 = vadd.f32 %v119, %v3917
    %v3919 = vtanh.pop %v3918
    %v3920 = vsub.f32 1.0, %v3912
    %v3921 = vmul.f32 %v3920, %v3919
    %v3923 = vrot.slane %v3217, 6
    %v3925 = vmul.f32 %v3912, %v3923
    %v3926 = vadd.f32 %v3921, %v3925
    %v3927 = vpack.c.bf16 %v3926, %v3926
    %v3928 = vld [vmem:[%s5] sm:$0xff]
    %v3929 = vld [vmem:[%s5 + $0x8] sm:$0xf]
    %v3930 = vld [vmem:[%s5 + $0xc] sm:$0xff]
    %v3931 = vld [vmem:[%s5 + $0x14] sm:$0xf]
    %v3932 = vld [vmem:[%s5 + $0x18] sm:$0xff]
    %v3933 = vld [vmem:[%s5 + $0x20] sm:$0xf]
    %v3934 = vld [vmem:[%s5 + $0x24] sm:$0xff]
    %v3935 = vld [vmem:[%s5 + $0x2c] sm:$0xf]
    %v3936 = vld [vmem:[%s5 + $0x30] sm:$0xff]
    %v3937 = vld [vmem:[%s5 + $0x38] sm:$0xf]
    %v3938 = vld [vmem:[%s5 + $0x3c] sm:$0xff]
    %v3939 = vld [vmem:[%s5 + $0x44] sm:$0xf]
    %v3940 = vld [vmem:[%s5 + $0x48] sm:$0xff]
    %v3941 = vld [vmem:[%s5 + $0x50] sm:$0xf]
    %v3942 = vld [vmem:[%s5 + $0x54] sm:$0xff]
    %v3943 = vld [vmem:[%s5 + $0x5c] sm:$0xf]
    %v3944 = vld [vmem:[%s5 + $0x60] sm:$0xff]
    %v3945 = vld [vmem:[%s5 + $0x68] sm:$0xf]
    %v3946 = vld [vmem:[%s5 + $0x6c] sm:$0xff]
    %v3947 = vld [vmem:[%s5 + $0x74] sm:$0xf]
    %v3948 = vld [vmem:[%s5 + $0x78] sm:$0xff]
    %v3949 = vld [vmem:[%s5 + $0x80] sm:$0xf]
    %v3950 = vld [vmem:[%s5 + $0x84] sm:$0xff]
    %v3951 = vld [vmem:[%s5 + $0x8c] sm:$0xf]
    %v3952 = vld [vmem:[%s5 + $0x90] sm:$0xff]
    %v3953 = vld [vmem:[%s5 + $0x98] sm:$0xf]
    %v3954 = vld [vmem:[%s5 + $0x9c] sm:$0xff]
    %v3955 = vld [vmem:[%s5 + $0xa4] sm:$0xf]
    %v3956 = vld [vmem:[%s5 + $0xa8] sm:$0xff]
    %v3957 = vld [vmem:[%s5 + $0xb0] sm:$0xf]
    %v3958 = vld [vmem:[%s5 + $0xb4] sm:$0xff]
    %v3959 = vld [vmem:[%s5 + $0xbc] sm:$0xf]
    %v3961 = vrot.slane %v3927, 1
    %v3995 = vunpack.c.l.b16 %v3928
    %v3996 = vunpack.c.h.b16 %v3928
    %v3997 = vunpack.c.l.b16 %v3929
    %v3998 = vunpack.c.l.b16 %v3930
    %v3999 = vunpack.c.h.b16 %v3930
    %v4000 = vunpack.c.l.b16 %v3931
    %v4001 = vunpack.c.l.b16 %v3932
    %v4002 = vunpack.c.h.b16 %v3932
    %v4003 = vunpack.c.l.b16 %v3933
    %v4004 = vunpack.c.l.b16 %v3934
    %v4005 = vunpack.c.h.b16 %v3934
    %v4006 = vunpack.c.l.b16 %v3935
    %v4007 = vunpack.c.l.b16 %v3936
    %v4008 = vunpack.c.h.b16 %v3936
    %v4009 = vunpack.c.l.b16 %v3937
    %v4010 = vunpack.c.l.b16 %v3938
    %v4011 = vunpack.c.h.b16 %v3938
    %v4012 = vunpack.c.l.b16 %v3939
    %v4013 = vunpack.c.l.b16 %v3940
    %v4014 = vunpack.c.h.b16 %v3940
    %v4015 = vunpack.c.l.b16 %v3941
    %v4016 = vunpack.c.l.b16 %v3942
    %v4017 = vunpack.c.h.b16 %v3942
    %v4018 = vunpack.c.l.b16 %v3943
    %v4019 = vunpack.c.l.b16 %v3944
    %v4020 = vunpack.c.h.b16 %v3944
    %v4021 = vunpack.c.l.b16 %v3945
    %v4022 = vunpack.c.l.b16 %v3946
    %v4023 = vunpack.c.h.b16 %v3946
    %v4024 = vunpack.c.l.b16 %v3947
    %v4025 = vunpack.c.l.b16 %v3948
    %v4026 = vunpack.c.h.b16 %v3948
    %v4027 = vunpack.c.l.b16 %v3949
    %v4028 = vunpack.c.l.b16 %v3950
    %v4029 = vunpack.c.h.b16 %v3950
    %v4030 = vunpack.c.l.b16 %v3951
    %v4031 = vunpack.c.l.b16 %v3952
    %v4032 = vunpack.c.h.b16 %v3952
    %v4033 = vunpack.c.l.b16 %v3953
    %v4034 = vunpack.c.l.b16 %v3954
    %v4035 = vunpack.c.h.b16 %v3954
    %v4036 = vunpack.c.l.b16 %v3955
    %v4037 = vunpack.c.l.b16 %v3956
    %v4038 = vunpack.c.h.b16 %v3956
    %v4039 = vunpack.c.l.b16 %v3957
    %v4040 = vunpack.c.l.b16 %v3958
    %v4041 = vunpack.c.h.b16 %v3958
    %v4042 = vunpack.c.l.b16 %v3959
    %v4043 = vpack.c.b16 %v3998, %v3995
    %v4044 = vpack.c.b16 %v3999, %v3996
    %v4045 = vpack.c.b16 %v4000, %v3997
    %v4046 = vpack.c.b16 %v4004, %v4001
    %v4047 = vpack.c.b16 %v4005, %v4002
    %v4048 = vpack.c.b16 %v4006, %v4003
    %v4049 = vpack.c.b16 %v4010, %v4007
    %v4050 = vpack.c.b16 %v4011, %v4008
    %v4051 = vpack.c.b16 %v4012, %v4009
    %v4052 = vpack.c.b16 %v4016, %v4013
    %v4053 = vpack.c.b16 %v4017, %v4014
    %v4054 = vpack.c.b16 %v4018, %v4015
    %v4055 = vpack.c.b16 %v4022, %v4019
    %v4056 = vpack.c.b16 %v4023, %v4020
    %v4057 = vpack.c.b16 %v4024, %v4021
    %v4058 = vpack.c.b16 %v4028, %v4025
    %v4059 = vpack.c.b16 %v4029, %v4026
    %v4060 = vpack.c.b16 %v4030, %v4027
    %v4061 = vpack.c.b16 %v4034, %v4031
    %v4062 = vpack.c.b16 %v4035, %v4032
    %v4063 = vpack.c.b16 %v4036, %v4033
    %v4064 = vpack.c.b16 %v4040, %v4037
    %v4065 = vpack.c.b16 %v4041, %v4038
    %v4066 = vpack.c.b16 %v4042, %v4039
    %4091 = vmatpush.bf16.msra.mxu0 %v4064
    %4092 = vmatpush.bf16.msra.mxu0 %v4061
    %4093 = vmatpush.bf16.msra.mxu0 %v4058
    %4094 = vmatpush.bf16.msra.mxu0 %v4055
    %4095 = vmatpush.bf16.msra.mxu0 %v4052
    %4096 = vmatpush.bf16.msra.mxu0 %v4049
    %4097 = vmatpush.bf16.msra.mxu0 %v4046
    %4098 = vmatpush.bf16.msra.mxu0 %v4043
    %4099 = vmatmul.bf16.gmra.mxu0 %v3961
    %v4100 = vpop.f32.mrf.mxu0
    %v4101 = vadd.f32 %v408, %v4100
    %v4102 = vpop.f32.mrf.mxu0
    %4103 = vdwg.mxu0
    %4104 = vmatpush.bf16.msra.mxu0 %v4065
    %4105 = vmatpush.bf16.msra.mxu0 %v4062
    %4106 = vmatpush.bf16.msra.mxu0 %v4059
    %4107 = vmatpush.bf16.msra.mxu0 %v4056
    %4108 = vmatpush.bf16.msra.mxu0 %v4053
    %4109 = vmatpush.bf16.msra.mxu0 %v4050
    %4110 = vmatpush.bf16.msra.mxu0 %v4047
    %4111 = vmatpush.bf16.msra.mxu0 %v4044
    %4112 = vmatmul.bf16.gmra.mxu0 %v3961
    %v4113 = vpop.f32.mrf.mxu0
    %v4114 = vadd.f32 %v409, %v4113
    %v4115 = vpop.f32.mrf.mxu0
    %4116 = vdwg.mxu0
    %4117 = vmatpush.bf16.msra.mxu0 %v4066
    %4118 = vmatpush.bf16.msra.mxu0 %v4063
    %4119 = vmatpush.bf16.msra.mxu0 %v4060
    %4120 = vmatpush.bf16.msra.mxu0 %v4057
    %4121 = vmatpush.bf16.msra.mxu0 %v4054
    %4122 = vmatpush.bf16.msra.mxu0 %v4051
    %4123 = vmatpush.bf16.msra.mxu0 %v4048
    %4124 = vmatpush.bf16.msra.mxu0 %v4045
    %4125 = vmatmul.bf16.gmra.mxu0 %v3961
    %v4126 = vpop.f32.mrf.mxu0
    %v4127 = vadd.f32 %v410, %v4126
    %v4128 = vpop.f32.mrf.mxu0
    %4129 = vdwg.mxu0
    %v4130 = vpack.c.bf16 %v3665, %v3665
    %v4131 = vld [vmem:[%s6] sm:$0xff]
    %v4132 = vld [vmem:[%s6 + $0x8] sm:$0xf]
    %v4133 = vld [vmem:[%s6 + $0xc] sm:$0xff]
    %v4134 = vld [vmem:[%s6 + $0x14] sm:$0xf]
    %v4135 = vld [vmem:[%s6 + $0x18] sm:$0xff]
    %v4136 = vld [vmem:[%s6 + $0x20] sm:$0xf]
    %v4137 = vld [vmem:[%s6 + $0x24] sm:$0xff]
    %v4138 = vld [vmem:[%s6 + $0x2c] sm:$0xf]
    %v4139 = vld [vmem:[%s6 + $0x30] sm:$0xff]
    %v4140 = vld [vmem:[%s6 + $0x38] sm:$0xf]
    %v4141 = vld [vmem:[%s6 + $0x3c] sm:$0xff]
    %v4142 = vld [vmem:[%s6 + $0x44] sm:$0xf]
    %v4143 = vld [vmem:[%s6 + $0x48] sm:$0xff]
    %v4144 = vld [vmem:[%s6 + $0x50] sm:$0xf]
    %v4145 = vld [vmem:[%s6 + $0x54] sm:$0xff]
    %v4146 = vld [vmem:[%s6 + $0x5c] sm:$0xf]
    %v4147 = vld [vmem:[%s6 + $0x60] sm:$0xff]
    %v4148 = vld [vmem:[%s6 + $0x68] sm:$0xf]
    %v4149 = vld [vmem:[%s6 + $0x6c] sm:$0xff]
    %v4150 = vld [vmem:[%s6 + $0x74] sm:$0xf]
    %v4151 = vld [vmem:[%s6 + $0x78] sm:$0xff]
    %v4152 = vld [vmem:[%s6 + $0x80] sm:$0xf]
    %v4153 = vld [vmem:[%s6 + $0x84] sm:$0xff]
    %v4154 = vld [vmem:[%s6 + $0x8c] sm:$0xf]
    %v4155 = vld [vmem:[%s6 + $0x90] sm:$0xff]
    %v4156 = vld [vmem:[%s6 + $0x98] sm:$0xf]
    %v4157 = vld [vmem:[%s6 + $0x9c] sm:$0xff]
    %v4158 = vld [vmem:[%s6 + $0xa4] sm:$0xf]
    %v4159 = vld [vmem:[%s6 + $0xa8] sm:$0xff]
    %v4160 = vld [vmem:[%s6 + $0xb0] sm:$0xf]
    %v4161 = vld [vmem:[%s6 + $0xb4] sm:$0xff]
    %v4162 = vld [vmem:[%s6 + $0xbc] sm:$0xf]
    %v4195 = vunpack.c.l.b16 %v4131
    %v4196 = vunpack.c.h.b16 %v4131
    %v4197 = vunpack.c.l.b16 %v4132
    %v4198 = vunpack.c.l.b16 %v4133
    %v4199 = vunpack.c.h.b16 %v4133
    %v4200 = vunpack.c.l.b16 %v4134
    %v4201 = vunpack.c.l.b16 %v4135
    %v4202 = vunpack.c.h.b16 %v4135
    %v4203 = vunpack.c.l.b16 %v4136
    %v4204 = vunpack.c.l.b16 %v4137
    %v4205 = vunpack.c.h.b16 %v4137
    %v4206 = vunpack.c.l.b16 %v4138
    %v4207 = vunpack.c.l.b16 %v4139
    %v4208 = vunpack.c.h.b16 %v4139
    %v4209 = vunpack.c.l.b16 %v4140
    %v4210 = vunpack.c.l.b16 %v4141
    %v4211 = vunpack.c.h.b16 %v4141
    %v4212 = vunpack.c.l.b16 %v4142
    %v4213 = vunpack.c.l.b16 %v4143
    %v4214 = vunpack.c.h.b16 %v4143
    %v4215 = vunpack.c.l.b16 %v4144
    %v4216 = vunpack.c.l.b16 %v4145
    %v4217 = vunpack.c.h.b16 %v4145
    %v4218 = vunpack.c.l.b16 %v4146
    %v4219 = vunpack.c.l.b16 %v4147
    %v4220 = vunpack.c.h.b16 %v4147
    %v4221 = vunpack.c.l.b16 %v4148
    %v4222 = vunpack.c.l.b16 %v4149
    %v4223 = vunpack.c.h.b16 %v4149
    %v4224 = vunpack.c.l.b16 %v4150
    %v4225 = vunpack.c.l.b16 %v4151
    %v4226 = vunpack.c.h.b16 %v4151
    %v4227 = vunpack.c.l.b16 %v4152
    %v4228 = vunpack.c.l.b16 %v4153
    %v4229 = vunpack.c.h.b16 %v4153
    %v4230 = vunpack.c.l.b16 %v4154
    %v4231 = vunpack.c.l.b16 %v4155
    %v4232 = vunpack.c.h.b16 %v4155
    %v4233 = vunpack.c.l.b16 %v4156
    %v4234 = vunpack.c.l.b16 %v4157
    %v4235 = vunpack.c.h.b16 %v4157
    %v4236 = vunpack.c.l.b16 %v4158
    %v4237 = vunpack.c.l.b16 %v4159
    %v4238 = vunpack.c.h.b16 %v4159
    %v4239 = vunpack.c.l.b16 %v4160
    %v4240 = vunpack.c.l.b16 %v4161
    %v4241 = vunpack.c.h.b16 %v4161
    %v4242 = vunpack.c.l.b16 %v4162
    %v4243 = vpack.c.b16 %v4198, %v4195
    %v4244 = vpack.c.b16 %v4199, %v4196
    %v4245 = vpack.c.b16 %v4200, %v4197
    %v4246 = vpack.c.b16 %v4204, %v4201
    %v4247 = vpack.c.b16 %v4205, %v4202
    %v4248 = vpack.c.b16 %v4206, %v4203
    %v4249 = vpack.c.b16 %v4210, %v4207
    %v4250 = vpack.c.b16 %v4211, %v4208
    %v4251 = vpack.c.b16 %v4212, %v4209
    %v4252 = vpack.c.b16 %v4216, %v4213
    %v4253 = vpack.c.b16 %v4217, %v4214
    %v4254 = vpack.c.b16 %v4218, %v4215
    %v4255 = vpack.c.b16 %v4222, %v4219
    %v4256 = vpack.c.b16 %v4223, %v4220
    %v4257 = vpack.c.b16 %v4224, %v4221
    %v4258 = vpack.c.b16 %v4228, %v4225
    %v4259 = vpack.c.b16 %v4229, %v4226
    %v4260 = vpack.c.b16 %v4230, %v4227
    %v4261 = vpack.c.b16 %v4234, %v4231
    %v4262 = vpack.c.b16 %v4235, %v4232
    %v4263 = vpack.c.b16 %v4236, %v4233
    %v4264 = vpack.c.b16 %v4240, %v4237
    %v4265 = vpack.c.b16 %v4241, %v4238
    %v4266 = vpack.c.b16 %v4242, %v4239
    %4291 = vmatpush.bf16.msra.mxu0 %v4264
    %4292 = vmatpush.bf16.msra.mxu0 %v4261
    %4293 = vmatpush.bf16.msra.mxu0 %v4258
    %4294 = vmatpush.bf16.msra.mxu0 %v4255
    %4295 = vmatpush.bf16.msra.mxu0 %v4252
    %4296 = vmatpush.bf16.msra.mxu0 %v4249
    %4297 = vmatpush.bf16.msra.mxu0 %v4246
    %4298 = vmatpush.bf16.msra.mxu0 %v4243
    %4299 = vmatmul.bf16.gmra.mxu0 %v4130
    %v4300 = vpop.f32.mrf.mxu0
    %v4301 = vadd.f32 0.0, %v4300
    %v4302 = vpop.f32.mrf.mxu0
    %4303 = vdwg.mxu0
    %4304 = vmatpush.bf16.msra.mxu0 %v4265
    %4305 = vmatpush.bf16.msra.mxu0 %v4262
    %4306 = vmatpush.bf16.msra.mxu0 %v4259
    %4307 = vmatpush.bf16.msra.mxu0 %v4256
    %4308 = vmatpush.bf16.msra.mxu0 %v4253
    %4309 = vmatpush.bf16.msra.mxu0 %v4250
    %4310 = vmatpush.bf16.msra.mxu0 %v4247
    %4311 = vmatpush.bf16.msra.mxu0 %v4244
    %4312 = vmatmul.bf16.gmra.mxu0 %v4130
    %v4313 = vpop.f32.mrf.mxu0
    %v4314 = vadd.f32 0.0, %v4313
    %v4315 = vpop.f32.mrf.mxu0
    %4316 = vdwg.mxu0
    %4317 = vmatpush.bf16.msra.mxu0 %v4266
    %4318 = vmatpush.bf16.msra.mxu0 %v4263
    %4319 = vmatpush.bf16.msra.mxu0 %v4260
    %4320 = vmatpush.bf16.msra.mxu0 %v4257
    %4321 = vmatpush.bf16.msra.mxu0 %v4254
    %4322 = vmatpush.bf16.msra.mxu0 %v4251
    %4323 = vmatpush.bf16.msra.mxu0 %v4248
    %4324 = vmatpush.bf16.msra.mxu0 %v4245
    %4325 = vmatmul.bf16.gmra.mxu0 %v4130
    %v4326 = vpop.f32.mrf.mxu0
    %v4327 = vadd.f32 0.0, %v4326
    %v4328 = vpop.f32.mrf.mxu0
    %4329 = vdwg.mxu0
    %v4330 = vadd.f32 %v4101, %v4301
    %v4331 = vxor.u32 %v4330, 2147483648
    %v4332 = vmul.f32 %v4331, 1.442695
    %v4333 = vpow.pop %v4332
    %v4334 = vadd.f32 %v4333, 1.0
    %v4335 = vrcp.pop %v4334
    %v4336 = vmul.f32 %v4334, %v4335
    %v4337 = vsub.f32 1.0, %v4336
    %v4338 = vmul.f32 %v4335, %v4337
    %v4339 = vadd.f32 %v4335, %v4338
    %vm4340 = vweird.f32 %v4334
    %vm4341 = vweird.f32 %v4335
    %vm4342 = vmor %vm4340, %vm4341
    %v4343 = vsel %vm4342, %v4335, %v4339
    %v4344 = vand.u32 2147483647, %v4334
    %vm4345 = vcmp.eq.f32.partialorder %v4344, 8.507059e+37
    %v4346 = vand.u32 %v4334, 2147483648
    %v4347 = vor.u32 1.1754944e-38, %v4346
    %v4348 = vsel %vm4345, %v4347, %v4343
    %v4349 = vmul.f32 1.0, %v4348
    %v4350 = vadd.f32 %v4114, %v4314
    %v4351 = vxor.u32 %v4350, 2147483648
    %v4352 = vmul.f32 %v4351, 1.442695
    %v4353 = vpow.pop %v4352
    %v4354 = vadd.f32 %v4353, 1.0
    %v4355 = vrcp.pop %v4354
    %v4356 = vmul.f32 %v4354, %v4355
    %v4357 = vsub.f32 1.0, %v4356
    %v4358 = vmul.f32 %v4355, %v4357
    %v4359 = vadd.f32 %v4355, %v4358
    %vm4360 = vweird.f32 %v4354
    %vm4361 = vweird.f32 %v4355
    %vm4362 = vmor %vm4360, %vm4361
    %v4363 = vsel %vm4362, %v4355, %v4359
    %v4364 = vand.u32 2147483647, %v4354
    %vm4365 = vcmp.eq.f32.partialorder %v4364, 8.507059e+37
    %v4366 = vand.u32 %v4354, 2147483648
    %v4367 = vor.u32 1.1754944e-38, %v4366
    %v4368 = vsel %vm4365, %v4367, %v4363
    %v4369 = vmul.f32 1.0, %v4368
    %v4370 = vadd.f32 %v4327, %v821
    %v4371 = vmul.f32 %v4349, %v4370
    %v4372 = vadd.f32 %v4127, %v4371
    %v4373 = vtanh.pop %v4372
    %v4374 = vsub.f32 1.0, %v4369
    %v4375 = vmul.f32 %v4374, %v4373
    %v4376 = vmul.f32 %v4369, %v3665
    %v4377 = vadd.f32 %v4375, %v4376
    %s4378 = scalar_lea.vmem [#allocation2], 10
    %4379 = vst [vmem:[%s4378] sm:$0x3] %v4377
    %v4380 = vld [vmem:[%s2] sm:$0xff]
    %v4381 = vld [vmem:[%s2 + $0x8] sm:$0xf]
    %v4382 = vld [vmem:[%s2 + $0xc] sm:$0xff]
    %v4383 = vld [vmem:[%s2 + $0x14] sm:$0xf]
    %v4384 = vld [vmem:[%s2 + $0x18] sm:$0xff]
    %v4385 = vld [vmem:[%s2 + $0x20] sm:$0xf]
    %v4386 = vld [vmem:[%s2 + $0x24] sm:$0xff]
    %v4387 = vld [vmem:[%s2 + $0x2c] sm:$0xf]
    %v4388 = vld [vmem:[%s2 + $0x30] sm:$0xff]
    %v4389 = vld [vmem:[%s2 + $0x38] sm:$0xf]
    %v4390 = vld [vmem:[%s2 + $0x3c] sm:$0xff]
    %v4391 = vld [vmem:[%s2 + $0x44] sm:$0xf]
    %v4392 = vld [vmem:[%s2 + $0x48] sm:$0xff]
    %v4393 = vld [vmem:[%s2 + $0x50] sm:$0xf]
    %v4394 = vld [vmem:[%s2 + $0x54] sm:$0xff]
    %v4395 = vld [vmem:[%s2 + $0x5c] sm:$0xf]
    %v4396 = vld [vmem:[%s2 + $0x60] sm:$0xff]
    %v4397 = vld [vmem:[%s2 + $0x68] sm:$0xf]
    %v4398 = vld [vmem:[%s2 + $0x6c] sm:$0xff]
    %v4399 = vld [vmem:[%s2 + $0x74] sm:$0xf]
    %v4400 = vld [vmem:[%s2 + $0x78] sm:$0xff]
    %v4401 = vld [vmem:[%s2 + $0x80] sm:$0xf]
    %v4402 = vld [vmem:[%s2 + $0x84] sm:$0xff]
    %v4403 = vld [vmem:[%s2 + $0x8c] sm:$0xf]
    %v4404 = vld [vmem:[%s2 + $0x90] sm:$0xff]
    %v4405 = vld [vmem:[%s2 + $0x98] sm:$0xf]
    %v4406 = vld [vmem:[%s2 + $0x9c] sm:$0xff]
    %v4407 = vld [vmem:[%s2 + $0xa4] sm:$0xf]
    %v4408 = vld [vmem:[%s2 + $0xa8] sm:$0xff]
    %v4409 = vld [vmem:[%s2 + $0xb0] sm:$0xf]
    %v4410 = vld [vmem:[%s2 + $0xb4] sm:$0xff]
    %v4411 = vld [vmem:[%s2 + $0xbc] sm:$0xf]
    %v4444 = vunpack.c.l.b16 %v4380
    %v4445 = vunpack.c.h.b16 %v4380
    %v4446 = vunpack.c.l.b16 %v4381
    %v4447 = vunpack.c.l.b16 %v4382
    %v4448 = vunpack.c.h.b16 %v4382
    %v4449 = vunpack.c.l.b16 %v4383
    %v4450 = vunpack.c.l.b16 %v4384
    %v4451 = vunpack.c.h.b16 %v4384
    %v4452 = vunpack.c.l.b16 %v4385
    %v4453 = vunpack.c.l.b16 %v4386
    %v4454 = vunpack.c.h.b16 %v4386
    %v4455 = vunpack.c.l.b16 %v4387
    %v4456 = vunpack.c.l.b16 %v4388
    %v4457 = vunpack.c.h.b16 %v4388
    %v4458 = vunpack.c.l.b16 %v4389
    %v4459 = vunpack.c.l.b16 %v4390
    %v4460 = vunpack.c.h.b16 %v4390
    %v4461 = vunpack.c.l.b16 %v4391
    %v4462 = vunpack.c.l.b16 %v4392
    %v4463 = vunpack.c.h.b16 %v4392
    %v4464 = vunpack.c.l.b16 %v4393
    %v4465 = vunpack.c.l.b16 %v4394
    %v4466 = vunpack.c.h.b16 %v4394
    %v4467 = vunpack.c.l.b16 %v4395
    %v4468 = vunpack.c.l.b16 %v4396
    %v4469 = vunpack.c.h.b16 %v4396
    %v4470 = vunpack.c.l.b16 %v4397
    %v4471 = vunpack.c.l.b16 %v4398
    %v4472 = vunpack.c.h.b16 %v4398
    %v4473 = vunpack.c.l.b16 %v4399
    %v4474 = vunpack.c.l.b16 %v4400
    %v4475 = vunpack.c.h.b16 %v4400
    %v4476 = vunpack.c.l.b16 %v4401
    %v4477 = vunpack.c.l.b16 %v4402
    %v4478 = vunpack.c.h.b16 %v4402
    %v4479 = vunpack.c.l.b16 %v4403
    %v4480 = vunpack.c.l.b16 %v4404
    %v4481 = vunpack.c.h.b16 %v4404
    %v4482 = vunpack.c.l.b16 %v4405
    %v4483 = vunpack.c.l.b16 %v4406
    %v4484 = vunpack.c.h.b16 %v4406
    %v4485 = vunpack.c.l.b16 %v4407
    %v4486 = vunpack.c.l.b16 %v4408
    %v4487 = vunpack.c.h.b16 %v4408
    %v4488 = vunpack.c.l.b16 %v4409
    %v4489 = vunpack.c.l.b16 %v4410
    %v4490 = vunpack.c.h.b16 %v4410
    %v4491 = vunpack.c.l.b16 %v4411
    %v4492 = vpack.c.b16 %v4447, %v4444
    %v4493 = vpack.c.b16 %v4448, %v4445
    %v4494 = vpack.c.b16 %v4449, %v4446
    %v4495 = vpack.c.b16 %v4453, %v4450
    %v4496 = vpack.c.b16 %v4454, %v4451
    %v4497 = vpack.c.b16 %v4455, %v4452
    %v4498 = vpack.c.b16 %v4459, %v4456
    %v4499 = vpack.c.b16 %v4460, %v4457
    %v4500 = vpack.c.b16 %v4461, %v4458
    %v4501 = vpack.c.b16 %v4465, %v4462
    %v4502 = vpack.c.b16 %v4466, %v4463
    %v4503 = vpack.c.b16 %v4467, %v4464
    %v4504 = vpack.c.b16 %v4471, %v4468
    %v4505 = vpack.c.b16 %v4472, %v4469
    %v4506 = vpack.c.b16 %v4473, %v4470
    %v4507 = vpack.c.b16 %v4477, %v4474
    %v4508 = vpack.c.b16 %v4478, %v4475
    %v4509 = vpack.c.b16 %v4479, %v4476
    %v4510 = vpack.c.b16 %v4483, %v4480
    %v4511 = vpack.c.b16 %v4484, %v4481
    %v4512 = vpack.c.b16 %v4485, %v4482
    %v4513 = vpack.c.b16 %v4489, %v4486
    %v4514 = vpack.c.b16 %v4490, %v4487
    %v4515 = vpack.c.b16 %v4491, %v4488
    %4540 = vmatpush.bf16.msra.mxu0 %v4513
    %4541 = vmatpush.bf16.msra.mxu0 %v4510
    %4542 = vmatpush.bf16.msra.mxu0 %v4507
    %4543 = vmatpush.bf16.msra.mxu0 %v4504
    %4544 = vmatpush.bf16.msra.mxu0 %v4501
    %4545 = vmatpush.bf16.msra.mxu0 %v4498
    %4546 = vmatpush.bf16.msra.mxu0 %v4495
    %4547 = vmatpush.bf16.msra.mxu0 %v4492
    %4548 = vmatmul.bf16.gmra.mxu0 %v3961
    %v4549 = vpop.f32.mrf.mxu0
    %v4550 = vadd.f32 0.0, %v4549
    %v4551 = vpop.f32.mrf.mxu0
    %4552 = vdwg.mxu0
    %4553 = vmatpush.bf16.msra.mxu0 %v4514
    %4554 = vmatpush.bf16.msra.mxu0 %v4511
    %4555 = vmatpush.bf16.msra.mxu0 %v4508
    %4556 = vmatpush.bf16.msra.mxu0 %v4505
    %4557 = vmatpush.bf16.msra.mxu0 %v4502
    %4558 = vmatpush.bf16.msra.mxu0 %v4499
    %4559 = vmatpush.bf16.msra.mxu0 %v4496
    %4560 = vmatpush.bf16.msra.mxu0 %v4493
    %4561 = vmatmul.bf16.gmra.mxu0 %v3961
    %v4562 = vpop.f32.mrf.mxu0
    %v4563 = vadd.f32 0.0, %v4562
    %v4564 = vpop.f32.mrf.mxu0
    %4565 = vdwg.mxu0
    %4566 = vmatpush.bf16.msra.mxu0 %v4515
    %4567 = vmatpush.bf16.msra.mxu0 %v4512
    %4568 = vmatpush.bf16.msra.mxu0 %v4509
    %4569 = vmatpush.bf16.msra.mxu0 %v4506
    %4570 = vmatpush.bf16.msra.mxu0 %v4503
    %4571 = vmatpush.bf16.msra.mxu0 %v4500
    %4572 = vmatpush.bf16.msra.mxu0 %v4497
    %4573 = vmatpush.bf16.msra.mxu0 %v4494
    %4574 = vmatmul.bf16.gmra.mxu0 %v3961
    %v4575 = vpop.f32.mrf.mxu0
    %v4576 = vadd.f32 0.0, %v4575
    %v4577 = vpop.f32.mrf.mxu0
    %4578 = vdwg.mxu0
    %v4580 = vrot.slane %v4550, 4
    %v4582 = vadd.f32 %v91, %v4580
    %v4583 = vxor.u32 %v4582, 2147483648
    %v4584 = vmul.f32 %v4583, 1.442695
    %v4585 = vpow.pop %v4584
    %v4586 = vadd.f32 %v4585, 1.0
    %v4587 = vrcp.pop %v4586
    %v4588 = vmul.f32 %v4586, %v4587
    %v4589 = vsub.f32 1.0, %v4588
    %v4590 = vmul.f32 %v4587, %v4589
    %v4591 = vadd.f32 %v4587, %v4590
    %vm4592 = vweird.f32 %v4586
    %vm4593 = vweird.f32 %v4587
    %vm4594 = vmor %vm4592, %vm4593
    %v4595 = vsel %vm4594, %v4587, %v4591
    %v4596 = vand.u32 2147483647, %v4586
    %vm4597 = vcmp.eq.f32.partialorder %v4596, 8.507059e+37
    %v4598 = vand.u32 %v4586, 2147483648
    %v4599 = vor.u32 1.1754944e-38, %v4598
    %v4600 = vsel %vm4597, %v4599, %v4595
    %v4601 = vmul.f32 1.0, %v4600
    %v4603 = vrot.slane %v4563, 4
    %v4605 = vadd.f32 %v105, %v4603
    %v4606 = vxor.u32 %v4605, 2147483648
    %v4607 = vmul.f32 %v4606, 1.442695
    %v4608 = vpow.pop %v4607
    %v4609 = vadd.f32 %v4608, 1.0
    %v4610 = vrcp.pop %v4609
    %v4611 = vmul.f32 %v4609, %v4610
    %v4612 = vsub.f32 1.0, %v4611
    %v4613 = vmul.f32 %v4610, %v4612
    %v4614 = vadd.f32 %v4610, %v4613
    %vm4615 = vweird.f32 %v4609
    %vm4616 = vweird.f32 %v4610
    %vm4617 = vmor %vm4615, %vm4616
    %v4618 = vsel %vm4617, %v4610, %v4614
    %v4619 = vand.u32 2147483647, %v4609
    %vm4620 = vcmp.eq.f32.partialorder %v4619, 8.507059e+37
    %v4621 = vand.u32 %v4609, 2147483648
    %v4622 = vor.u32 1.1754944e-38, %v4621
    %v4623 = vsel %vm4620, %v4622, %v4618
    %v4624 = vmul.f32 1.0, %v4623
    %v4625 = vadd.f32 %v4576, %v364
    %v4627 = vrot.slane %v4625, 4
    %v4629 = vmul.f32 %v4601, %v4627
    %v4630 = vadd.f32 %v119, %v4629
    %v4631 = vtanh.pop %v4630
    %v4632 = vsub.f32 1.0, %v4624
    %v4633 = vmul.f32 %v4632, %v4631
    %v4635 = vrot.slane %v3926, 6
    %v4637 = vmul.f32 %v4624, %v4635
    %v4638 = vadd.f32 %v4633, %v4637
    %v4639 = vpack.c.bf16 %v4638, %v4638
    %v4640 = vld [vmem:[%s5] sm:$0xff]
    %v4641 = vld [vmem:[%s5 + $0x8] sm:$0xf]
    %v4642 = vld [vmem:[%s5 + $0xc] sm:$0xff]
    %v4643 = vld [vmem:[%s5 + $0x14] sm:$0xf]
    %v4644 = vld [vmem:[%s5 + $0x18] sm:$0xff]
    %v4645 = vld [vmem:[%s5 + $0x20] sm:$0xf]
    %v4646 = vld [vmem:[%s5 + $0x24] sm:$0xff]
    %v4647 = vld [vmem:[%s5 + $0x2c] sm:$0xf]
    %v4648 = vld [vmem:[%s5 + $0x30] sm:$0xff]
    %v4649 = vld [vmem:[%s5 + $0x38] sm:$0xf]
    %v4650 = vld [vmem:[%s5 + $0x3c] sm:$0xff]
    %v4651 = vld [vmem:[%s5 + $0x44] sm:$0xf]
    %v4652 = vld [vmem:[%s5 + $0x48] sm:$0xff]
    %v4653 = vld [vmem:[%s5 + $0x50] sm:$0xf]
    %v4654 = vld [vmem:[%s5 + $0x54] sm:$0xff]
    %v4655 = vld [vmem:[%s5 + $0x5c] sm:$0xf]
    %v4656 = vld [vmem:[%s5 + $0x60] sm:$0xff]
    %v4657 = vld [vmem:[%s5 + $0x68] sm:$0xf]
    %v4658 = vld [vmem:[%s5 + $0x6c] sm:$0xff]
    %v4659 = vld [vmem:[%s5 + $0x74] sm:$0xf]
    %v4660 = vld [vmem:[%s5 + $0x78] sm:$0xff]
    %v4661 = vld [vmem:[%s5 + $0x80] sm:$0xf]
    %v4662 = vld [vmem:[%s5 + $0x84] sm:$0xff]
    %v4663 = vld [vmem:[%s5 + $0x8c] sm:$0xf]
    %v4664 = vld [vmem:[%s5 + $0x90] sm:$0xff]
    %v4665 = vld [vmem:[%s5 + $0x98] sm:$0xf]
    %v4666 = vld [vmem:[%s5 + $0x9c] sm:$0xff]
    %v4667 = vld [vmem:[%s5 + $0xa4] sm:$0xf]
    %v4668 = vld [vmem:[%s5 + $0xa8] sm:$0xff]
    %v4669 = vld [vmem:[%s5 + $0xb0] sm:$0xf]
    %v4670 = vld [vmem:[%s5 + $0xb4] sm:$0xff]
    %v4671 = vld [vmem:[%s5 + $0xbc] sm:$0xf]
    %v4673 = vrot.slane %v4639, 2
    %v4707 = vunpack.c.l.b16 %v4640
    %v4708 = vunpack.c.h.b16 %v4640
    %v4709 = vunpack.c.l.b16 %v4641
    %v4710 = vunpack.c.l.b16 %v4642
    %v4711 = vunpack.c.h.b16 %v4642
    %v4712 = vunpack.c.l.b16 %v4643
    %v4713 = vunpack.c.l.b16 %v4644
    %v4714 = vunpack.c.h.b16 %v4644
    %v4715 = vunpack.c.l.b16 %v4645
    %v4716 = vunpack.c.l.b16 %v4646
    %v4717 = vunpack.c.h.b16 %v4646
    %v4718 = vunpack.c.l.b16 %v4647
    %v4719 = vunpack.c.l.b16 %v4648
    %v4720 = vunpack.c.h.b16 %v4648
    %v4721 = vunpack.c.l.b16 %v4649
    %v4722 = vunpack.c.l.b16 %v4650
    %v4723 = vunpack.c.h.b16 %v4650
    %v4724 = vunpack.c.l.b16 %v4651
    %v4725 = vunpack.c.l.b16 %v4652
    %v4726 = vunpack.c.h.b16 %v4652
    %v4727 = vunpack.c.l.b16 %v4653
    %v4728 = vunpack.c.l.b16 %v4654
    %v4729 = vunpack.c.h.b16 %v4654
    %v4730 = vunpack.c.l.b16 %v4655
    %v4731 = vunpack.c.l.b16 %v4656
    %v4732 = vunpack.c.h.b16 %v4656
    %v4733 = vunpack.c.l.b16 %v4657
    %v4734 = vunpack.c.l.b16 %v4658
    %v4735 = vunpack.c.h.b16 %v4658
    %v4736 = vunpack.c.l.b16 %v4659
    %v4737 = vunpack.c.l.b16 %v4660
    %v4738 = vunpack.c.h.b16 %v4660
    %v4739 = vunpack.c.l.b16 %v4661
    %v4740 = vunpack.c.l.b16 %v4662
    %v4741 = vunpack.c.h.b16 %v4662
    %v4742 = vunpack.c.l.b16 %v4663
    %v4743 = vunpack.c.l.b16 %v4664
    %v4744 = vunpack.c.h.b16 %v4664
    %v4745 = vunpack.c.l.b16 %v4665
    %v4746 = vunpack.c.l.b16 %v4666
    %v4747 = vunpack.c.h.b16 %v4666
    %v4748 = vunpack.c.l.b16 %v4667
    %v4749 = vunpack.c.l.b16 %v4668
    %v4750 = vunpack.c.h.b16 %v4668
    %v4751 = vunpack.c.l.b16 %v4669
    %v4752 = vunpack.c.l.b16 %v4670
    %v4753 = vunpack.c.h.b16 %v4670
    %v4754 = vunpack.c.l.b16 %v4671
    %v4755 = vpack.c.b16 %v4710, %v4707
    %v4756 = vpack.c.b16 %v4711, %v4708
    %v4757 = vpack.c.b16 %v4712, %v4709
    %v4758 = vpack.c.b16 %v4716, %v4713
    %v4759 = vpack.c.b16 %v4717, %v4714
    %v4760 = vpack.c.b16 %v4718, %v4715
    %v4761 = vpack.c.b16 %v4722, %v4719
    %v4762 = vpack.c.b16 %v4723, %v4720
    %v4763 = vpack.c.b16 %v4724, %v4721
    %v4764 = vpack.c.b16 %v4728, %v4725
    %v4765 = vpack.c.b16 %v4729, %v4726
    %v4766 = vpack.c.b16 %v4730, %v4727
    %v4767 = vpack.c.b16 %v4734, %v4731
    %v4768 = vpack.c.b16 %v4735, %v4732
    %v4769 = vpack.c.b16 %v4736, %v4733
    %v4770 = vpack.c.b16 %v4740, %v4737
    %v4771 = vpack.c.b16 %v4741, %v4738
    %v4772 = vpack.c.b16 %v4742, %v4739
    %v4773 = vpack.c.b16 %v4746, %v4743
    %v4774 = vpack.c.b16 %v4747, %v4744
    %v4775 = vpack.c.b16 %v4748, %v4745
    %v4776 = vpack.c.b16 %v4752, %v4749
    %v4777 = vpack.c.b16 %v4753, %v4750
    %v4778 = vpack.c.b16 %v4754, %v4751
    %4803 = vmatpush.bf16.msra.mxu0 %v4776
    %4804 = vmatpush.bf16.msra.mxu0 %v4773
    %4805 = vmatpush.bf16.msra.mxu0 %v4770
    %4806 = vmatpush.bf16.msra.mxu0 %v4767
    %4807 = vmatpush.bf16.msra.mxu0 %v4764
    %4808 = vmatpush.bf16.msra.mxu0 %v4761
    %4809 = vmatpush.bf16.msra.mxu0 %v4758
    %4810 = vmatpush.bf16.msra.mxu0 %v4755
    %4811 = vmatmul.bf16.gmra.mxu0 %v4673
    %v4812 = vpop.f32.mrf.mxu0
    %v4813 = vadd.f32 %v408, %v4812
    %v4814 = vpop.f32.mrf.mxu0
    %4815 = vdwg.mxu0
    %4816 = vmatpush.bf16.msra.mxu0 %v4777
    %4817 = vmatpush.bf16.msra.mxu0 %v4774
    %4818 = vmatpush.bf16.msra.mxu0 %v4771
    %4819 = vmatpush.bf16.msra.mxu0 %v4768
    %4820 = vmatpush.bf16.msra.mxu0 %v4765
    %4821 = vmatpush.bf16.msra.mxu0 %v4762
    %4822 = vmatpush.bf16.msra.mxu0 %v4759
    %4823 = vmatpush.bf16.msra.mxu0 %v4756
    %4824 = vmatmul.bf16.gmra.mxu0 %v4673
    %v4825 = vpop.f32.mrf.mxu0
    %v4826 = vadd.f32 %v409, %v4825
    %v4827 = vpop.f32.mrf.mxu0
    %4828 = vdwg.mxu0
    %4829 = vmatpush.bf16.msra.mxu0 %v4778
    %4830 = vmatpush.bf16.msra.mxu0 %v4775
    %4831 = vmatpush.bf16.msra.mxu0 %v4772
    %4832 = vmatpush.bf16.msra.mxu0 %v4769
    %4833 = vmatpush.bf16.msra.mxu0 %v4766
    %4834 = vmatpush.bf16.msra.mxu0 %v4763
    %4835 = vmatpush.bf16.msra.mxu0 %v4760
    %4836 = vmatpush.bf16.msra.mxu0 %v4757
    %4837 = vmatmul.bf16.gmra.mxu0 %v4673
    %v4838 = vpop.f32.mrf.mxu0
    %v4839 = vadd.f32 %v410, %v4838
    %v4840 = vpop.f32.mrf.mxu0
    %4841 = vdwg.mxu0
    %v4842 = vpack.c.bf16 %v4377, %v4377
    %v4843 = vld [vmem:[%s6] sm:$0xff]
    %v4844 = vld [vmem:[%s6 + $0x8] sm:$0xf]
    %v4845 = vld [vmem:[%s6 + $0xc] sm:$0xff]
    %v4846 = vld [vmem:[%s6 + $0x14] sm:$0xf]
    %v4847 = vld [vmem:[%s6 + $0x18] sm:$0xff]
    %v4848 = vld [vmem:[%s6 + $0x20] sm:$0xf]
    %v4849 = vld [vmem:[%s6 + $0x24] sm:$0xff]
    %v4850 = vld [vmem:[%s6 + $0x2c] sm:$0xf]
    %v4851 = vld [vmem:[%s6 + $0x30] sm:$0xff]
    %v4852 = vld [vmem:[%s6 + $0x38] sm:$0xf]
    %v4853 = vld [vmem:[%s6 + $0x3c] sm:$0xff]
    %v4854 = vld [vmem:[%s6 + $0x44] sm:$0xf]
    %v4855 = vld [vmem:[%s6 + $0x48] sm:$0xff]
    %v4856 = vld [vmem:[%s6 + $0x50] sm:$0xf]
    %v4857 = vld [vmem:[%s6 + $0x54] sm:$0xff]
    %v4858 = vld [vmem:[%s6 + $0x5c] sm:$0xf]
    %v4859 = vld [vmem:[%s6 + $0x60] sm:$0xff]
    %v4860 = vld [vmem:[%s6 + $0x68] sm:$0xf]
    %v4861 = vld [vmem:[%s6 + $0x6c] sm:$0xff]
    %v4862 = vld [vmem:[%s6 + $0x74] sm:$0xf]
    %v4863 = vld [vmem:[%s6 + $0x78] sm:$0xff]
    %v4864 = vld [vmem:[%s6 + $0x80] sm:$0xf]
    %v4865 = vld [vmem:[%s6 + $0x84] sm:$0xff]
    %v4866 = vld [vmem:[%s6 + $0x8c] sm:$0xf]
    %v4867 = vld [vmem:[%s6 + $0x90] sm:$0xff]
    %v4868 = vld [vmem:[%s6 + $0x98] sm:$0xf]
    %v4869 = vld [vmem:[%s6 + $0x9c] sm:$0xff]
    %v4870 = vld [vmem:[%s6 + $0xa4] sm:$0xf]
    %v4871 = vld [vmem:[%s6 + $0xa8] sm:$0xff]
    %v4872 = vld [vmem:[%s6 + $0xb0] sm:$0xf]
    %v4873 = vld [vmem:[%s6 + $0xb4] sm:$0xff]
    %v4874 = vld [vmem:[%s6 + $0xbc] sm:$0xf]
    %v4907 = vunpack.c.l.b16 %v4843
    %v4908 = vunpack.c.h.b16 %v4843
    %v4909 = vunpack.c.l.b16 %v4844
    %v4910 = vunpack.c.l.b16 %v4845
    %v4911 = vunpack.c.h.b16 %v4845
    %v4912 = vunpack.c.l.b16 %v4846
    %v4913 = vunpack.c.l.b16 %v4847
    %v4914 = vunpack.c.h.b16 %v4847
    %v4915 = vunpack.c.l.b16 %v4848
    %v4916 = vunpack.c.l.b16 %v4849
    %v4917 = vunpack.c.h.b16 %v4849
    %v4918 = vunpack.c.l.b16 %v4850
    %v4919 = vunpack.c.l.b16 %v4851
    %v4920 = vunpack.c.h.b16 %v4851
    %v4921 = vunpack.c.l.b16 %v4852
    %v4922 = vunpack.c.l.b16 %v4853
    %v4923 = vunpack.c.h.b16 %v4853
    %v4924 = vunpack.c.l.b16 %v4854
    %v4925 = vunpack.c.l.b16 %v4855
    %v4926 = vunpack.c.h.b16 %v4855
    %v4927 = vunpack.c.l.b16 %v4856
    %v4928 = vunpack.c.l.b16 %v4857
    %v4929 = vunpack.c.h.b16 %v4857
    %v4930 = vunpack.c.l.b16 %v4858
    %v4931 = vunpack.c.l.b16 %v4859
    %v4932 = vunpack.c.h.b16 %v4859
    %v4933 = vunpack.c.l.b16 %v4860
    %v4934 = vunpack.c.l.b16 %v4861
    %v4935 = vunpack.c.h.b16 %v4861
    %v4936 = vunpack.c.l.b16 %v4862
    %v4937 = vunpack.c.l.b16 %v4863
    %v4938 = vunpack.c.h.b16 %v4863
    %v4939 = vunpack.c.l.b16 %v4864
    %v4940 = vunpack.c.l.b16 %v4865
    %v4941 = vunpack.c.h.b16 %v4865
    %v4942 = vunpack.c.l.b16 %v4866
    %v4943 = vunpack.c.l.b16 %v4867
    %v4944 = vunpack.c.h.b16 %v4867
    %v4945 = vunpack.c.l.b16 %v4868
    %v4946 = vunpack.c.l.b16 %v4869
    %v4947 = vunpack.c.h.b16 %v4869
    %v4948 = vunpack.c.l.b16 %v4870
    %v4949 = vunpack.c.l.b16 %v4871
    %v4950 = vunpack.c.h.b16 %v4871
    %v4951 = vunpack.c.l.b16 %v4872
    %v4952 = vunpack.c.l.b16 %v4873
    %v4953 = vunpack.c.h.b16 %v4873
    %v4954 = vunpack.c.l.b16 %v4874
    %v4955 = vpack.c.b16 %v4910, %v4907
    %v4956 = vpack.c.b16 %v4911, %v4908
    %v4957 = vpack.c.b16 %v4912, %v4909
    %v4958 = vpack.c.b16 %v4916, %v4913
    %v4959 = vpack.c.b16 %v4917, %v4914
    %v4960 = vpack.c.b16 %v4918, %v4915
    %v4961 = vpack.c.b16 %v4922, %v4919
    %v4962 = vpack.c.b16 %v4923, %v4920
    %v4963 = vpack.c.b16 %v4924, %v4921
    %v4964 = vpack.c.b16 %v4928, %v4925
    %v4965 = vpack.c.b16 %v4929, %v4926
    %v4966 = vpack.c.b16 %v4930, %v4927
    %v4967 = vpack.c.b16 %v4934, %v4931
    %v4968 = vpack.c.b16 %v4935, %v4932
    %v4969 = vpack.c.b16 %v4936, %v4933
    %v4970 = vpack.c.b16 %v4940, %v4937
    %v4971 = vpack.c.b16 %v4941, %v4938
    %v4972 = vpack.c.b16 %v4942, %v4939
    %v4973 = vpack.c.b16 %v4946, %v4943
    %v4974 = vpack.c.b16 %v4947, %v4944
    %v4975 = vpack.c.b16 %v4948, %v4945
    %v4976 = vpack.c.b16 %v4952, %v4949
    %v4977 = vpack.c.b16 %v4953, %v4950
    %v4978 = vpack.c.b16 %v4954, %v4951
    %5003 = vmatpush.bf16.msra.mxu0 %v4976
    %5004 = vmatpush.bf16.msra.mxu0 %v4973
    %5005 = vmatpush.bf16.msra.mxu0 %v4970
    %5006 = vmatpush.bf16.msra.mxu0 %v4967
    %5007 = vmatpush.bf16.msra.mxu0 %v4964
    %5008 = vmatpush.bf16.msra.mxu0 %v4961
    %5009 = vmatpush.bf16.msra.mxu0 %v4958
    %5010 = vmatpush.bf16.msra.mxu0 %v4955
    %5011 = vmatmul.bf16.gmra.mxu0 %v4842
    %v5012 = vpop.f32.mrf.mxu0
    %v5013 = vadd.f32 0.0, %v5012
    %v5014 = vpop.f32.mrf.mxu0
    %5015 = vdwg.mxu0
    %5016 = vmatpush.bf16.msra.mxu0 %v4977
    %5017 = vmatpush.bf16.msra.mxu0 %v4974
    %5018 = vmatpush.bf16.msra.mxu0 %v4971
    %5019 = vmatpush.bf16.msra.mxu0 %v4968
    %5020 = vmatpush.bf16.msra.mxu0 %v4965
    %5021 = vmatpush.bf16.msra.mxu0 %v4962
    %5022 = vmatpush.bf16.msra.mxu0 %v4959
    %5023 = vmatpush.bf16.msra.mxu0 %v4956
    %5024 = vmatmul.bf16.gmra.mxu0 %v4842
    %v5025 = vpop.f32.mrf.mxu0
    %v5026 = vadd.f32 0.0, %v5025
    %v5027 = vpop.f32.mrf.mxu0
    %5028 = vdwg.mxu0
    %5029 = vmatpush.bf16.msra.mxu0 %v4978
    %5030 = vmatpush.bf16.msra.mxu0 %v4975
    %5031 = vmatpush.bf16.msra.mxu0 %v4972
    %5032 = vmatpush.bf16.msra.mxu0 %v4969
    %5033 = vmatpush.bf16.msra.mxu0 %v4966
    %5034 = vmatpush.bf16.msra.mxu0 %v4963
    %5035 = vmatpush.bf16.msra.mxu0 %v4960
    %5036 = vmatpush.bf16.msra.mxu0 %v4957
    %5037 = vmatmul.bf16.gmra.mxu0 %v4842
    %v5038 = vpop.f32.mrf.mxu0
    %v5039 = vadd.f32 0.0, %v5038
    %v5040 = vpop.f32.mrf.mxu0
    %5041 = vdwg.mxu0
    %v5042 = vadd.f32 %v4813, %v5013
    %v5043 = vxor.u32 %v5042, 2147483648
    %v5044 = vmul.f32 %v5043, 1.442695
    %v5045 = vpow.pop %v5044
    %v5046 = vadd.f32 %v5045, 1.0
    %v5047 = vrcp.pop %v5046
    %v5048 = vmul.f32 %v5046, %v5047
    %v5049 = vsub.f32 1.0, %v5048
    %v5050 = vmul.f32 %v5047, %v5049
    %v5051 = vadd.f32 %v5047, %v5050
    %vm5052 = vweird.f32 %v5046
    %vm5053 = vweird.f32 %v5047
    %vm5054 = vmor %vm5052, %vm5053
    %v5055 = vsel %vm5054, %v5047, %v5051
    %v5056 = vand.u32 2147483647, %v5046
    %vm5057 = vcmp.eq.f32.partialorder %v5056, 8.507059e+37
    %v5058 = vand.u32 %v5046, 2147483648
    %v5059 = vor.u32 1.1754944e-38, %v5058
    %v5060 = vsel %vm5057, %v5059, %v5055
    %v5061 = vmul.f32 1.0, %v5060
    %v5062 = vadd.f32 %v4826, %v5026
    %v5063 = vxor.u32 %v5062, 2147483648
    %v5064 = vmul.f32 %v5063, 1.442695
    %v5065 = vpow.pop %v5064
    %v5066 = vadd.f32 %v5065, 1.0
    %v5067 = vrcp.pop %v5066
    %v5068 = vmul.f32 %v5066, %v5067
    %v5069 = vsub.f32 1.0, %v5068
    %v5070 = vmul.f32 %v5067, %v5069
    %v5071 = vadd.f32 %v5067, %v5070
    %vm5072 = vweird.f32 %v5066
    %vm5073 = vweird.f32 %v5067
    %vm5074 = vmor %vm5072, %vm5073
    %v5075 = vsel %vm5074, %v5067, %v5071
    %v5076 = vand.u32 2147483647, %v5066
    %vm5077 = vcmp.eq.f32.partialorder %v5076, 8.507059e+37
    %v5078 = vand.u32 %v5066, 2147483648
    %v5079 = vor.u32 1.1754944e-38, %v5078
    %v5080 = vsel %vm5077, %v5079, %v5075
    %v5081 = vmul.f32 1.0, %v5080
    %v5082 = vadd.f32 %v5039, %v821
    %v5083 = vmul.f32 %v5061, %v5082
    %v5084 = vadd.f32 %v4839, %v5083
    %v5085 = vtanh.pop %v5084
    %v5086 = vsub.f32 1.0, %v5081
    %v5087 = vmul.f32 %v5086, %v5085
    %v5088 = vmul.f32 %v5081, %v4377
    %v5089 = vadd.f32 %v5087, %v5088
    %s5090 = scalar_lea.vmem [#allocation2], 12
    %5091 = vst [vmem:[%s5090] sm:$0x3] %v5089
    %v5092 = vld [vmem:[%s2] sm:$0xff]
    %v5093 = vld [vmem:[%s2 + $0x8] sm:$0xf]
    %v5094 = vld [vmem:[%s2 + $0xc] sm:$0xff]
    %v5095 = vld [vmem:[%s2 + $0x14] sm:$0xf]
    %v5096 = vld [vmem:[%s2 + $0x18] sm:$0xff]
    %v5097 = vld [vmem:[%s2 + $0x20] sm:$0xf]
    %v5098 = vld [vmem:[%s2 + $0x24] sm:$0xff]
    %v5099 = vld [vmem:[%s2 + $0x2c] sm:$0xf]
    %v5100 = vld [vmem:[%s2 + $0x30] sm:$0xff]
    %v5101 = vld [vmem:[%s2 + $0x38] sm:$0xf]
    %v5102 = vld [vmem:[%s2 + $0x3c] sm:$0xff]
    %v5103 = vld [vmem:[%s2 + $0x44] sm:$0xf]
    %v5104 = vld [vmem:[%s2 + $0x48] sm:$0xff]
    %v5105 = vld [vmem:[%s2 + $0x50] sm:$0xf]
    %v5106 = vld [vmem:[%s2 + $0x54] sm:$0xff]
    %v5107 = vld [vmem:[%s2 + $0x5c] sm:$0xf]
    %v5108 = vld [vmem:[%s2 + $0x60] sm:$0xff]
    %v5109 = vld [vmem:[%s2 + $0x68] sm:$0xf]
    %v5110 = vld [vmem:[%s2 + $0x6c] sm:$0xff]
    %v5111 = vld [vmem:[%s2 + $0x74] sm:$0xf]
    %v5112 = vld [vmem:[%s2 + $0x78] sm:$0xff]
    %v5113 = vld [vmem:[%s2 + $0x80] sm:$0xf]
    %v5114 = vld [vmem:[%s2 + $0x84] sm:$0xff]
    %v5115 = vld [vmem:[%s2 + $0x8c] sm:$0xf]
    %v5116 = vld [vmem:[%s2 + $0x90] sm:$0xff]
    %v5117 = vld [vmem:[%s2 + $0x98] sm:$0xf]
    %v5118 = vld [vmem:[%s2 + $0x9c] sm:$0xff]
    %v5119 = vld [vmem:[%s2 + $0xa4] sm:$0xf]
    %v5120 = vld [vmem:[%s2 + $0xa8] sm:$0xff]
    %v5121 = vld [vmem:[%s2 + $0xb0] sm:$0xf]
    %v5122 = vld [vmem:[%s2 + $0xb4] sm:$0xff]
    %v5123 = vld [vmem:[%s2 + $0xbc] sm:$0xf]
    %v5156 = vunpack.c.l.b16 %v5092
    %v5157 = vunpack.c.h.b16 %v5092
    %v5158 = vunpack.c.l.b16 %v5093
    %v5159 = vunpack.c.l.b16 %v5094
    %v5160 = vunpack.c.h.b16 %v5094
    %v5161 = vunpack.c.l.b16 %v5095
    %v5162 = vunpack.c.l.b16 %v5096
    %v5163 = vunpack.c.h.b16 %v5096
    %v5164 = vunpack.c.l.b16 %v5097
    %v5165 = vunpack.c.l.b16 %v5098
    %v5166 = vunpack.c.h.b16 %v5098
    %v5167 = vunpack.c.l.b16 %v5099
    %v5168 = vunpack.c.l.b16 %v5100
    %v5169 = vunpack.c.h.b16 %v5100
    %v5170 = vunpack.c.l.b16 %v5101
    %v5171 = vunpack.c.l.b16 %v5102
    %v5172 = vunpack.c.h.b16 %v5102
    %v5173 = vunpack.c.l.b16 %v5103
    %v5174 = vunpack.c.l.b16 %v5104
    %v5175 = vunpack.c.h.b16 %v5104
    %v5176 = vunpack.c.l.b16 %v5105
    %v5177 = vunpack.c.l.b16 %v5106
    %v5178 = vunpack.c.h.b16 %v5106
    %v5179 = vunpack.c.l.b16 %v5107
    %v5180 = vunpack.c.l.b16 %v5108
    %v5181 = vunpack.c.h.b16 %v5108
    %v5182 = vunpack.c.l.b16 %v5109
    %v5183 = vunpack.c.l.b16 %v5110
    %v5184 = vunpack.c.h.b16 %v5110
    %v5185 = vunpack.c.l.b16 %v5111
    %v5186 = vunpack.c.l.b16 %v5112
    %v5187 = vunpack.c.h.b16 %v5112
    %v5188 = vunpack.c.l.b16 %v5113
    %v5189 = vunpack.c.l.b16 %v5114
    %v5190 = vunpack.c.h.b16 %v5114
    %v5191 = vunpack.c.l.b16 %v5115
    %v5192 = vunpack.c.l.b16 %v5116
    %v5193 = vunpack.c.h.b16 %v5116
    %v5194 = vunpack.c.l.b16 %v5117
    %v5195 = vunpack.c.l.b16 %v5118
    %v5196 = vunpack.c.h.b16 %v5118
    %v5197 = vunpack.c.l.b16 %v5119
    %v5198 = vunpack.c.l.b16 %v5120
    %v5199 = vunpack.c.h.b16 %v5120
    %v5200 = vunpack.c.l.b16 %v5121
    %v5201 = vunpack.c.l.b16 %v5122
    %v5202 = vunpack.c.h.b16 %v5122
    %v5203 = vunpack.c.l.b16 %v5123
    %v5204 = vpack.c.b16 %v5159, %v5156
    %v5205 = vpack.c.b16 %v5160, %v5157
    %v5206 = vpack.c.b16 %v5161, %v5158
    %v5207 = vpack.c.b16 %v5165, %v5162
    %v5208 = vpack.c.b16 %v5166, %v5163
    %v5209 = vpack.c.b16 %v5167, %v5164
    %v5210 = vpack.c.b16 %v5171, %v5168
    %v5211 = vpack.c.b16 %v5172, %v5169
    %v5212 = vpack.c.b16 %v5173, %v5170
    %v5213 = vpack.c.b16 %v5177, %v5174
    %v5214 = vpack.c.b16 %v5178, %v5175
    %v5215 = vpack.c.b16 %v5179, %v5176
    %v5216 = vpack.c.b16 %v5183, %v5180
    %v5217 = vpack.c.b16 %v5184, %v5181
    %v5218 = vpack.c.b16 %v5185, %v5182
    %v5219 = vpack.c.b16 %v5189, %v5186
    %v5220 = vpack.c.b16 %v5190, %v5187
    %v5221 = vpack.c.b16 %v5191, %v5188
    %v5222 = vpack.c.b16 %v5195, %v5192
    %v5223 = vpack.c.b16 %v5196, %v5193
    %v5224 = vpack.c.b16 %v5197, %v5194
    %v5225 = vpack.c.b16 %v5201, %v5198
    %v5226 = vpack.c.b16 %v5202, %v5199
    %v5227 = vpack.c.b16 %v5203, %v5200
    %5252 = vmatpush.bf16.msra.mxu0 %v5225
    %5253 = vmatpush.bf16.msra.mxu0 %v5222
    %5254 = vmatpush.bf16.msra.mxu0 %v5219
    %5255 = vmatpush.bf16.msra.mxu0 %v5216
    %5256 = vmatpush.bf16.msra.mxu0 %v5213
    %5257 = vmatpush.bf16.msra.mxu0 %v5210
    %5258 = vmatpush.bf16.msra.mxu0 %v5207
    %5259 = vmatpush.bf16.msra.mxu0 %v5204
    %5260 = vmatmul.bf16.gmra.mxu0 %v4673
    %v5261 = vpop.f32.mrf.mxu0
    %v5262 = vadd.f32 0.0, %v5261
    %v5263 = vpop.f32.mrf.mxu0
    %5264 = vdwg.mxu0
    %5265 = vmatpush.bf16.msra.mxu0 %v5226
    %5266 = vmatpush.bf16.msra.mxu0 %v5223
    %5267 = vmatpush.bf16.msra.mxu0 %v5220
    %5268 = vmatpush.bf16.msra.mxu0 %v5217
    %5269 = vmatpush.bf16.msra.mxu0 %v5214
    %5270 = vmatpush.bf16.msra.mxu0 %v5211
    %5271 = vmatpush.bf16.msra.mxu0 %v5208
    %5272 = vmatpush.bf16.msra.mxu0 %v5205
    %5273 = vmatmul.bf16.gmra.mxu0 %v4673
    %v5274 = vpop.f32.mrf.mxu0
    %v5275 = vadd.f32 0.0, %v5274
    %v5276 = vpop.f32.mrf.mxu0
    %5277 = vdwg.mxu0
    %5278 = vmatpush.bf16.msra.mxu0 %v5227
    %5279 = vmatpush.bf16.msra.mxu0 %v5224
    %5280 = vmatpush.bf16.msra.mxu0 %v5221
    %5281 = vmatpush.bf16.msra.mxu0 %v5218
    %5282 = vmatpush.bf16.msra.mxu0 %v5215
    %5283 = vmatpush.bf16.msra.mxu0 %v5212
    %5284 = vmatpush.bf16.msra.mxu0 %v5209
    %5285 = vmatpush.bf16.msra.mxu0 %v5206
    %5286 = vmatmul.bf16.gmra.mxu0 %v4673
    %v5287 = vpop.f32.mrf.mxu0
    %v5288 = vadd.f32 0.0, %v5287
    %v5289 = vpop.f32.mrf.mxu0
    %5290 = vdwg.mxu0
    %v5292 = vrot.slane %v5262, 2
    %v5294 = vadd.f32 %v91, %v5292
    %v5295 = vxor.u32 %v5294, 2147483648
    %v5296 = vmul.f32 %v5295, 1.442695
    %v5297 = vpow.pop %v5296
    %v5298 = vadd.f32 %v5297, 1.0
    %v5299 = vrcp.pop %v5298
    %v5300 = vmul.f32 %v5298, %v5299
    %v5301 = vsub.f32 1.0, %v5300
    %v5302 = vmul.f32 %v5299, %v5301
    %v5303 = vadd.f32 %v5299, %v5302
    %vm5304 = vweird.f32 %v5298
    %vm5305 = vweird.f32 %v5299
    %vm5306 = vmor %vm5304, %vm5305
    %v5307 = vsel %vm5306, %v5299, %v5303
    %v5308 = vand.u32 2147483647, %v5298
    %vm5309 = vcmp.eq.f32.partialorder %v5308, 8.507059e+37
    %v5310 = vand.u32 %v5298, 2147483648
    %v5311 = vor.u32 1.1754944e-38, %v5310
    %v5312 = vsel %vm5309, %v5311, %v5307
    %v5313 = vmul.f32 1.0, %v5312
    %v5315 = vrot.slane %v5275, 2
    %v5317 = vadd.f32 %v105, %v5315
    %v5318 = vxor.u32 %v5317, 2147483648
    %v5319 = vmul.f32 %v5318, 1.442695
    %v5320 = vpow.pop %v5319
    %v5321 = vadd.f32 %v5320, 1.0
    %v5322 = vrcp.pop %v5321
    %v5323 = vmul.f32 %v5321, %v5322
    %v5324 = vsub.f32 1.0, %v5323
    %v5325 = vmul.f32 %v5322, %v5324
    %v5326 = vadd.f32 %v5322, %v5325
    %vm5327 = vweird.f32 %v5321
    %vm5328 = vweird.f32 %v5322
    %vm5329 = vmor %vm5327, %vm5328
    %v5330 = vsel %vm5329, %v5322, %v5326
    %v5331 = vand.u32 2147483647, %v5321
    %vm5332 = vcmp.eq.f32.partialorder %v5331, 8.507059e+37
    %v5333 = vand.u32 %v5321, 2147483648
    %v5334 = vor.u32 1.1754944e-38, %v5333
    %v5335 = vsel %vm5332, %v5334, %v5330
    %v5336 = vmul.f32 1.0, %v5335
    %v5337 = vadd.f32 %v5288, %v364
    %v5339 = vrot.slane %v5337, 2
    %v5341 = vmul.f32 %v5313, %v5339
    %v5342 = vadd.f32 %v119, %v5341
    %v5343 = vtanh.pop %v5342
    %v5344 = vsub.f32 1.0, %v5336
    %v5345 = vmul.f32 %v5344, %v5343
    %v5347 = vrot.slane %v4638, 6
    %v5349 = vmul.f32 %v5336, %v5347
    %v5350 = vadd.f32 %v5345, %v5349
    %v5351 = vpack.c.bf16 %v5350, %v5350
    %v5352 = vld [vmem:[%s5] sm:$0xff]
    %v5353 = vld [vmem:[%s5 + $0x8] sm:$0xf]
    %v5354 = vld [vmem:[%s5 + $0xc] sm:$0xff]
    %v5355 = vld [vmem:[%s5 + $0x14] sm:$0xf]
    %v5356 = vld [vmem:[%s5 + $0x18] sm:$0xff]
    %v5357 = vld [vmem:[%s5 + $0x20] sm:$0xf]
    %v5358 = vld [vmem:[%s5 + $0x24] sm:$0xff]
    %v5359 = vld [vmem:[%s5 + $0x2c] sm:$0xf]
    %v5360 = vld [vmem:[%s5 + $0x30] sm:$0xff]
    %v5361 = vld [vmem:[%s5 + $0x38] sm:$0xf]
    %v5362 = vld [vmem:[%s5 + $0x3c] sm:$0xff]
    %v5363 = vld [vmem:[%s5 + $0x44] sm:$0xf]
    %v5364 = vld [vmem:[%s5 + $0x48] sm:$0xff]
    %v5365 = vld [vmem:[%s5 + $0x50] sm:$0xf]
    %v5366 = vld [vmem:[%s5 + $0x54] sm:$0xff]
    %v5367 = vld [vmem:[%s5 + $0x5c] sm:$0xf]
    %v5368 = vld [vmem:[%s5 + $0x60] sm:$0xff]
    %v5369 = vld [vmem:[%s5 + $0x68] sm:$0xf]
    %v5370 = vld [vmem:[%s5 + $0x6c] sm:$0xff]
    %v5371 = vld [vmem:[%s5 + $0x74] sm:$0xf]
    %v5372 = vld [vmem:[%s5 + $0x78] sm:$0xff]
    %v5373 = vld [vmem:[%s5 + $0x80] sm:$0xf]
    %v5374 = vld [vmem:[%s5 + $0x84] sm:$0xff]
    %v5375 = vld [vmem:[%s5 + $0x8c] sm:$0xf]
    %v5376 = vld [vmem:[%s5 + $0x90] sm:$0xff]
    %v5377 = vld [vmem:[%s5 + $0x98] sm:$0xf]
    %v5378 = vld [vmem:[%s5 + $0x9c] sm:$0xff]
    %v5379 = vld [vmem:[%s5 + $0xa4] sm:$0xf]
    %v5380 = vld [vmem:[%s5 + $0xa8] sm:$0xff]
    %v5381 = vld [vmem:[%s5 + $0xb0] sm:$0xf]
    %v5382 = vld [vmem:[%s5 + $0xb4] sm:$0xff]
    %v5383 = vld [vmem:[%s5 + $0xbc] sm:$0xf]
    %v5385 = vrot.slane %v5351, 3
    %v5419 = vunpack.c.l.b16 %v5352
    %v5420 = vunpack.c.h.b16 %v5352
    %v5421 = vunpack.c.l.b16 %v5353
    %v5422 = vunpack.c.l.b16 %v5354
    %v5423 = vunpack.c.h.b16 %v5354
    %v5424 = vunpack.c.l.b16 %v5355
    %v5425 = vunpack.c.l.b16 %v5356
    %v5426 = vunpack.c.h.b16 %v5356
    %v5427 = vunpack.c.l.b16 %v5357
    %v5428 = vunpack.c.l.b16 %v5358
    %v5429 = vunpack.c.h.b16 %v5358
    %v5430 = vunpack.c.l.b16 %v5359
    %v5431 = vunpack.c.l.b16 %v5360
    %v5432 = vunpack.c.h.b16 %v5360
    %v5433 = vunpack.c.l.b16 %v5361
    %v5434 = vunpack.c.l.b16 %v5362
    %v5435 = vunpack.c.h.b16 %v5362
    %v5436 = vunpack.c.l.b16 %v5363
    %v5437 = vunpack.c.l.b16 %v5364
    %v5438 = vunpack.c.h.b16 %v5364
    %v5439 = vunpack.c.l.b16 %v5365
    %v5440 = vunpack.c.l.b16 %v5366
    %v5441 = vunpack.c.h.b16 %v5366
    %v5442 = vunpack.c.l.b16 %v5367
    %v5443 = vunpack.c.l.b16 %v5368
    %v5444 = vunpack.c.h.b16 %v5368
    %v5445 = vunpack.c.l.b16 %v5369
    %v5446 = vunpack.c.l.b16 %v5370
    %v5447 = vunpack.c.h.b16 %v5370
    %v5448 = vunpack.c.l.b16 %v5371
    %v5449 = vunpack.c.l.b16 %v5372
    %v5450 = vunpack.c.h.b16 %v5372
    %v5451 = vunpack.c.l.b16 %v5373
    %v5452 = vunpack.c.l.b16 %v5374
    %v5453 = vunpack.c.h.b16 %v5374
    %v5454 = vunpack.c.l.b16 %v5375
    %v5455 = vunpack.c.l.b16 %v5376
    %v5456 = vunpack.c.h.b16 %v5376
    %v5457 = vunpack.c.l.b16 %v5377
    %v5458 = vunpack.c.l.b16 %v5378
    %v5459 = vunpack.c.h.b16 %v5378
    %v5460 = vunpack.c.l.b16 %v5379
    %v5461 = vunpack.c.l.b16 %v5380
    %v5462 = vunpack.c.h.b16 %v5380
    %v5463 = vunpack.c.l.b16 %v5381
    %v5464 = vunpack.c.l.b16 %v5382
    %v5465 = vunpack.c.h.b16 %v5382
    %v5466 = vunpack.c.l.b16 %v5383
    %v5467 = vpack.c.b16 %v5422, %v5419
    %v5468 = vpack.c.b16 %v5423, %v5420
    %v5469 = vpack.c.b16 %v5424, %v5421
    %v5470 = vpack.c.b16 %v5428, %v5425
    %v5471 = vpack.c.b16 %v5429, %v5426
    %v5472 = vpack.c.b16 %v5430, %v5427
    %v5473 = vpack.c.b16 %v5434, %v5431
    %v5474 = vpack.c.b16 %v5435, %v5432
    %v5475 = vpack.c.b16 %v5436, %v5433
    %v5476 = vpack.c.b16 %v5440, %v5437
    %v5477 = vpack.c.b16 %v5441, %v5438
    %v5478 = vpack.c.b16 %v5442, %v5439
    %v5479 = vpack.c.b16 %v5446, %v5443
    %v5480 = vpack.c.b16 %v5447, %v5444
    %v5481 = vpack.c.b16 %v5448, %v5445
    %v5482 = vpack.c.b16 %v5452, %v5449
    %v5483 = vpack.c.b16 %v5453, %v5450
    %v5484 = vpack.c.b16 %v5454, %v5451
    %v5485 = vpack.c.b16 %v5458, %v5455
    %v5486 = vpack.c.b16 %v5459, %v5456
    %v5487 = vpack.c.b16 %v5460, %v5457
    %v5488 = vpack.c.b16 %v5464, %v5461
    %v5489 = vpack.c.b16 %v5465, %v5462
    %v5490 = vpack.c.b16 %v5466, %v5463
    %5515 = vmatpush.bf16.msra.mxu0 %v5488
    %5516 = vmatpush.bf16.msra.mxu0 %v5485
    %5517 = vmatpush.bf16.msra.mxu0 %v5482
    %5518 = vmatpush.bf16.msra.mxu0 %v5479
    %5519 = vmatpush.bf16.msra.mxu0 %v5476
    %5520 = vmatpush.bf16.msra.mxu0 %v5473
    %5521 = vmatpush.bf16.msra.mxu0 %v5470
    %5522 = vmatpush.bf16.msra.mxu0 %v5467
    %5523 = vmatmul.bf16.gmra.mxu0 %v5385
    %v5524 = vpop.f32.mrf.mxu0
    %v5525 = vadd.f32 %v408, %v5524
    %v5526 = vpop.f32.mrf.mxu0
    %5527 = vdwg.mxu0
    %5528 = vmatpush.bf16.msra.mxu0 %v5489
    %5529 = vmatpush.bf16.msra.mxu0 %v5486
    %5530 = vmatpush.bf16.msra.mxu0 %v5483
    %5531 = vmatpush.bf16.msra.mxu0 %v5480
    %5532 = vmatpush.bf16.msra.mxu0 %v5477
    %5533 = vmatpush.bf16.msra.mxu0 %v5474
    %5534 = vmatpush.bf16.msra.mxu0 %v5471
    %5535 = vmatpush.bf16.msra.mxu0 %v5468
    %5536 = vmatmul.bf16.gmra.mxu0 %v5385
    %v5537 = vpop.f32.mrf.mxu0
    %v5538 = vadd.f32 %v409, %v5537
    %v5539 = vpop.f32.mrf.mxu0
    %5540 = vdwg.mxu0
    %5541 = vmatpush.bf16.msra.mxu0 %v5490
    %5542 = vmatpush.bf16.msra.mxu0 %v5487
    %5543 = vmatpush.bf16.msra.mxu0 %v5484
    %5544 = vmatpush.bf16.msra.mxu0 %v5481
    %5545 = vmatpush.bf16.msra.mxu0 %v5478
    %5546 = vmatpush.bf16.msra.mxu0 %v5475
    %5547 = vmatpush.bf16.msra.mxu0 %v5472
    %5548 = vmatpush.bf16.msra.mxu0 %v5469
    %5549 = vmatmul.bf16.gmra.mxu0 %v5385
    %v5550 = vpop.f32.mrf.mxu0
    %v5551 = vadd.f32 %v410, %v5550
    %v5552 = vpop.f32.mrf.mxu0
    %5553 = vdwg.mxu0
    %v5554 = vpack.c.bf16 %v5089, %v5089
    %v5555 = vld [vmem:[%s6] sm:$0xff]
    %v5556 = vld [vmem:[%s6 + $0x8] sm:$0xf]
    %v5557 = vld [vmem:[%s6 + $0xc] sm:$0xff]
    %v5558 = vld [vmem:[%s6 + $0x14] sm:$0xf]
    %v5559 = vld [vmem:[%s6 + $0x18] sm:$0xff]
    %v5560 = vld [vmem:[%s6 + $0x20] sm:$0xf]
    %v5561 = vld [vmem:[%s6 + $0x24] sm:$0xff]
    %v5562 = vld [vmem:[%s6 + $0x2c] sm:$0xf]
    %v5563 = vld [vmem:[%s6 + $0x30] sm:$0xff]
    %v5564 = vld [vmem:[%s6 + $0x38] sm:$0xf]
    %v5565 = vld [vmem:[%s6 + $0x3c] sm:$0xff]
    %v5566 = vld [vmem:[%s6 + $0x44] sm:$0xf]
    %v5567 = vld [vmem:[%s6 + $0x48] sm:$0xff]
    %v5568 = vld [vmem:[%s6 + $0x50] sm:$0xf]
    %v5569 = vld [vmem:[%s6 + $0x54] sm:$0xff]
    %v5570 = vld [vmem:[%s6 + $0x5c] sm:$0xf]
    %v5571 = vld [vmem:[%s6 + $0x60] sm:$0xff]
    %v5572 = vld [vmem:[%s6 + $0x68] sm:$0xf]
    %v5573 = vld [vmem:[%s6 + $0x6c] sm:$0xff]
    %v5574 = vld [vmem:[%s6 + $0x74] sm:$0xf]
    %v5575 = vld [vmem:[%s6 + $0x78] sm:$0xff]
    %v5576 = vld [vmem:[%s6 + $0x80] sm:$0xf]
    %v5577 = vld [vmem:[%s6 + $0x84] sm:$0xff]
    %v5578 = vld [vmem:[%s6 + $0x8c] sm:$0xf]
    %v5579 = vld [vmem:[%s6 + $0x90] sm:$0xff]
    %v5580 = vld [vmem:[%s6 + $0x98] sm:$0xf]
    %v5581 = vld [vmem:[%s6 + $0x9c] sm:$0xff]
    %v5582 = vld [vmem:[%s6 + $0xa4] sm:$0xf]
    %v5583 = vld [vmem:[%s6 + $0xa8] sm:$0xff]
    %v5584 = vld [vmem:[%s6 + $0xb0] sm:$0xf]
    %v5585 = vld [vmem:[%s6 + $0xb4] sm:$0xff]
    %v5586 = vld [vmem:[%s6 + $0xbc] sm:$0xf]
    %v5619 = vunpack.c.l.b16 %v5555
    %v5620 = vunpack.c.h.b16 %v5555
    %v5621 = vunpack.c.l.b16 %v5556
    %v5622 = vunpack.c.l.b16 %v5557
    %v5623 = vunpack.c.h.b16 %v5557
    %v5624 = vunpack.c.l.b16 %v5558
    %v5625 = vunpack.c.l.b16 %v5559
    %v5626 = vunpack.c.h.b16 %v5559
    %v5627 = vunpack.c.l.b16 %v5560
    %v5628 = vunpack.c.l.b16 %v5561
    %v5629 = vunpack.c.h.b16 %v5561
    %v5630 = vunpack.c.l.b16 %v5562
    %v5631 = vunpack.c.l.b16 %v5563
    %v5632 = vunpack.c.h.b16 %v5563
    %v5633 = vunpack.c.l.b16 %v5564
    %v5634 = vunpack.c.l.b16 %v5565
    %v5635 = vunpack.c.h.b16 %v5565
    %v5636 = vunpack.c.l.b16 %v5566
    %v5637 = vunpack.c.l.b16 %v5567
    %v5638 = vunpack.c.h.b16 %v5567
    %v5639 = vunpack.c.l.b16 %v5568
    %v5640 = vunpack.c.l.b16 %v5569
    %v5641 = vunpack.c.h.b16 %v5569
    %v5642 = vunpack.c.l.b16 %v5570
    %v5643 = vunpack.c.l.b16 %v5571
    %v5644 = vunpack.c.h.b16 %v5571
    %v5645 = vunpack.c.l.b16 %v5572
    %v5646 = vunpack.c.l.b16 %v5573
    %v5647 = vunpack.c.h.b16 %v5573
    %v5648 = vunpack.c.l.b16 %v5574
    %v5649 = vunpack.c.l.b16 %v5575
    %v5650 = vunpack.c.h.b16 %v5575
    %v5651 = vunpack.c.l.b16 %v5576
    %v5652 = vunpack.c.l.b16 %v5577
    %v5653 = vunpack.c.h.b16 %v5577
    %v5654 = vunpack.c.l.b16 %v5578
    %v5655 = vunpack.c.l.b16 %v5579
    %v5656 = vunpack.c.h.b16 %v5579
    %v5657 = vunpack.c.l.b16 %v5580
    %v5658 = vunpack.c.l.b16 %v5581
    %v5659 = vunpack.c.h.b16 %v5581
    %v5660 = vunpack.c.l.b16 %v5582
    %v5661 = vunpack.c.l.b16 %v5583
    %v5662 = vunpack.c.h.b16 %v5583
    %v5663 = vunpack.c.l.b16 %v5584
    %v5664 = vunpack.c.l.b16 %v5585
    %v5665 = vunpack.c.h.b16 %v5585
    %v5666 = vunpack.c.l.b16 %v5586
    %v5667 = vpack.c.b16 %v5622, %v5619
    %v5668 = vpack.c.b16 %v5623, %v5620
    %v5669 = vpack.c.b16 %v5624, %v5621
    %v5670 = vpack.c.b16 %v5628, %v5625
    %v5671 = vpack.c.b16 %v5629, %v5626
    %v5672 = vpack.c.b16 %v5630, %v5627
    %v5673 = vpack.c.b16 %v5634, %v5631
    %v5674 = vpack.c.b16 %v5635, %v5632
    %v5675 = vpack.c.b16 %v5636, %v5633
    %v5676 = vpack.c.b16 %v5640, %v5637
    %v5677 = vpack.c.b16 %v5641, %v5638
    %v5678 = vpack.c.b16 %v5642, %v5639
    %v5679 = vpack.c.b16 %v5646, %v5643
    %v5680 = vpack.c.b16 %v5647, %v5644
    %v5681 = vpack.c.b16 %v5648, %v5645
    %v5682 = vpack.c.b16 %v5652, %v5649
    %v5683 = vpack.c.b16 %v5653, %v5650
    %v5684 = vpack.c.b16 %v5654, %v5651
    %v5685 = vpack.c.b16 %v5658, %v5655
    %v5686 = vpack.c.b16 %v5659, %v5656
    %v5687 = vpack.c.b16 %v5660, %v5657
    %v5688 = vpack.c.b16 %v5664, %v5661
    %v5689 = vpack.c.b16 %v5665, %v5662
    %v5690 = vpack.c.b16 %v5666, %v5663
    %5715 = vmatpush.bf16.msra.mxu0 %v5688
    %5716 = vmatpush.bf16.msra.mxu0 %v5685
    %5717 = vmatpush.bf16.msra.mxu0 %v5682
    %5718 = vmatpush.bf16.msra.mxu0 %v5679
    %5719 = vmatpush.bf16.msra.mxu0 %v5676
    %5720 = vmatpush.bf16.msra.mxu0 %v5673
    %5721 = vmatpush.bf16.msra.mxu0 %v5670
    %5722 = vmatpush.bf16.msra.mxu0 %v5667
    %5723 = vmatmul.bf16.gmra.mxu0 %v5554
    %v5724 = vpop.f32.mrf.mxu0
    %v5725 = vadd.f32 0.0, %v5724
    %v5726 = vpop.f32.mrf.mxu0
    %5727 = vdwg.mxu0
    %5728 = vmatpush.bf16.msra.mxu0 %v5689
    %5729 = vmatpush.bf16.msra.mxu0 %v5686
    %5730 = vmatpush.bf16.msra.mxu0 %v5683
    %5731 = vmatpush.bf16.msra.mxu0 %v5680
    %5732 = vmatpush.bf16.msra.mxu0 %v5677
    %5733 = vmatpush.bf16.msra.mxu0 %v5674
    %5734 = vmatpush.bf16.msra.mxu0 %v5671
    %5735 = vmatpush.bf16.msra.mxu0 %v5668
    %5736 = vmatmul.bf16.gmra.mxu0 %v5554
    %v5737 = vpop.f32.mrf.mxu0
    %v5738 = vadd.f32 0.0, %v5737
    %v5739 = vpop.f32.mrf.mxu0
    %5740 = vdwg.mxu0
    %5741 = vmatpush.bf16.msra.mxu0 %v5690
    %5742 = vmatpush.bf16.msra.mxu0 %v5687
    %5743 = vmatpush.bf16.msra.mxu0 %v5684
    %5744 = vmatpush.bf16.msra.mxu0 %v5681
    %5745 = vmatpush.bf16.msra.mxu0 %v5678
    %5746 = vmatpush.bf16.msra.mxu0 %v5675
    %5747 = vmatpush.bf16.msra.mxu0 %v5672
    %5748 = vmatpush.bf16.msra.mxu0 %v5669
    %5749 = vmatmul.bf16.gmra.mxu0 %v5554
    %v5750 = vpop.f32.mrf.mxu0
    %v5751 = vadd.f32 0.0, %v5750
    %v5752 = vpop.f32.mrf.mxu0
    %5753 = vdwg.mxu0
    %v5754 = vadd.f32 %v5525, %v5725
    %v5755 = vxor.u32 %v5754, 2147483648
    %v5756 = vmul.f32 %v5755, 1.442695
    %v5757 = vpow.pop %v5756
    %v5758 = vadd.f32 %v5757, 1.0
    %v5759 = vrcp.pop %v5758
    %v5760 = vmul.f32 %v5758, %v5759
    %v5761 = vsub.f32 1.0, %v5760
    %v5762 = vmul.f32 %v5759, %v5761
    %v5763 = vadd.f32 %v5759, %v5762
    %vm5764 = vweird.f32 %v5758
    %vm5765 = vweird.f32 %v5759
    %vm5766 = vmor %vm5764, %vm5765
    %v5767 = vsel %vm5766, %v5759, %v5763
    %v5768 = vand.u32 2147483647, %v5758
    %vm5769 = vcmp.eq.f32.partialorder %v5768, 8.507059e+37
    %v5770 = vand.u32 %v5758, 2147483648
    %v5771 = vor.u32 1.1754944e-38, %v5770
    %v5772 = vsel %vm5769, %v5771, %v5767
    %v5773 = vmul.f32 1.0, %v5772
    %v5774 = vadd.f32 %v5538, %v5738
    %v5775 = vxor.u32 %v5774, 2147483648
    %v5776 = vmul.f32 %v5775, 1.442695
    %v5777 = vpow.pop %v5776
    %v5778 = vadd.f32 %v5777, 1.0
    %v5779 = vrcp.pop %v5778
    %v5780 = vmul.f32 %v5778, %v5779
    %v5781 = vsub.f32 1.0, %v5780
    %v5782 = vmul.f32 %v5779, %v5781
    %v5783 = vadd.f32 %v5779, %v5782
    %vm5784 = vweird.f32 %v5778
    %vm5785 = vweird.f32 %v5779
    %vm5786 = vmor %vm5784, %vm5785
    %v5787 = vsel %vm5786, %v5779, %v5783
    %v5788 = vand.u32 2147483647, %v5778
    %vm5789 = vcmp.eq.f32.partialorder %v5788, 8.507059e+37
    %v5790 = vand.u32 %v5778, 2147483648
    %v5791 = vor.u32 1.1754944e-38, %v5790
    %v5792 = vsel %vm5789, %v5791, %v5787
    %v5793 = vmul.f32 1.0, %v5792
    %v5794 = vadd.f32 %v5751, %v821
    %v5795 = vmul.f32 %v5773, %v5794
    %v5796 = vadd.f32 %v5551, %v5795
    %v5797 = vtanh.pop %v5796
    %v5798 = vsub.f32 1.0, %v5793
    %v5799 = vmul.f32 %v5798, %v5797
    %v5800 = vmul.f32 %v5793, %v5089
    %v5801 = vadd.f32 %v5799, %v5800
    %s5802 = scalar_lea.vmem [#allocation2], 14
    %5803 = vst [vmem:[%s5802] sm:$0x3] %v5801
    %v5804 = vld [vmem:[#allocation2] sm:$0x3]
    %v5805 = vld [vmem:[#allocation2 + $0x2] sm:$0x3]
    %v5806 = vld [vmem:[#allocation2 + $0x4] sm:$0x3]
    %v5807 = vld [vmem:[#allocation2 + $0x6] sm:$0x3]
    %v5808 = vld [vmem:[#allocation2 + $0x8] sm:$0x3]
    %v5809 = vld [vmem:[#allocation2 + $0xa] sm:$0x3]
    %v5810 = vld [vmem:[#allocation2 + $0xc] sm:$0x3]
    %v5811 = vld [vmem:[#allocation2 + $0xe] sm:$0x3]
    %v5812 = vld [vmem:[%s10] sm:$0x1]
    %v5814 = vperm.slane %v5812, 0
    %v5816 = vpack.c.bf16 %v5804, %v5804
    %v5817 = vpack.c.bf16 %v5805, %v5805
    %v5818 = vpack.c.bf16 %v5806, %v5806
    %v5819 = vpack.c.bf16 %v5807, %v5807
    %v5820 = vpack.c.bf16 %v5808, %v5808
    %v5821 = vpack.c.bf16 %v5809, %v5809
    %v5822 = vpack.c.bf16 %v5810, %v5810
    %v5823 = vpack.c.bf16 %v5811, %v5811
    %v5824 = vld [vmem:[%s9] sm:$0xf]
    %v5825 = vld [vmem:[%s9 + $0x4] sm:$0xf]
    %v5826 = vld [vmem:[%s9 + $0x8] sm:$0xf]
    %v5827 = vld [vmem:[%s9 + $0xc] sm:$0xf]
    %v5828 = vld [vmem:[%s9 + $0x10] sm:$0xf]
    %v5829 = vld [vmem:[%s9 + $0x14] sm:$0xf]
    %v5830 = vld [vmem:[%s9 + $0x18] sm:$0xf]
    %v5831 = vld [vmem:[%s9 + $0x1c] sm:$0xf]
    %v5832 = vld [vmem:[%s9 + $0x20] sm:$0xf]
    %v5833 = vld [vmem:[%s9 + $0x24] sm:$0xf]
    %v5834 = vld [vmem:[%s9 + $0x28] sm:$0xf]
    %v5835 = vld [vmem:[%s9 + $0x2c] sm:$0xf]
    %v5836 = vld [vmem:[%s9 + $0x30] sm:$0xf]
    %v5837 = vld [vmem:[%s9 + $0x34] sm:$0xf]
    %v5838 = vld [vmem:[%s9 + $0x38] sm:$0xf]
    %v5839 = vld [vmem:[%s9 + $0x3c] sm:$0xf]
    %v5848 = vunpack.c.l.b16 %v5816
    %v5849 = vunpack.c.l.b16 %v5817
    %v5850 = vunpack.c.l.b16 %v5818
    %v5851 = vunpack.c.l.b16 %v5819
    %v5852 = vunpack.c.l.b16 %v5820
    %v5853 = vunpack.c.l.b16 %v5821
    %v5854 = vunpack.c.l.b16 %v5822
    %v5855 = vunpack.c.l.b16 %v5823
    %v5856 = vrot.slane %v5849, 7
    %vm5857 = vcmask 1041409
    %v5858 = vsel %vm5857, %v5856, %v5848
    %v5859 = vrot.slane %v5850, 6
    %vm5860 = vcmask 1042434
    %v5861 = vsel %vm5860, %v5859, %v5858
    %v5862 = vrot.slane %v5851, 5
    %vm5863 = vcmask 1043459
    %v5864 = vsel %vm5863, %v5862, %v5861
    %v5865 = vrot.slane %v5852, 4
    %vm5866 = vcmask 1044484
    %v5867 = vsel %vm5866, %v5865, %v5864
    %v5868 = vrot.slane %v5853, 3
    %vm5869 = vcmask 1045509
    %v5870 = vsel %vm5869, %v5868, %v5867
    %v5871 = vrot.slane %v5854, 2
    %vm5872 = vcmask 1046534
    %v5873 = vsel %vm5872, %v5871, %v5870
    %v5874 = vrot.slane %v5855, 1
    %vm5875 = vcmask 1047559
    %v5876 = vsel %vm5875, %v5874, %v5873
    %v5877 = vpack.c.b16 %v5876, %v5876
    %v5895 = vunpack.c.l.b16 %v5824
    %v5896 = vunpack.c.l.b16 %v5825
    %v5897 = vunpack.c.l.b16 %v5826
    %v5898 = vunpack.c.l.b16 %v5827
    %v5899 = vunpack.c.l.b16 %v5828
    %v5900 = vunpack.c.l.b16 %v5829
    %v5901 = vunpack.c.l.b16 %v5830
    %v5902 = vunpack.c.l.b16 %v5831
    %v5903 = vunpack.c.l.b16 %v5832
    %v5904 = vunpack.c.l.b16 %v5833
    %v5905 = vunpack.c.l.b16 %v5834
    %v5906 = vunpack.c.l.b16 %v5835
    %v5907 = vunpack.c.l.b16 %v5836
    %v5908 = vunpack.c.l.b16 %v5837
    %v5909 = vunpack.c.l.b16 %v5838
    %v5910 = vunpack.c.l.b16 %v5839
    %v5911 = vpack.c.b16 %v5896, %v5895
    %v5912 = vpack.c.b16 %v5898, %v5897
    %v5913 = vpack.c.b16 %v5900, %v5899
    %v5914 = vpack.c.b16 %v5902, %v5901
    %v5915 = vpack.c.b16 %v5904, %v5903
    %v5916 = vpack.c.b16 %v5906, %v5905
    %v5917 = vpack.c.b16 %v5908, %v5907
    %v5918 = vpack.c.b16 %v5910, %v5909
    %5927 = vmatpush.bf16.msra.mxu0 %v5918
    %5928 = vmatpush.bf16.msra.mxu0 %v5917
    %5929 = vmatpush.bf16.msra.mxu0 %v5916
    %5930 = vmatpush.bf16.msra.mxu0 %v5915
    %5931 = vmatpush.bf16.msra.mxu0 %v5914
    %5932 = vmatpush.bf16.msra.mxu0 %v5913
    %5933 = vmatpush.bf16.msra.mxu0 %v5912
    %5934 = vmatpush.bf16.msra.mxu0 %v5911
    %5935 = vmatmul.bf16.gmra.mxu0 %v5877
    %v5936 = vpop.f32.mrf.mxu0
    %v5937 = vadd.f32 0.0, %v5936
    %v5938 = vpop.f32.mrf.mxu0
    %5939 = vdwg.mxu0
    %v5940 = vadd.f32 %v5814, %v5937
    %s5941 = scalar_lea.vmem %s9, 64
    %v5942 = vld [vmem:[%s5941] sm:$0xf]
    %v5943 = vld [vmem:[%s5941 + $0x4] sm:$0xf]
    %v5944 = vld [vmem:[%s5941 + $0x8] sm:$0xf]
    %v5945 = vld [vmem:[%s5941 + $0xc] sm:$0xf]
    %v5946 = vld [vmem:[%s5941 + $0x10] sm:$0xf]
    %v5947 = vld [vmem:[%s5941 + $0x14] sm:$0xf]
    %v5948 = vld [vmem:[%s5941 + $0x18] sm:$0xf]
    %v5949 = vld [vmem:[%s5941 + $0x1c] sm:$0xf]
    %v5950 = vld [vmem:[%s5941 + $0x20] sm:$0xf]
    %v5951 = vld [vmem:[%s5941 + $0x24] sm:$0xf]
    %v5952 = vld [vmem:[%s5941 + $0x28] sm:$0xf]
    %v5953 = vld [vmem:[%s5941 + $0x2c] sm:$0xf]
    %v5954 = vld [vmem:[%s5941 + $0x30] sm:$0xf]
    %v5955 = vld [vmem:[%s5941 + $0x34] sm:$0xf]
    %v5956 = vld [vmem:[%s5941 + $0x38] sm:$0xf]
    %v5957 = vld [vmem:[%s5941 + $0x3c] sm:$0xf]
    %v5958 = vrot.slane %v5848, 1
    %v5959 = vsel %vm5857, %v5849, %v5958
    %v5960 = vrot.slane %v5850, 7
    %v5961 = vsel %vm5860, %v5960, %v5959
    %v5962 = vrot.slane %v5851, 6
    %v5963 = vsel %vm5863, %v5962, %v5961
    %v5964 = vrot.slane %v5852, 5
    %v5965 = vsel %vm5866, %v5964, %v5963
    %v5966 = vrot.slane %v5853, 4
    %v5967 = vsel %vm5869, %v5966, %v5965
    %v5968 = vrot.slane %v5854, 3
    %v5969 = vsel %vm5872, %v5968, %v5967
    %v5970 = vrot.slane %v5855, 2
    %v5971 = vsel %vm5875, %v5970, %v5969
    %v5972 = vpack.c.b16 %v5971, %v5971
    %v5990 = vunpack.c.l.b16 %v5942
    %v5991 = vunpack.c.l.b16 %v5943
    %v5992 = vunpack.c.l.b16 %v5944
    %v5993 = vunpack.c.l.b16 %v5945
    %v5994 = vunpack.c.l.b16 %v5946
    %v5995 = vunpack.c.l.b16 %v5947
    %v5996 = vunpack.c.l.b16 %v5948
    %v5997 = vunpack.c.l.b16 %v5949
    %v5998 = vunpack.c.l.b16 %v5950
    %v5999 = vunpack.c.l.b16 %v5951
    %v6000 = vunpack.c.l.b16 %v5952
    %v6001 = vunpack.c.l.b16 %v5953
    %v6002 = vunpack.c.l.b16 %v5954
    %v6003 = vunpack.c.l.b16 %v5955
    %v6004 = vunpack.c.l.b16 %v5956
    %v6005 = vunpack.c.l.b16 %v5957
    %v6006 = vpack.c.b16 %v5991, %v5990
    %v6007 = vpack.c.b16 %v5993, %v5992
    %v6008 = vpack.c.b16 %v5995, %v5994
    %v6009 = vpack.c.b16 %v5997, %v5996
    %v6010 = vpack.c.b16 %v5999, %v5998
    %v6011 = vpack.c.b16 %v6001, %v6000
    %v6012 = vpack.c.b16 %v6003, %v6002
    %v6013 = vpack.c.b16 %v6005, %v6004
    %6022 = vmatpush.bf16.msra.mxu0 %v6013
    %6023 = vmatpush.bf16.msra.mxu0 %v6012
    %6024 = vmatpush.bf16.msra.mxu0 %v6011
    %6025 = vmatpush.bf16.msra.mxu0 %v6010
    %6026 = vmatpush.bf16.msra.mxu0 %v6009
    %6027 = vmatpush.bf16.msra.mxu0 %v6008
    %6028 = vmatpush.bf16.msra.mxu0 %v6007
    %6029 = vmatpush.bf16.msra.mxu0 %v6006
    %6030 = vmatmul.bf16.gmra.mxu0 %v5972
    %v6031 = vpop.f32.mrf.mxu0
    %v6032 = vadd.f32 0.0, %v6031
    %v6033 = vpop.f32.mrf.mxu0
    %6034 = vdwg.mxu0
    %v6035 = vadd.f32 %v5940, %v6032
    %v6036 = vlaneseq
    %v6037 = vand.u32 %v6036, 127
    %vm6038 = vcmp.lt.s32.totalorder %v6037, 6
    %v6039 = vsel %vm6038, %v6035, -1e+30
    %6040 = vmax.xlane.f32.xlu0 %v6039
    %v6041 = vpop.xlane.xlu0 %6040
    %v6042 = vsub.f32 %v6039, %v6041
    %v6043 = vmul.f32 %v6042, 1.442695
    %v6044 = vpow.pop %v6043
    %v6045 = vsel %vm6038, %v6044, 0.0
    %6046 = vadd.xlane.f32.xlu0 %v6045
    %v6047 = vpop.xlane.xlu0 %6046
    %v6048 = vrcp.pop %v6047
    %v6049 = vmul.f32 %v6047, %v6048
    %v6050 = vsub.f32 1.0, %v6049
    %v6051 = vmul.f32 %v6048, %v6050
    %v6052 = vadd.f32 %v6048, %v6051
    %vm6053 = vweird.f32 %v6047
    %vm6054 = vweird.f32 %v6048
    %vm6055 = vmor %vm6053, %vm6054
    %v6056 = vsel %vm6055, %v6048, %v6052
    %v6057 = vand.u32 2147483647, %v6047
    %vm6058 = vcmp.eq.f32.partialorder %v6057, 8.507059e+37
    %v6059 = vand.u32 %v6047, 2147483648
    %v6060 = vor.u32 1.1754944e-38, %v6059
    %v6061 = vsel %vm6058, %v6060, %v6056
    %v6062 = vmul.f32 %v6045, %v6061
    %6063 = vst [vmem:[#allocation3] sm:$0xff] %v6062
    // Predicated region
    $region46: #{gru_forward.1} parent=1 // pred_check
      _
    $region47: #{gru_forward.1} parent=1 // pred_check_branch
      %6065 = sbr.rel (0) target = $region49
    $region48: #{gru_forward.1} parent=1 // pred_region
      %6067 = vsyncadd [#allocation4], 0
      %s6069 = sshll.u32 [#allocation3], 4
      %s6070 = int_to_ptr.vmem [resolvable:$true] %s6069
      %s6071 = sshll.u32 %s11, 4
      %s6072 = int_to_ptr.hbm [resolvable:$true] %s6071
      %6074 = dma.vmem_to_hbm [thread:$0]  %s6070, 128, %s6072, [#allocation4]
    $region49: #{gru_forward.1} parent=1 // pred_fallthru
      _
    // Predicated region
    $region50: #{gru_forward.1} parent=1 // pred_check
      _
    $region51: #{gru_forward.1} parent=1 // pred_check_branch
      %6076 = sbr.rel (0) target = $region53
    $region52: #{gru_forward.1} parent=1 // pred_region
      %6078 = dma.done [#allocation4], 128
    $region53: #{gru_forward.1} parent=1 // pred_fallthru
      _
    %6079 = vsyncpa [#allocation4], 1

</llo_original>
